<compile_context>
chip_gen: v7x
topology: tpu7x:2x2x1
jax: 0.10.0
libtpu: 0.0.40
codegen_flags: <defaults>
</compile_context>

<pallas_src>
import jax
import jax.numpy as jnp
from jax import lax
from jax.experimental import pallas as pl
from jax.experimental.pallas import tpu as pltpu

B = 2              # batch
H = W = 28         # MNIST spatial size (fixed by fc1: 32*28*28 inputs)
CIN = 1
COUT = 32
KH = KW = 3
KP = 16            # padded im2col tap dim (9 -> 16)
HW = H * W         # 784
HWP = 896          # 784 padded to 7 * 128 lanes
NOUT = 10


# ---------------------------------------------------------------------------
# Fused Pallas kernel: conv (MXU matmul) + bias + ReLU + FC, whole batch
# ---------------------------------------------------------------------------
def fused_cnn_kernel(p_ref, cw_ref, cb_ref, fcw_ref, fcb_ref, o_ref):
    # p_ref:   [B, KP, HWP]       im2col patches (bf16)
    # cw_ref:  [COUT, KP]         conv weight taps (bf16, zero padded 9->16)
    # cb_ref:  [COUT, 1]          conv bias (f32)
    # fcw_ref: [NOUT, COUT, HWP]  fc weight, NCHW flatten order, zero padded (bf16)
    # fcb_ref: [NOUT]             fc bias (f32, SMEM)
    # o_ref:   [B, NOUT]          logits (f32, SMEM scalar writes)
    cw = cw_ref[...]                                     # [32, 16]  bf16
    cb = cb_ref[...]                                     # [32, 1]   f32
    lane = lax.broadcasted_iota(jnp.int32, (COUT, HWP), 1)
    valid = lane < HW                                    # zero padded hw lanes

    for b in range(B):
        # Conv as one MXU matmul: [32,16] @ [16,896] -> [32,896] (f32 acc).
        act = jnp.dot(cw, p_ref[b], preferred_element_type=jnp.float32)
        act = jnp.maximum(act + cb, 0.0)                 # bias + ReLU
        act = jnp.where(valid, act, 0.0).astype(jnp.bfloat16)   # ~14 vregs live

        # FC: out[b, o] = sum_{c,p} act[c,p] * fcw[o,c,p]  (+ bias)
        # VPU multiply + full reduce, accumulated in f32 (no tiny MXU matmuls).
        for o in range(NOUT):
            w_o = fcw_ref[o]                             # [32, 896] bf16
            prod = act.astype(jnp.float32) * w_o.astype(jnp.float32)
            o_ref[b, o] = jnp.sum(prod) + fcb_ref[o]


def fused_cnn(patches, cw, cb, fcw, fcb):
    flops = 2 * B * COUT * HWP * (KP + NOUT)
    bytes_accessed = (patches.size * 2 + cw.size * 2 + cb.size * 4
                      + fcw.size * 2 + fcb.size * 4 + B * NOUT * 4)
    return pl.pallas_call(
        fused_cnn_kernel,
        out_shape=jax.ShapeDtypeStruct((B, NOUT), jnp.float32),
        in_specs=[
            pl.BlockSpec(memory_space=pltpu.MemorySpace.VMEM),   # patches
            pl.BlockSpec(memory_space=pltpu.MemorySpace.VMEM),   # conv weight
            pl.BlockSpec(memory_space=pltpu.MemorySpace.VMEM),   # conv bias
            pl.BlockSpec(memory_space=pltpu.MemorySpace.VMEM),   # fc weight
            pl.BlockSpec(memory_space=pltpu.MemorySpace.SMEM),   # fc bias
        ],
        out_specs=pl.BlockSpec(memory_space=pltpu.MemorySpace.SMEM),
        cost_estimate=pl.CostEstimate(
            flops=flops, transcendentals=0, bytes_accessed=bytes_accessed),
    )(patches, cw, cb, fcw, fcb)


# ---------------------------------------------------------------------------
# JAX-side plumbing
# ---------------------------------------------------------------------------
def im2col(x):
    # x: [B, 1, H, W] f32 -> lane-dense bf16 patches [B, KP, HWP]
    # patches[b, kh*3+kw, h*28+w] = xpad[b, h+kh, w+kw];  pad=1, stride=1.
    xp = jnp.pad(x[:, 0], ((0, 0), (1, 1), (1, 1)))            # [B, 30, 30]
    taps = [xp[:, kh:kh + H, kw:kw + W].reshape(-1, 1, HW)
            for kh in range(KH) for kw in range(KW)]
    p = jnp.concatenate(taps, axis=1)                          # [B, 9, 784]
    p = jnp.pad(p, ((0, 0), (0, KP - KH * KW), (0, HWP - HW)))  # [B, 16, 896]
    return p.astype(jnp.bfloat16)


def cnn_forward(x, prepped):
    cw, cb, fcw, fcb = prepped
    patches = im2col(x)                                        # [B, 16, 896] bf16
    return fused_cnn(patches, cw, cb, fcw, fcb)                # [B, 10] f32


def prepare_params(params):
    """One-time (outside the jitted forward) re-layout of PyTorch-shaped params."""
    conv_w, conv_b, fc_w, fc_b = params
    cw = jnp.pad(conv_w.reshape(COUT, KH * KW),
                 ((0, 0), (0, KP - KH * KW))).astype(jnp.bfloat16)   # [32, 16]
    cb = conv_b.reshape(COUT, 1)                                      # [32, 1] f32
    # fc weight [10, 25088] (PyTorch flatten index c*784+hw) -> [10, 32, 784]
    # -> zero-pad hw 784 -> 896 lanes -> bf16.  Last two dims (32, 896) are
    # exactly (8,128)-tileable -> no sublane padding in VMEM.
    fcw = fc_w.reshape(NOUT, COUT, HW)
    fcw = jnp.pad(fcw, ((0, 0), (0, 0), (0, HWP - HW))).astype(jnp.bfloat16)
    fcb = fc_b.astype(jnp.float32)                                    # [10]
    return cw, cb, fcw, fcb


def init_params(key):
    k1, k2, k3, k4 = jax.random.split(key, 4)
    conv_w = jax.random.normal(k1, (COUT, CIN, KH, KW), jnp.float32) * 0.1
    conv_b = jax.random.normal(k2, (COUT,), jnp.float32) * 0.1
    fc_w = jax.random.normal(k3, (NOUT, COUT * HW), jnp.float32) * 0.01
    fc_b = jax.random.normal(k4, (NOUT,), jnp.float32) * 0.01
    return conv_w, conv_b, fc_w, fc_b


def reference_forward(x, params):
    conv_w, conv_b, fc_w, fc_b = params
    y = lax.conv_general_dilated(x, conv_w, (1, 1), ((1, 1), (1, 1)),
                                 dimension_numbers=("NCHW", "OIHW", "NCHW"))
    y = jnp.maximum(y + conv_b[None, :, None, None], 0.0)
    y = y.reshape(x.shape[0], -1)
    return y @ fc_w.T + fc_b[None, :]


if __name__ == "__main__":
    key = jax.random.PRNGKey(0)
    kx, kp = jax.random.split(key)
    x = jax.random.normal(kx, (B, CIN, H, W), jnp.float32)     # NCHW like PyTorch
    params = init_params(kp)
    prepped = prepare_params(params)      # weight re-layout hoisted out of jit

    out = jax.jit(cnn_forward)(x, prepped)
    jax.block_until_ready(out)
    assert out.shape == (B, NOUT) and out.dtype == jnp.float32

    # loose tolerance: conv/FC run with bf16 inputs, f32 accumulation
    ref = reference_forward(x, params)
    assert jnp.allclose(out, ref, rtol=5e-2, atol=5e-2), \
        float(jnp.max(jnp.abs(out - ref)))
    print("KERNEL_OK")
</pallas_src>

<mosaic_0001>
module attributes {stable_mosaic.version = 11 : i64} {
  func.func @fused_cnn_kernel(%arg0: memref<2x16x896xbf16, #tpu.memory_space<vmem>>, %arg1: memref<32x16xbf16, #tpu.memory_space<vmem>>, %arg2: memref<32x1xf32, #tpu.memory_space<vmem>>, %arg3: memref<10x32x896xbf16, #tpu.memory_space<vmem>>, %arg4: memref<10xf32, #tpu.memory_space<smem>>, %arg5: memref<2x10xf32, #tpu.memory_space<smem>>) attributes {dimension_semantics = [], scalar_prefetch = 0 : i64, scratch_operands = 0 : i64, tpu.core_type = #tpu.core_type<tc>} {
    %c0 = arith.constant 0 : index
    %c0_0 = arith.constant 0 : index
    %0 = vector.load %arg1[%c0, %c0_0] : memref<32x16xbf16, #tpu.memory_space<vmem>>, vector<32x16xbf16>
    %c0_1 = arith.constant 0 : index
    %c0_2 = arith.constant 0 : index
    %1 = vector.load %arg2[%c0_1, %c0_2] : memref<32x1xf32, #tpu.memory_space<vmem>>, vector<32x1xf32>
    %2 = tpu.iota {dimensions = array<i32: 1>} : vector<32x896xi32>
    %c784_i32 = arith.constant 784 : i32
    %3 = vector.broadcast %c784_i32 : i32 to vector<32x896xi32>
    %4 = arith.cmpi slt, %2, %3 : vector<32x896xi32>
    %c0_3 = arith.constant 0 : index
    %c0_4 = arith.constant 0 : index
    %c0_5 = arith.constant 0 : index
    %5 = vector.load %arg0[%c0_3, %c0_4, %c0_5] : memref<2x16x896xbf16, #tpu.memory_space<vmem>>, vector<1x16x896xbf16>
    %6 = vector.shape_cast %5 : vector<1x16x896xbf16> to vector<16x896xbf16>
    %cst = arith.constant dense<0.000000e+00> : vector<32x896xf32>
    %7 = tpu.matmul %0, %6, %cst {dimension_numbers = #tpu.dot_dimension_numbers<[1], [0], [0], [1], [0, 0, 1, 1], [], []>} : vector<32x16xbf16>, vector<16x896xbf16>, vector<32x896xf32> -> vector<32x896xf32>
    %8 = vector.broadcast %1 : vector<32x1xf32> to vector<32x896xf32>
    %9 = arith.addf %7, %8 : vector<32x896xf32>
    %cst_6 = arith.constant 0.000000e+00 : f32
    %10 = vector.broadcast %cst_6 : f32 to vector<32x896xf32>
    %11 = arith.maximumf %9, %10 : vector<32x896xf32>
    %cst_7 = arith.constant 0.000000e+00 : f32
    %12 = vector.broadcast %cst_7 : f32 to vector<32x896xf32>
    %13 = arith.select %4, %11, %12 : vector<32x896xi1>, vector<32x896xf32>
    %14 = arith.truncf %13 : vector<32x896xf32> to vector<32x896xbf16>
    %c0_8 = arith.constant 0 : index
    %c0_9 = arith.constant 0 : index
    %c0_10 = arith.constant 0 : index
    %15 = vector.load %arg3[%c0_8, %c0_9, %c0_10] : memref<10x32x896xbf16, #tpu.memory_space<vmem>>, vector<1x32x896xbf16>
    %16 = vector.shape_cast %15 : vector<1x32x896xbf16> to vector<32x896xbf16>
    %17 = arith.extf %14 : vector<32x896xbf16> to vector<32x896xf32>
    %18 = arith.extf %16 : vector<32x896xbf16> to vector<32x896xf32>
    %19 = arith.mulf %17, %18 : vector<32x896xf32>
    %20 = vector.shape_cast %19 : vector<32x896xf32> to vector<1x32x896xf32>
    %cst_11 = arith.constant dense<0.000000e+00> : vector<1xf32>
    %21 = vector.multi_reduction <add>, %20, %cst_11 [1, 2] : vector<1x32x896xf32> to vector<1xf32>
    %22 = vector.shape_cast %21 : vector<1xf32> to vector<1x1x1xf32>
    %23 = vector.extract %22[0, 0, 0] : f32 from vector<1x1x1xf32>
    %c0_12 = arith.constant 0 : index
    %24 = memref.load %arg4[%c0_12] : memref<10xf32, #tpu.memory_space<smem>>
    %25 = arith.addf %23, %24 : f32
    %c0_13 = arith.constant 0 : index
    %c0_14 = arith.constant 0 : index
    %26 = memref.load %arg5[%c0_13, %c0_14] : memref<2x10xf32, #tpu.memory_space<smem>>
    memref.store %25, %arg5[%c0_13, %c0_14] : memref<2x10xf32, #tpu.memory_space<smem>>
    %c1 = arith.constant 1 : index
    %c0_15 = arith.constant 0 : index
    %c0_16 = arith.constant 0 : index
    %27 = vector.load %arg3[%c1, %c0_15, %c0_16] : memref<10x32x896xbf16, #tpu.memory_space<vmem>>, vector<1x32x896xbf16>
    %28 = vector.shape_cast %27 : vector<1x32x896xbf16> to vector<32x896xbf16>
    %29 = arith.extf %14 : vector<32x896xbf16> to vector<32x896xf32>
    %30 = arith.extf %28 : vector<32x896xbf16> to vector<32x896xf32>
    %31 = arith.mulf %29, %30 : vector<32x896xf32>
    %32 = vector.shape_cast %31 : vector<32x896xf32> to vector<1x32x896xf32>
    %cst_17 = arith.constant dense<0.000000e+00> : vector<1xf32>
    %33 = vector.multi_reduction <add>, %32, %cst_17 [1, 2] : vector<1x32x896xf32> to vector<1xf32>
    %34 = vector.shape_cast %33 : vector<1xf32> to vector<1x1x1xf32>
    %35 = vector.extract %34[0, 0, 0] : f32 from vector<1x1x1xf32>
    %c1_18 = arith.constant 1 : index
    %36 = memref.load %arg4[%c1_18] : memref<10xf32, #tpu.memory_space<smem>>
    %37 = arith.addf %35, %36 : f32
    %c0_19 = arith.constant 0 : index
    %c1_20 = arith.constant 1 : index
    %38 = memref.load %arg5[%c0_19, %c1_20] : memref<2x10xf32, #tpu.memory_space<smem>>
    memref.store %37, %arg5[%c0_19, %c1_20] : memref<2x10xf32, #tpu.memory_space<smem>>
    %c2 = arith.constant 2 : index
    %c0_21 = arith.constant 0 : index
    %c0_22 = arith.constant 0 : index
    %39 = vector.load %arg3[%c2, %c0_21, %c0_22] : memref<10x32x896xbf16, #tpu.memory_space<vmem>>, vector<1x32x896xbf16>
    %40 = vector.shape_cast %39 : vector<1x32x896xbf16> to vector<32x896xbf16>
    %41 = arith.extf %14 : vector<32x896xbf16> to vector<32x896xf32>
    %42 = arith.extf %40 : vector<32x896xbf16> to vector<32x896xf32>
    %43 = arith.mulf %41, %42 : vector<32x896xf32>
    %44 = vector.shape_cast %43 : vector<32x896xf32> to vector<1x32x896xf32>
    %cst_23 = arith.constant dense<0.000000e+00> : vector<1xf32>
    %45 = vector.multi_reduction <add>, %44, %cst_23 [1, 2] : vector<1x32x896xf32> to vector<1xf32>
    %46 = vector.shape_cast %45 : vector<1xf32> to vector<1x1x1xf32>
    %47 = vector.extract %46[0, 0, 0] : f32 from vector<1x1x1xf32>
    %c2_24 = arith.constant 2 : index
    %48 = memref.load %arg4[%c2_24] : memref<10xf32, #tpu.memory_space<smem>>
    %49 = arith.addf %47, %48 : f32
    %c0_25 = arith.constant 0 : index
    %c2_26 = arith.constant 2 : index
    %50 = memref.load %arg5[%c0_25, %c2_26] : memref<2x10xf32, #tpu.memory_space<smem>>
    memref.store %49, %arg5[%c0_25, %c2_26] : memref<2x10xf32, #tpu.memory_space<smem>>
    %c3 = arith.constant 3 : index
    %c0_27 = arith.constant 0 : index
    %c0_28 = arith.constant 0 : index
    %51 = vector.load %arg3[%c3, %c0_27, %c0_28] : memref<10x32x896xbf16, #tpu.memory_space<vmem>>, vector<1x32x896xbf16>
    %52 = vector.shape_cast %51 : vector<1x32x896xbf16> to vector<32x896xbf16>
    %53 = arith.extf %14 : vector<32x896xbf16> to vector<32x896xf32>
    %54 = arith.extf %52 : vector<32x896xbf16> to vector<32x896xf32>
    %55 = arith.mulf %53, %54 : vector<32x896xf32>
    %56 = vector.shape_cast %55 : vector<32x896xf32> to vector<1x32x896xf32>
    %cst_29 = arith.constant dense<0.000000e+00> : vector<1xf32>
    %57 = vector.multi_reduction <add>, %56, %cst_29 [1, 2] : vector<1x32x896xf32> to vector<1xf32>
    %58 = vector.shape_cast %57 : vector<1xf32> to vector<1x1x1xf32>
    %59 = vector.extract %58[0, 0, 0] : f32 from vector<1x1x1xf32>
    %c3_30 = arith.constant 3 : index
    %60 = memref.load %arg4[%c3_30] : memref<10xf32, #tpu.memory_space<smem>>
    %61 = arith.addf %59, %60 : f32
    %c0_31 = arith.constant 0 : index
    %c3_32 = arith.constant 3 : index
    %62 = memref.load %arg5[%c0_31, %c3_32] : memref<2x10xf32, #tpu.memory_space<smem>>
    memref.store %61, %arg5[%c0_31, %c3_32] : memref<2x10xf32, #tpu.memory_space<smem>>
    %c4 = arith.constant 4 : index
    %c0_33 = arith.constant 0 : index
    %c0_34 = arith.constant 0 : index
    %63 = vector.load %arg3[%c4, %c0_33, %c0_34] : memref<10x32x896xbf16, #tpu.memory_space<vmem>>, vector<1x32x896xbf16>
    %64 = vector.shape_cast %63 : vector<1x32x896xbf16> to vector<32x896xbf16>
    %65 = arith.extf %14 : vector<32x896xbf16> to vector<32x896xf32>
    %66 = arith.extf %64 : vector<32x896xbf16> to vector<32x896xf32>
    %67 = arith.mulf %65, %66 : vector<32x896xf32>
    %68 = vector.shape_cast %67 : vector<32x896xf32> to vector<1x32x896xf32>
    %cst_35 = arith.constant dense<0.000000e+00> : vector<1xf32>
    %69 = vector.multi_reduction <add>, %68, %cst_35 [1, 2] : vector<1x32x896xf32> to vector<1xf32>
    %70 = vector.shape_cast %69 : vector<1xf32> to vector<1x1x1xf32>
    %71 = vector.extract %70[0, 0, 0] : f32 from vector<1x1x1xf32>
    %c4_36 = arith.constant 4 : index
    %72 = memref.load %arg4[%c4_36] : memref<10xf32, #tpu.memory_space<smem>>
    %73 = arith.addf %71, %72 : f32
    %c0_37 = arith.constant 0 : index
    %c4_38 = arith.constant 4 : index
    %74 = memref.load %arg5[%c0_37, %c4_38] : memref<2x10xf32, #tpu.memory_space<smem>>
    memref.store %73, %arg5[%c0_37, %c4_38] : memref<2x10xf32, #tpu.memory_space<smem>>
    %c5 = arith.constant 5 : index
    %c0_39 = arith.constant 0 : index
    %c0_40 = arith.constant 0 : index
    %75 = vector.load %arg3[%c5, %c0_39, %c0_40] : memref<10x32x896xbf16, #tpu.memory_space<vmem>>, vector<1x32x896xbf16>
    %76 = vector.shape_cast %75 : vector<1x32x896xbf16> to vector<32x896xbf16>
    %77 = arith.extf %14 : vector<32x896xbf16> to vector<32x896xf32>
    %78 = arith.extf %76 : vector<32x896xbf16> to vector<32x896xf32>
    %79 = arith.mulf %77, %78 : vector<32x896xf32>
    %80 = vector.shape_cast %79 : vector<32x896xf32> to vector<1x32x896xf32>
    %cst_41 = arith.constant dense<0.000000e+00> : vector<1xf32>
    %81 = vector.multi_reduction <add>, %80, %cst_41 [1, 2] : vector<1x32x896xf32> to vector<1xf32>
    %82 = vector.shape_cast %81 : vector<1xf32> to vector<1x1x1xf32>
    %83 = vector.extract %82[0, 0, 0] : f32 from vector<1x1x1xf32>
    %c5_42 = arith.constant 5 : index
    %84 = memref.load %arg4[%c5_42] : memref<10xf32, #tpu.memory_space<smem>>
    %85 = arith.addf %83, %84 : f32
    %c0_43 = arith.constant 0 : index
    %c5_44 = arith.constant 5 : index
    %86 = memref.load %arg5[%c0_43, %c5_44] : memref<2x10xf32, #tpu.memory_space<smem>>
    memref.store %85, %arg5[%c0_43, %c5_44] : memref<2x10xf32, #tpu.memory_space<smem>>
    %c6 = arith.constant 6 : index
    %c0_45 = arith.constant 0 : index
    %c0_46 = arith.constant 0 : index
    %87 = vector.load %arg3[%c6, %c0_45, %c0_46] : memref<10x32x896xbf16, #tpu.memory_space<vmem>>, vector<1x32x896xbf16>
    %88 = vector.shape_cast %87 : vector<1x32x896xbf16> to vector<32x896xbf16>
    %89 = arith.extf %14 : vector<32x896xbf16> to vector<32x896xf32>
    %90 = arith.extf %88 : vector<32x896xbf16> to vector<32x896xf32>
    %91 = arith.mulf %89, %90 : vector<32x896xf32>
    %92 = vector.shape_cast %91 : vector<32x896xf32> to vector<1x32x896xf32>
    %cst_47 = arith.constant dense<0.000000e+00> : vector<1xf32>
    %93 = vector.multi_reduction <add>, %92, %cst_47 [1, 2] : vector<1x32x896xf32> to vector<1xf32>
    %94 = vector.shape_cast %93 : vector<1xf32> to vector<1x1x1xf32>
    %95 = vector.extract %94[0, 0, 0] : f32 from vector<1x1x1xf32>
    %c6_48 = arith.constant 6 : index
    %96 = memref.load %arg4[%c6_48] : memref<10xf32, #tpu.memory_space<smem>>
    %97 = arith.addf %95, %96 : f32
    %c0_49 = arith.constant 0 : index
    %c6_50 = arith.constant 6 : index
    %98 = memref.load %arg5[%c0_49, %c6_50] : memref<2x10xf32, #tpu.memory_space<smem>>
    memref.store %97, %arg5[%c0_49, %c6_50] : memref<2x10xf32, #tpu.memory_space<smem>>
    %c7 = arith.constant 7 : index
    %c0_51 = arith.constant 0 : index
    %c0_52 = arith.constant 0 : index
    %99 = vector.load %arg3[%c7, %c0_51, %c0_52] : memref<10x32x896xbf16, #tpu.memory_space<vmem>>, vector<1x32x896xbf16>
    %100 = vector.shape_cast %99 : vector<1x32x896xbf16> to vector<32x896xbf16>
    %101 = arith.extf %14 : vector<32x896xbf16> to vector<32x896xf32>
    %102 = arith.extf %100 : vector<32x896xbf16> to vector<32x896xf32>
    %103 = arith.mulf %101, %102 : vector<32x896xf32>
    %104 = vector.shape_cast %103 : vector<32x896xf32> to vector<1x32x896xf32>
    %cst_53 = arith.constant dense<0.000000e+00> : vector<1xf32>
    %105 = vector.multi_reduction <add>, %104, %cst_53 [1, 2] : vector<1x32x896xf32> to vector<1xf32>
    %106 = vector.shape_cast %105 : vector<1xf32> to vector<1x1x1xf32>
    %107 = vector.extract %106[0, 0, 0] : f32 from vector<1x1x1xf32>
    %c7_54 = arith.constant 7 : index
    %108 = memref.load %arg4[%c7_54] : memref<10xf32, #tpu.memory_space<smem>>
    %109 = arith.addf %107, %108 : f32
    %c0_55 = arith.constant 0 : index
    %c7_56 = arith.constant 7 : index
    %110 = memref.load %arg5[%c0_55, %c7_56] : memref<2x10xf32, #tpu.memory_space<smem>>
    memref.store %109, %arg5[%c0_55, %c7_56] : memref<2x10xf32, #tpu.memory_space<smem>>
    %c8 = arith.constant 8 : index
    %c0_57 = arith.constant 0 : index
    %c0_58 = arith.constant 0 : index
    %111 = vector.load %arg3[%c8, %c0_57, %c0_58] : memref<10x32x896xbf16, #tpu.memory_space<vmem>>, vector<1x32x896xbf16>
    %112 = vector.shape_cast %111 : vector<1x32x896xbf16> to vector<32x896xbf16>
    %113 = arith.extf %14 : vector<32x896xbf16> to vector<32x896xf32>
    %114 = arith.extf %112 : vector<32x896xbf16> to vector<32x896xf32>
    %115 = arith.mulf %113, %114 : vector<32x896xf32>
    %116 = vector.shape_cast %115 : vector<32x896xf32> to vector<1x32x896xf32>
    %cst_59 = arith.constant dense<0.000000e+00> : vector<1xf32>
    %117 = vector.multi_reduction <add>, %116, %cst_59 [1, 2] : vector<1x32x896xf32> to vector<1xf32>
    %118 = vector.shape_cast %117 : vector<1xf32> to vector<1x1x1xf32>
    %119 = vector.extract %118[0, 0, 0] : f32 from vector<1x1x1xf32>
    %c8_60 = arith.constant 8 : index
    %120 = memref.load %arg4[%c8_60] : memref<10xf32, #tpu.memory_space<smem>>
    %121 = arith.addf %119, %120 : f32
    %c0_61 = arith.constant 0 : index
    %c8_62 = arith.constant 8 : index
    %122 = memref.load %arg5[%c0_61, %c8_62] : memref<2x10xf32, #tpu.memory_space<smem>>
    memref.store %121, %arg5[%c0_61, %c8_62] : memref<2x10xf32, #tpu.memory_space<smem>>
    %c9 = arith.constant 9 : index
    %c0_63 = arith.constant 0 : index
    %c0_64 = arith.constant 0 : index
    %123 = vector.load %arg3[%c9, %c0_63, %c0_64] : memref<10x32x896xbf16, #tpu.memory_space<vmem>>, vector<1x32x896xbf16>
    %124 = vector.shape_cast %123 : vector<1x32x896xbf16> to vector<32x896xbf16>
    %125 = arith.extf %14 : vector<32x896xbf16> to vector<32x896xf32>
    %126 = arith.extf %124 : vector<32x896xbf16> to vector<32x896xf32>
    %127 = arith.mulf %125, %126 : vector<32x896xf32>
    %128 = vector.shape_cast %127 : vector<32x896xf32> to vector<1x32x896xf32>
    %cst_65 = arith.constant dense<0.000000e+00> : vector<1xf32>
    %129 = vector.multi_reduction <add>, %128, %cst_65 [1, 2] : vector<1x32x896xf32> to vector<1xf32>
    %130 = vector.shape_cast %129 : vector<1xf32> to vector<1x1x1xf32>
    %131 = vector.extract %130[0, 0, 0] : f32 from vector<1x1x1xf32>
    %c9_66 = arith.constant 9 : index
    %132 = memref.load %arg4[%c9_66] : memref<10xf32, #tpu.memory_space<smem>>
    %133 = arith.addf %131, %132 : f32
    %c0_67 = arith.constant 0 : index
    %c9_68 = arith.constant 9 : index
    %134 = memref.load %arg5[%c0_67, %c9_68] : memref<2x10xf32, #tpu.memory_space<smem>>
    memref.store %133, %arg5[%c0_67, %c9_68] : memref<2x10xf32, #tpu.memory_space<smem>>
    %c1_69 = arith.constant 1 : index
    %c0_70 = arith.constant 0 : index
    %c0_71 = arith.constant 0 : index
    %135 = vector.load %arg0[%c1_69, %c0_70, %c0_71] : memref<2x16x896xbf16, #tpu.memory_space<vmem>>, vector<1x16x896xbf16>
    %136 = vector.shape_cast %135 : vector<1x16x896xbf16> to vector<16x896xbf16>
    %cst_72 = arith.constant dense<0.000000e+00> : vector<32x896xf32>
    %137 = tpu.matmul %0, %136, %cst_72 {dimension_numbers = #tpu.dot_dimension_numbers<[1], [0], [0], [1], [0, 0, 1, 1], [], []>} : vector<32x16xbf16>, vector<16x896xbf16>, vector<32x896xf32> -> vector<32x896xf32>
    %138 = vector.broadcast %1 : vector<32x1xf32> to vector<32x896xf32>
    %139 = arith.addf %137, %138 : vector<32x896xf32>
    %cst_73 = arith.constant 0.000000e+00 : f32
    %140 = vector.broadcast %cst_73 : f32 to vector<32x896xf32>
    %141 = arith.maximumf %139, %140 : vector<32x896xf32>
    %cst_74 = arith.constant 0.000000e+00 : f32
    %142 = vector.broadcast %cst_74 : f32 to vector<32x896xf32>
    %143 = arith.select %4, %141, %142 : vector<32x896xi1>, vector<32x896xf32>
    %144 = arith.truncf %143 : vector<32x896xf32> to vector<32x896xbf16>
    %c0_75 = arith.constant 0 : index
    %c0_76 = arith.constant 0 : index
    %c0_77 = arith.constant 0 : index
    %145 = vector.load %arg3[%c0_75, %c0_76, %c0_77] : memref<10x32x896xbf16, #tpu.memory_space<vmem>>, vector<1x32x896xbf16>
    %146 = vector.shape_cast %145 : vector<1x32x896xbf16> to vector<32x896xbf16>
    %147 = arith.extf %144 : vector<32x896xbf16> to vector<32x896xf32>
    %148 = arith.extf %146 : vector<32x896xbf16> to vector<32x896xf32>
    %149 = arith.mulf %147, %148 : vector<32x896xf32>
    %150 = vector.shape_cast %149 : vector<32x896xf32> to vector<1x32x896xf32>
    %cst_78 = arith.constant dense<0.000000e+00> : vector<1xf32>
    %151 = vector.multi_reduction <add>, %150, %cst_78 [1, 2] : vector<1x32x896xf32> to vector<1xf32>
    %152 = vector.shape_cast %151 : vector<1xf32> to vector<1x1x1xf32>
    %153 = vector.extract %152[0, 0, 0] : f32 from vector<1x1x1xf32>
    %c0_79 = arith.constant 0 : index
    %154 = memref.load %arg4[%c0_79] : memref<10xf32, #tpu.memory_space<smem>>
    %155 = arith.addf %153, %154 : f32
    %c1_80 = arith.constant 1 : index
    %c0_81 = arith.constant 0 : index
    %156 = memref.load %arg5[%c1_80, %c0_81] : memref<2x10xf32, #tpu.memory_space<smem>>
    memref.store %155, %arg5[%c1_80, %c0_81] : memref<2x10xf32, #tpu.memory_space<smem>>
    %c1_82 = arith.constant 1 : index
    %c0_83 = arith.constant 0 : index
    %c0_84 = arith.constant 0 : index
    %157 = vector.load %arg3[%c1_82, %c0_83, %c0_84] : memref<10x32x896xbf16, #tpu.memory_space<vmem>>, vector<1x32x896xbf16>
    %158 = vector.shape_cast %157 : vector<1x32x896xbf16> to vector<32x896xbf16>
    %159 = arith.extf %144 : vector<32x896xbf16> to vector<32x896xf32>
    %160 = arith.extf %158 : vector<32x896xbf16> to vector<32x896xf32>
    %161 = arith.mulf %159, %160 : vector<32x896xf32>
    %162 = vector.shape_cast %161 : vector<32x896xf32> to vector<1x32x896xf32>
    %cst_85 = arith.constant dense<0.000000e+00> : vector<1xf32>
    %163 = vector.multi_reduction <add>, %162, %cst_85 [1, 2] : vector<1x32x896xf32> to vector<1xf32>
    %164 = vector.shape_cast %163 : vector<1xf32> to vector<1x1x1xf32>
    %165 = vector.extract %164[0, 0, 0] : f32 from vector<1x1x1xf32>
    %c1_86 = arith.constant 1 : index
    %166 = memref.load %arg4[%c1_86] : memref<10xf32, #tpu.memory_space<smem>>
    %167 = arith.addf %165, %166 : f32
    %c1_87 = arith.constant 1 : index
    %c1_88 = arith.constant 1 : index
    %168 = memref.load %arg5[%c1_87, %c1_88] : memref<2x10xf32, #tpu.memory_space<smem>>
    memref.store %167, %arg5[%c1_87, %c1_88] : memref<2x10xf32, #tpu.memory_space<smem>>
    %c2_89 = arith.constant 2 : index
    %c0_90 = arith.constant 0 : index
    %c0_91 = arith.constant 0 : index
    %169 = vector.load %arg3[%c2_89, %c0_90, %c0_91] : memref<10x32x896xbf16, #tpu.memory_space<vmem>>, vector<1x32x896xbf16>
    %170 = vector.shape_cast %169 : vector<1x32x896xbf16> to vector<32x896xbf16>
    %171 = arith.extf %144 : vector<32x896xbf16> to vector<32x896xf32>
    %172 = arith.extf %170 : vector<32x896xbf16> to vector<32x896xf32>
    %173 = arith.mulf %171, %172 : vector<32x896xf32>
    %174 = vector.shape_cast %173 : vector<32x896xf32> to vector<1x32x896xf32>
    %cst_92 = arith.constant dense<0.000000e+00> : vector<1xf32>
    %175 = vector.multi_reduction <add>, %174, %cst_92 [1, 2] : vector<1x32x896xf32> to vector<1xf32>
    %176 = vector.shape_cast %175 : vector<1xf32> to vector<1x1x1xf32>
    %177 = vector.extract %176[0, 0, 0] : f32 from vector<1x1x1xf32>
    %c2_93 = arith.constant 2 : index
    %178 = memref.load %arg4[%c2_93] : memref<10xf32, #tpu.memory_space<smem>>
    %179 = arith.addf %177, %178 : f32
    %c1_94 = arith.constant 1 : index
    %c2_95 = arith.constant 2 : index
    %180 = memref.load %arg5[%c1_94, %c2_95] : memref<2x10xf32, #tpu.memory_space<smem>>
    memref.store %179, %arg5[%c1_94, %c2_95] : memref<2x10xf32, #tpu.memory_space<smem>>
    %c3_96 = arith.constant 3 : index
    %c0_97 = arith.constant 0 : index
    %c0_98 = arith.constant 0 : index
    %181 = vector.load %arg3[%c3_96, %c0_97, %c0_98] : memref<10x32x896xbf16, #tpu.memory_space<vmem>>, vector<1x32x896xbf16>
    %182 = vector.shape_cast %181 : vector<1x32x896xbf16> to vector<32x896xbf16>
    %183 = arith.extf %144 : vector<32x896xbf16> to vector<32x896xf32>
    %184 = arith.extf %182 : vector<32x896xbf16> to vector<32x896xf32>
    %185 = arith.mulf %183, %184 : vector<32x896xf32>
    %186 = vector.shape_cast %185 : vector<32x896xf32> to vector<1x32x896xf32>
    %cst_99 = arith.constant dense<0.000000e+00> : vector<1xf32>
    %187 = vector.multi_reduction <add>, %186, %cst_99 [1, 2] : vector<1x32x896xf32> to vector<1xf32>
    %188 = vector.shape_cast %187 : vector<1xf32> to vector<1x1x1xf32>
    %189 = vector.extract %188[0, 0, 0] : f32 from vector<1x1x1xf32>
    %c3_100 = arith.constant 3 : index
    %190 = memref.load %arg4[%c3_100] : memref<10xf32, #tpu.memory_space<smem>>
    %191 = arith.addf %189, %190 : f32
    %c1_101 = arith.constant 1 : index
    %c3_102 = arith.constant 3 : index
    %192 = memref.load %arg5[%c1_101, %c3_102] : memref<2x10xf32, #tpu.memory_space<smem>>
    memref.store %191, %arg5[%c1_101, %c3_102] : memref<2x10xf32, #tpu.memory_space<smem>>
    %c4_103 = arith.constant 4 : index
    %c0_104 = arith.constant 0 : index
    %c0_105 = arith.constant 0 : index
    %193 = vector.load %arg3[%c4_103, %c0_104, %c0_105] : memref<10x32x896xbf16, #tpu.memory_space<vmem>>, vector<1x32x896xbf16>
    %194 = vector.shape_cast %193 : vector<1x32x896xbf16> to vector<32x896xbf16>
    %195 = arith.extf %144 : vector<32x896xbf16> to vector<32x896xf32>
    %196 = arith.extf %194 : vector<32x896xbf16> to vector<32x896xf32>
    %197 = arith.mulf %195, %196 : vector<32x896xf32>
    %198 = vector.shape_cast %197 : vector<32x896xf32> to vector<1x32x896xf32>
    %cst_106 = arith.constant dense<0.000000e+00> : vector<1xf32>
    %199 = vector.multi_reduction <add>, %198, %cst_106 [1, 2] : vector<1x32x896xf32> to vector<1xf32>
    %200 = vector.shape_cast %199 : vector<1xf32> to vector<1x1x1xf32>
    %201 = vector.extract %200[0, 0, 0] : f32 from vector<1x1x1xf32>
    %c4_107 = arith.constant 4 : index
    %202 = memref.load %arg4[%c4_107] : memref<10xf32, #tpu.memory_space<smem>>
    %203 = arith.addf %201, %202 : f32
    %c1_108 = arith.constant 1 : index
    %c4_109 = arith.constant 4 : index
    %204 = memref.load %arg5[%c1_108, %c4_109] : memref<2x10xf32, #tpu.memory_space<smem>>
    memref.store %203, %arg5[%c1_108, %c4_109] : memref<2x10xf32, #tpu.memory_space<smem>>
    %c5_110 = arith.constant 5 : index
    %c0_111 = arith.constant 0 : index
    %c0_112 = arith.constant 0 : index
    %205 = vector.load %arg3[%c5_110, %c0_111, %c0_112] : memref<10x32x896xbf16, #tpu.memory_space<vmem>>, vector<1x32x896xbf16>
    %206 = vector.shape_cast %205 : vector<1x32x896xbf16> to vector<32x896xbf16>
    %207 = arith.extf %144 : vector<32x896xbf16> to vector<32x896xf32>
    %208 = arith.extf %206 : vector<32x896xbf16> to vector<32x896xf32>
    %209 = arith.mulf %207, %208 : vector<32x896xf32>
    %210 = vector.shape_cast %209 : vector<32x896xf32> to vector<1x32x896xf32>
    %cst_113 = arith.constant dense<0.000000e+00> : vector<1xf32>
    %211 = vector.multi_reduction <add>, %210, %cst_113 [1, 2] : vector<1x32x896xf32> to vector<1xf32>
    %212 = vector.shape_cast %211 : vector<1xf32> to vector<1x1x1xf32>
    %213 = vector.extract %212[0, 0, 0] : f32 from vector<1x1x1xf32>
    %c5_114 = arith.constant 5 : index
    %214 = memref.load %arg4[%c5_114] : memref<10xf32, #tpu.memory_space<smem>>
    %215 = arith.addf %213, %214 : f32
    %c1_115 = arith.constant 1 : index
    %c5_116 = arith.constant 5 : index
    %216 = memref.load %arg5[%c1_115, %c5_116] : memref<2x10xf32, #tpu.memory_space<smem>>
    memref.store %215, %arg5[%c1_115, %c5_116] : memref<2x10xf32, #tpu.memory_space<smem>>
    %c6_117 = arith.constant 6 : index
    %c0_118 = arith.constant 0 : index
    %c0_119 = arith.constant 0 : index
    %217 = vector.load %arg3[%c6_117, %c0_118, %c0_119] : memref<10x32x896xbf16, #tpu.memory_space<vmem>>, vector<1x32x896xbf16>
    %218 = vector.shape_cast %217 : vector<1x32x896xbf16> to vector<32x896xbf16>
    %219 = arith.extf %144 : vector<32x896xbf16> to vector<32x896xf32>
    %220 = arith.extf %218 : vector<32x896xbf16> to vector<32x896xf32>
    %221 = arith.mulf %219, %220 : vector<32x896xf32>
    %222 = vector.shape_cast %221 : vector<32x896xf32> to vector<1x32x896xf32>
    %cst_120 = arith.constant dense<0.000000e+00> : vector<1xf32>
    %223 = vector.multi_reduction <add>, %222, %cst_120 [1, 2] : vector<1x32x896xf32> to vector<1xf32>
    %224 = vector.shape_cast %223 : vector<1xf32> to vector<1x1x1xf32>
    %225 = vector.extract %224[0, 0, 0] : f32 from vector<1x1x1xf32>
    %c6_121 = arith.constant 6 : index
    %226 = memref.load %arg4[%c6_121] : memref<10xf32, #tpu.memory_space<smem>>
    %227 = arith.addf %225, %226 : f32
    %c1_122 = arith.constant 1 : index
    %c6_123 = arith.constant 6 : index
    %228 = memref.load %arg5[%c1_122, %c6_123] : memref<2x10xf32, #tpu.memory_space<smem>>
    memref.store %227, %arg5[%c1_122, %c6_123] : memref<2x10xf32, #tpu.memory_space<smem>>
    %c7_124 = arith.constant 7 : index
    %c0_125 = arith.constant 0 : index
    %c0_126 = arith.constant 0 : index
    %229 = vector.load %arg3[%c7_124, %c0_125, %c0_126] : memref<10x32x896xbf16, #tpu.memory_space<vmem>>, vector<1x32x896xbf16>
    %230 = vector.shape_cast %229 : vector<1x32x896xbf16> to vector<32x896xbf16>
    %231 = arith.extf %144 : vector<32x896xbf16> to vector<32x896xf32>
    %232 = arith.extf %230 : vector<32x896xbf16> to vector<32x896xf32>
    %233 = arith.mulf %231, %232 : vector<32x896xf32>
    %234 = vector.shape_cast %233 : vector<32x896xf32> to vector<1x32x896xf32>
    %cst_127 = arith.constant dense<0.000000e+00> : vector<1xf32>
    %235 = vector.multi_reduction <add>, %234, %cst_127 [1, 2] : vector<1x32x896xf32> to vector<1xf32>
    %236 = vector.shape_cast %235 : vector<1xf32> to vector<1x1x1xf32>
    %237 = vector.extract %236[0, 0, 0] : f32 from vector<1x1x1xf32>
    %c7_128 = arith.constant 7 : index
    %238 = memref.load %arg4[%c7_128] : memref<10xf32, #tpu.memory_space<smem>>
    %239 = arith.addf %237, %238 : f32
    %c1_129 = arith.constant 1 : index
    %c7_130 = arith.constant 7 : index
    %240 = memref.load %arg5[%c1_129, %c7_130] : memref<2x10xf32, #tpu.memory_space<smem>>
    memref.store %239, %arg5[%c1_129, %c7_130] : memref<2x10xf32, #tpu.memory_space<smem>>
    %c8_131 = arith.constant 8 : index
    %c0_132 = arith.constant 0 : index
    %c0_133 = arith.constant 0 : index
    %241 = vector.load %arg3[%c8_131, %c0_132, %c0_133] : memref<10x32x896xbf16, #tpu.memory_space<vmem>>, vector<1x32x896xbf16>
    %242 = vector.shape_cast %241 : vector<1x32x896xbf16> to vector<32x896xbf16>
    %243 = arith.extf %144 : vector<32x896xbf16> to vector<32x896xf32>
    %244 = arith.extf %242 : vector<32x896xbf16> to vector<32x896xf32>
    %245 = arith.mulf %243, %244 : vector<32x896xf32>
    %246 = vector.shape_cast %245 : vector<32x896xf32> to vector<1x32x896xf32>
    %cst_134 = arith.constant dense<0.000000e+00> : vector<1xf32>
    %247 = vector.multi_reduction <add>, %246, %cst_134 [1, 2] : vector<1x32x896xf32> to vector<1xf32>
    %248 = vector.shape_cast %247 : vector<1xf32> to vector<1x1x1xf32>
    %249 = vector.extract %248[0, 0, 0] : f32 from vector<1x1x1xf32>
    %c8_135 = arith.constant 8 : index
    %250 = memref.load %arg4[%c8_135] : memref<10xf32, #tpu.memory_space<smem>>
    %251 = arith.addf %249, %250 : f32
    %c1_136 = arith.constant 1 : index
    %c8_137 = arith.constant 8 : index
    %252 = memref.load %arg5[%c1_136, %c8_137] : memref<2x10xf32, #tpu.memory_space<smem>>
    memref.store %251, %arg5[%c1_136, %c8_137] : memref<2x10xf32, #tpu.memory_space<smem>>
    %c9_138 = arith.constant 9 : index
    %c0_139 = arith.constant 0 : index
    %c0_140 = arith.constant 0 : index
    %253 = vector.load %arg3[%c9_138, %c0_139, %c0_140] : memref<10x32x896xbf16, #tpu.memory_space<vmem>>, vector<1x32x896xbf16>
    %254 = vector.shape_cast %253 : vector<1x32x896xbf16> to vector<32x896xbf16>
    %255 = arith.extf %144 : vector<32x896xbf16> to vector<32x896xf32>
    %256 = arith.extf %254 : vector<32x896xbf16> to vector<32x896xf32>
    %257 = arith.mulf %255, %256 : vector<32x896xf32>
    %258 = vector.shape_cast %257 : vector<32x896xf32> to vector<1x32x896xf32>
    %cst_141 = arith.constant dense<0.000000e+00> : vector<1xf32>
    %259 = vector.multi_reduction <add>, %258, %cst_141 [1, 2] : vector<1x32x896xf32> to vector<1xf32>
    %260 = vector.shape_cast %259 : vector<1xf32> to vector<1x1x1xf32>
    %261 = vector.extract %260[0, 0, 0] : f32 from vector<1x1x1xf32>
    %c9_142 = arith.constant 9 : index
    %262 = memref.load %arg4[%c9_142] : memref<10xf32, #tpu.memory_space<smem>>
    %263 = arith.addf %261, %262 : f32
    %c1_143 = arith.constant 1 : index
    %c9_144 = arith.constant 9 : index
    %264 = memref.load %arg5[%c1_143, %c9_144] : memref<2x10xf32, #tpu.memory_space<smem>>
    memref.store %263, %arg5[%c1_143, %c9_144] : memref<2x10xf32, #tpu.memory_space<smem>>
    return
  }
}

</mosaic_0001>

<llo_original>
// kernel: cnn_forward.1
$region0: #{cnn_forward.1}
  #allocation0 [shape = 'u32[]', space=smem, size = 0x4, offset = 0x4, fixed_abs, tag = 'smem constant byte address 0x4 - core index']
  #allocation1 [shape = 'u32[144,128]{1,0:T(1,128)}', space=vmem, size = 0x12000, scoped, tag = 'internal scratch']
  %s0 = inlined_call_operand.vmem [shape: bf16[2,16,896], index: 0, kind: input, shape index: {}]
  %s1 = inlined_call_operand.vmem [shape: bf16[32,16], index: 1, kind: input, shape index: {}]
  %s2 = inlined_call_operand.vmem [shape: f32[32,1], index: 2, kind: input, shape index: {}]
  %s3 = inlined_call_operand.vmem [shape: bf16[10,32,896], index: 3, kind: input, shape index: {}]
  %s4 = inlined_call_operand.vmem [shape: f32[10], index: 4, kind: input, shape index: {}]
  %s5 = inlined_call_operand.hbm [shape: f32[2,10], index: 5, kind: output, shape index: {}]
  %s6 = sld [smem:[#allocation0]]
  $region34: #{cnn_forward.1} parent=0
    _
  %s8 = ssub.s32 1, %s6
  %s9 = scalar_select 0, %s8, %s6
  $region1: #{cnn_forward.1} parent=0
    #allocation2 [shape = 'u8[512]{0}', space=smem, size = 0x200, scoped, tag = 'input window, operand 4, single buffered']
    #allocation3 [shape = 's32[1]{0}', space=sflag, size = 0x4, scoped, tag = 'scoped memory for cnn_forward.1']
    #allocation4 [shape = 's32[1]{0}', space=sflag, size = 0x4, scoped, tag = 'scoped memory for cnn_forward.1']
    #allocation5 [shape = 'u8[1024]{0}', space=smem, size = 0x400, scoped, tag = 'output window, operand 0, single buffered']
    %10 = vsyncpa [#allocation4], 0
    %11 = vsyncpa [#allocation3], 0
    // Predicated region
    $region2: #{cnn_forward.1} parent=1 // pred_check
      _
    $region3: #{cnn_forward.1} parent=1 // pred_check_branch
      %13 = sbr.rel (0) target = $region5
    $region4: #{cnn_forward.1} parent=1 // pred_region
      _
    $region5: #{cnn_forward.1} parent=1 // pred_fallthru
      _
    // Predicated region
    $region6: #{cnn_forward.1} parent=1 // pred_check
      _
    $region7: #{cnn_forward.1} parent=1 // pred_check_branch
      %15 = sbr.rel (0) target = $region9
    $region8: #{cnn_forward.1} parent=1 // pred_region
      _
    $region9: #{cnn_forward.1} parent=1 // pred_fallthru
      _
    // Predicated region
    $region10: #{cnn_forward.1} parent=1 // pred_check
      _
    $region11: #{cnn_forward.1} parent=1 // pred_check_branch
      %17 = sbr.rel (0) target = $region13
    $region12: #{cnn_forward.1} parent=1 // pred_region
      _
    $region13: #{cnn_forward.1} parent=1 // pred_fallthru
      _
    // Predicated region
    $region14: #{cnn_forward.1} parent=1 // pred_check
      _
    $region15: #{cnn_forward.1} parent=1 // pred_check_branch
      %19 = sbr.rel (0) target = $region17
    $region16: #{cnn_forward.1} parent=1 // pred_region
      _
    $region17: #{cnn_forward.1} parent=1 // pred_fallthru
      _
    // Predicated region
    $region18: #{cnn_forward.1} parent=1 // pred_check
      _
    $region19: #{cnn_forward.1} parent=1 // pred_check_branch
      %21 = sbr.rel (0) target = $region21
    $region20: #{cnn_forward.1} parent=1 // pred_region
      %s23 = ssub.s32 16, 16
      %24 = vsyncadd [#allocation4], %s23
      %s26 = sshll.u32 %s4, 4
      %s27 = int_to_ptr.vmem [resolvable:$true] %s26
      %29 = dma.vmem_to_smem %s27, 16, [#allocation2], [#allocation4]
    $region21: #{cnn_forward.1} parent=1 // pred_fallthru
      _
    // Predicated region
    $region22: #{cnn_forward.1} parent=1 // pred_check
      _
    $region23: #{cnn_forward.1} parent=1 // pred_check_branch
      %31 = sbr.rel (0) target = $region25
    $region24: #{cnn_forward.1} parent=1 // pred_region
      %32 = dma.done [#allocation4], 16
    $region25: #{cnn_forward.1} parent=1 // pred_fallthru
      _
    %33 = sfence
    %v35 = vld [vmem:[%s1] sm:$0xf]
    %v36 = vld [vmem:[%s1 + $0x4] sm:$0xf]
    %v37 = vld [vmem:[%s1 + $0x8] sm:$0xf]
    %v38 = vld [vmem:[%s1 + $0xc] sm:$0xf]
    %v39 = vld [vmem:[%s2] sm:$0xff]
    %v40 = vld [vmem:[%s2 + $0x8] sm:$0xff]
    %v41 = vld [vmem:[%s2 + $0x10] sm:$0xff]
    %v42 = vld [vmem:[%s2 + $0x18] sm:$0xff]
    %v43 = vlaneseq
    %v44 = vand.u32 %v43, 127
    %v45 = vadd.s32 %v44, 128
    %v46 = vadd.s32 %v44, 256
    %v47 = vadd.s32 %v44, 384
    %v48 = vadd.s32 %v44, 512
    %v49 = vadd.s32 %v44, 640
    %v50 = vadd.s32 %v44, 768
    %vm51 = vcmp.lt.s32.totalorder %v44, 784
    %vm52 = vcmp.lt.s32.totalorder %v45, 784
    %vm53 = vcmp.lt.s32.totalorder %v46, 784
    %vm54 = vcmp.lt.s32.totalorder %v47, 784
    %vm55 = vcmp.lt.s32.totalorder %v48, 784
    %vm56 = vcmp.lt.s32.totalorder %v49, 784
    %vm57 = vcmp.lt.s32.totalorder %v50, 784
    %v58 = vld [vmem:[%s0] sm:$0xff]
    %v59 = vld [vmem:[%s0 + $0x8] sm:$0xff]
    %v60 = vld [vmem:[%s0 + $0x10] sm:$0xff]
    %v61 = vld [vmem:[%s0 + $0x18] sm:$0xf]
    %v62 = vld [vmem:[%s0 + $0x1c] sm:$0xff]
    %v63 = vld [vmem:[%s0 + $0x24] sm:$0xff]
    %v64 = vld [vmem:[%s0 + $0x2c] sm:$0xff]
    %v65 = vld [vmem:[%s0 + $0x34] sm:$0xf]
    %67 = vset.pattern.permute.xlu0 0
    %68 = vperm.xlu0 %67, %v39
    %v69 = vpop.permute.xlu0 %68
    %72 = vset.pattern.permute.xlu0 0
    %73 = vperm.xlu0 %72, %v40
    %v74 = vpop.permute.xlu0 %73
    %77 = vset.pattern.permute.xlu0 0
    %78 = vperm.xlu0 %77, %v41
    %v79 = vpop.permute.xlu0 %78
    %82 = vset.pattern.permute.xlu0 0
    %83 = vperm.xlu0 %82, %v42
    %v84 = vpop.permute.xlu0 %83
    %v90 = vunpack.c.l.b16 %v35
    %v91 = vunpack.c.l.b16 %v36
    %v92 = vunpack.c.l.b16 %v37
    %v93 = vunpack.c.l.b16 %v38
    %v94 = vpack.c.b16 %v91, %v90
    %v95 = vpack.c.b16 %v93, %v92
    %v104 = vunpack.c.l.b16 %v58
    %v105 = vunpack.c.h.b16 %v58
    %v106 = vunpack.c.l.b16 %v59
    %v107 = vunpack.c.h.b16 %v59
    %v108 = vunpack.c.l.b16 %v60
    %v109 = vunpack.c.h.b16 %v60
    %v110 = vunpack.c.l.b16 %v61
    %v111 = vunpack.c.l.b16 %v62
    %v112 = vunpack.c.h.b16 %v62
    %v113 = vunpack.c.l.b16 %v63
    %v114 = vunpack.c.h.b16 %v63
    %v115 = vunpack.c.l.b16 %v64
    %v116 = vunpack.c.h.b16 %v64
    %v117 = vunpack.c.l.b16 %v65
    %v118 = vpack.c.b16 %v111, %v104
    %v119 = vpack.c.b16 %v112, %v105
    %v120 = vpack.c.b16 %v113, %v106
    %v121 = vpack.c.b16 %v114, %v107
    %v122 = vpack.c.b16 %v115, %v108
    %v123 = vpack.c.b16 %v116, %v109
    %v124 = vpack.c.b16 %v117, %v110
    %vm132 = vcmask 130048
    %v134 = vsel %vm132, %v94, 0
    %v137 = vsel %vm132, %v95, 0
    %139 = vmatprep.subr.bf16.mxu0 %v119
    %140 = vmatpush1.bf16.msra.mxu0 %v118
    %141 = vmatprep.subr.bf16.mxu0 0
    %142 = vmatpush1.bf16.msra.mxu0 0
    %143 = vmatprep.subr.bf16.mxu0 0
    %144 = vmatpush1.bf16.msra.mxu0 0
    %145 = vmatprep.subr.bf16.mxu0 0
    %146 = vmatpush1.bf16.msra.mxu0 0
    %147 = vmatprep.subr.bf16.mxu0 0
    %148 = vmatpush1.bf16.msra.mxu0 0
    %149 = vmatprep.subr.bf16.mxu0 0
    %150 = vmatpush1.bf16.msra.mxu0 0
    %151 = vmatprep.subr.bf16.mxu0 0
    %152 = vmatpush1.bf16.msra.mxu0 0
    %153 = vmatprep.subr.bf16.mxu0 0
    %154 = vmatpush1.bf16.msra.mxu0 0
    %155 = vmatprep.subr.bf16.mxu0 0
    %156 = vmatpush1.bf16.msra.mxu0 0
    %157 = vmatprep.subr.bf16.mxu0 0
    %158 = vmatpush1.bf16.msra.mxu0 0
    %159 = vmatprep.subr.bf16.mxu0 0
    %160 = vmatpush1.bf16.msra.mxu0 0
    %161 = vmatprep.subr.bf16.mxu0 0
    %162 = vmatpush1.bf16.msra.mxu0 0
    %163 = vmatprep.subr.bf16.mxu0 0
    %164 = vmatpush1.bf16.msra.mxu0 0
    %165 = vmatprep.subr.bf16.mxu0 0
    %166 = vmatpush1.bf16.msra.mxu0 0
    %167 = vmatprep.subr.bf16.mxu0 0
    %168 = vmatpush1.bf16.msra.mxu0 0
    %169 = vmatprep.subr.bf16.mxu0 0
    %170 = vmatpush1.bf16.msra.mxu0 0
    %171 = vmatprep.mubr.bf16.mxu0 0
    %172 = vmatmul.mubr.bf16.gmra.mrb[0].mxu0 %v134
    %v173 = vpop.f32.mrb[0].mxu0
    %v174 = vadd.f32 %v69, %v173
    %v175 = vpop.f32.mrb[0].mxu0
    %v176 = vadd.f32 %v69, %v175
    %v177 = vpop.f32.mrb[0].mxu0
    %v178 = vadd.f32 %v74, %v177
    %v179 = vpop.f32.mrb[0].mxu0
    %v180 = vadd.f32 %v74, %v179
    %181 = vmatprep.mubr.bf16.mxu0 0
    %182 = vmatmul.mubr.bf16.gmra.mrb[0].mxu0 %v137
    %v183 = vpop.f32.mrb[0].mxu0
    %v184 = vadd.f32 %v79, %v183
    %v185 = vpop.f32.mrb[0].mxu0
    %v186 = vadd.f32 %v79, %v185
    %v187 = vpop.f32.mrb[0].mxu0
    %v188 = vadd.f32 %v84, %v187
    %v189 = vpop.f32.mrb[0].mxu0
    %v190 = vadd.f32 %v84, %v189
    %191 = vdwg.mxu0
    %192 = vmatprep.subr.bf16.mxu0 %v121
    %193 = vmatpush1.bf16.msra.mxu0 %v120
    %194 = vmatprep.subr.bf16.mxu0 0
    %195 = vmatpush1.bf16.msra.mxu0 0
    %196 = vmatprep.subr.bf16.mxu0 0
    %197 = vmatpush1.bf16.msra.mxu0 0
    %198 = vmatprep.subr.bf16.mxu0 0
    %199 = vmatpush1.bf16.msra.mxu0 0
    %200 = vmatprep.subr.bf16.mxu0 0
    %201 = vmatpush1.bf16.msra.mxu0 0
    %202 = vmatprep.subr.bf16.mxu0 0
    %203 = vmatpush1.bf16.msra.mxu0 0
    %204 = vmatprep.subr.bf16.mxu0 0
    %205 = vmatpush1.bf16.msra.mxu0 0
    %206 = vmatprep.subr.bf16.mxu0 0
    %207 = vmatpush1.bf16.msra.mxu0 0
    %208 = vmatprep.subr.bf16.mxu0 0
    %209 = vmatpush1.bf16.msra.mxu0 0
    %210 = vmatprep.subr.bf16.mxu0 0
    %211 = vmatpush1.bf16.msra.mxu0 0
    %212 = vmatprep.subr.bf16.mxu0 0
    %213 = vmatpush1.bf16.msra.mxu0 0
    %214 = vmatprep.subr.bf16.mxu0 0
    %215 = vmatpush1.bf16.msra.mxu0 0
    %216 = vmatprep.subr.bf16.mxu0 0
    %217 = vmatpush1.bf16.msra.mxu0 0
    %218 = vmatprep.subr.bf16.mxu0 0
    %219 = vmatpush1.bf16.msra.mxu0 0
    %220 = vmatprep.subr.bf16.mxu0 0
    %221 = vmatpush1.bf16.msra.mxu0 0
    %222 = vmatprep.subr.bf16.mxu0 0
    %223 = vmatpush1.bf16.msra.mxu0 0
    %224 = vmatprep.mubr.bf16.mxu0 0
    %225 = vmatmul.mubr.bf16.gmra.mrb[0].mxu0 %v134
    %v226 = vpop.f32.mrb[0].mxu0
    %v227 = vadd.f32 %v69, %v226
    %v228 = vpop.f32.mrb[0].mxu0
    %v229 = vadd.f32 %v69, %v228
    %v230 = vpop.f32.mrb[0].mxu0
    %v231 = vadd.f32 %v74, %v230
    %v232 = vpop.f32.mrb[0].mxu0
    %v233 = vadd.f32 %v74, %v232
    %234 = vmatprep.mubr.bf16.mxu0 0
    %235 = vmatmul.mubr.bf16.gmra.mrb[0].mxu0 %v137
    %v236 = vpop.f32.mrb[0].mxu0
    %v237 = vadd.f32 %v79, %v236
    %v238 = vpop.f32.mrb[0].mxu0
    %v239 = vadd.f32 %v79, %v238
    %v240 = vpop.f32.mrb[0].mxu0
    %v241 = vadd.f32 %v84, %v240
    %v242 = vpop.f32.mrb[0].mxu0
    %v243 = vadd.f32 %v84, %v242
    %244 = vdwg.mxu0
    %245 = vmatprep.subr.bf16.mxu0 %v123
    %246 = vmatpush1.bf16.msra.mxu0 %v122
    %247 = vmatprep.subr.bf16.mxu0 0
    %248 = vmatpush1.bf16.msra.mxu0 0
    %249 = vmatprep.subr.bf16.mxu0 0
    %250 = vmatpush1.bf16.msra.mxu0 0
    %251 = vmatprep.subr.bf16.mxu0 0
    %252 = vmatpush1.bf16.msra.mxu0 0
    %253 = vmatprep.subr.bf16.mxu0 0
    %254 = vmatpush1.bf16.msra.mxu0 0
    %255 = vmatprep.subr.bf16.mxu0 0
    %256 = vmatpush1.bf16.msra.mxu0 0
    %257 = vmatprep.subr.bf16.mxu0 0
    %258 = vmatpush1.bf16.msra.mxu0 0
    %259 = vmatprep.subr.bf16.mxu0 0
    %260 = vmatpush1.bf16.msra.mxu0 0
    %261 = vmatprep.subr.bf16.mxu0 0
    %262 = vmatpush1.bf16.msra.mxu0 0
    %263 = vmatprep.subr.bf16.mxu0 0
    %264 = vmatpush1.bf16.msra.mxu0 0
    %265 = vmatprep.subr.bf16.mxu0 0
    %266 = vmatpush1.bf16.msra.mxu0 0
    %267 = vmatprep.subr.bf16.mxu0 0
    %268 = vmatpush1.bf16.msra.mxu0 0
    %269 = vmatprep.subr.bf16.mxu0 0
    %270 = vmatpush1.bf16.msra.mxu0 0
    %271 = vmatprep.subr.bf16.mxu0 0
    %272 = vmatpush1.bf16.msra.mxu0 0
    %273 = vmatprep.subr.bf16.mxu0 0
    %274 = vmatpush1.bf16.msra.mxu0 0
    %275 = vmatprep.subr.bf16.mxu0 0
    %276 = vmatpush1.bf16.msra.mxu0 0
    %277 = vmatprep.mubr.bf16.mxu0 0
    %278 = vmatmul.mubr.bf16.gmra.mrb[0].mxu0 %v134
    %v279 = vpop.f32.mrb[0].mxu0
    %v280 = vadd.f32 %v69, %v279
    %v281 = vpop.f32.mrb[0].mxu0
    %v282 = vadd.f32 %v69, %v281
    %v283 = vpop.f32.mrb[0].mxu0
    %v284 = vadd.f32 %v74, %v283
    %v285 = vpop.f32.mrb[0].mxu0
    %v286 = vadd.f32 %v74, %v285
    %287 = vmatprep.mubr.bf16.mxu0 0
    %288 = vmatmul.mubr.bf16.gmra.mrb[0].mxu0 %v137
    %v289 = vpop.f32.mrb[0].mxu0
    %v290 = vadd.f32 %v79, %v289
    %v291 = vpop.f32.mrb[0].mxu0
    %v292 = vadd.f32 %v79, %v291
    %v293 = vpop.f32.mrb[0].mxu0
    %v294 = vadd.f32 %v84, %v293
    %v295 = vpop.f32.mrb[0].mxu0
    %v296 = vadd.f32 %v84, %v295
    %297 = vdwg.mxu0
    %298 = vmatprep.subr.bf16.mxu0 0
    %299 = vmatpush1.bf16.msra.mxu0 %v124
    %300 = vmatprep.subr.bf16.mxu0 0
    %301 = vmatpush1.bf16.msra.mxu0 0
    %302 = vmatprep.subr.bf16.mxu0 0
    %303 = vmatpush1.bf16.msra.mxu0 0
    %304 = vmatprep.subr.bf16.mxu0 0
    %305 = vmatpush1.bf16.msra.mxu0 0
    %306 = vmatprep.subr.bf16.mxu0 0
    %307 = vmatpush1.bf16.msra.mxu0 0
    %308 = vmatprep.subr.bf16.mxu0 0
    %309 = vmatpush1.bf16.msra.mxu0 0
    %310 = vmatprep.subr.bf16.mxu0 0
    %311 = vmatpush1.bf16.msra.mxu0 0
    %312 = vmatprep.subr.bf16.mxu0 0
    %313 = vmatpush1.bf16.msra.mxu0 0
    %314 = vmatprep.subr.bf16.mxu0 0
    %315 = vmatpush1.bf16.msra.mxu0 0
    %316 = vmatprep.subr.bf16.mxu0 0
    %317 = vmatpush1.bf16.msra.mxu0 0
    %318 = vmatprep.subr.bf16.mxu0 0
    %319 = vmatpush1.bf16.msra.mxu0 0
    %320 = vmatprep.subr.bf16.mxu0 0
    %321 = vmatpush1.bf16.msra.mxu0 0
    %322 = vmatprep.subr.bf16.mxu0 0
    %323 = vmatpush1.bf16.msra.mxu0 0
    %324 = vmatprep.subr.bf16.mxu0 0
    %325 = vmatpush1.bf16.msra.mxu0 0
    %326 = vmatprep.subr.bf16.mxu0 0
    %327 = vmatpush1.bf16.msra.mxu0 0
    %328 = vmatprep.subr.bf16.mxu0 0
    %329 = vmatpush1.bf16.msra.mxu0 0
    %330 = vmatprep.mubr.bf16.mxu0 0
    %331 = vmatmul.mubr.bf16.gmra.mrb[0].mxu0 %v134
    %v332 = vpop.f32.mrb[0].mxu0
    %v333 = vadd.f32 %v69, %v332
    %v334 = vpop.f32.mrb[0].mxu0
    %v335 = vpop.f32.mrb[0].mxu0
    %v336 = vadd.f32 %v74, %v335
    %v337 = vpop.f32.mrb[0].mxu0
    %338 = vmatprep.mubr.bf16.mxu0 0
    %339 = vmatmul.mubr.bf16.gmra.mrb[0].mxu0 %v137
    %v340 = vpop.f32.mrb[0].mxu0
    %v341 = vadd.f32 %v79, %v340
    %v342 = vpop.f32.mrb[0].mxu0
    %v343 = vpop.f32.mrb[0].mxu0
    %v344 = vadd.f32 %v84, %v343
    %v345 = vpop.f32.mrb[0].mxu0
    %346 = vdwg.mxu0
    %v347 = vmax.f32 %v174, 0.0
    %v348 = vmax.f32 %v176, 0.0
    %v349 = vmax.f32 %v227, 0.0
    %v350 = vmax.f32 %v229, 0.0
    %v351 = vmax.f32 %v280, 0.0
    %v352 = vmax.f32 %v282, 0.0
    %v353 = vmax.f32 %v333, 0.0
    %v354 = vmax.f32 %v178, 0.0
    %v355 = vmax.f32 %v180, 0.0
    %v356 = vmax.f32 %v231, 0.0
    %v357 = vmax.f32 %v233, 0.0
    %v358 = vmax.f32 %v284, 0.0
    %v359 = vmax.f32 %v286, 0.0
    %v360 = vmax.f32 %v336, 0.0
    %v361 = vmax.f32 %v184, 0.0
    %v362 = vmax.f32 %v186, 0.0
    %v363 = vmax.f32 %v237, 0.0
    %v364 = vmax.f32 %v239, 0.0
    %v365 = vmax.f32 %v290, 0.0
    %v366 = vmax.f32 %v292, 0.0
    %v367 = vmax.f32 %v341, 0.0
    %v368 = vmax.f32 %v188, 0.0
    %v369 = vmax.f32 %v190, 0.0
    %v370 = vmax.f32 %v241, 0.0
    %v371 = vmax.f32 %v243, 0.0
    %v372 = vmax.f32 %v294, 0.0
    %v373 = vmax.f32 %v296, 0.0
    %v374 = vmax.f32 %v344, 0.0
    %v375 = vsel %vm51, %v347, 0.0
    %v376 = vsel %vm52, %v348, 0.0
    %v377 = vsel %vm53, %v349, 0.0
    %v378 = vsel %vm54, %v350, 0.0
    %v379 = vsel %vm55, %v351, 0.0
    %v380 = vsel %vm56, %v352, 0.0
    %v381 = vsel %vm57, %v353, 0.0
    %v382 = vsel %vm51, %v354, 0.0
    %v383 = vsel %vm52, %v355, 0.0
    %v384 = vsel %vm53, %v356, 0.0
    %v385 = vsel %vm54, %v357, 0.0
    %v386 = vsel %vm55, %v358, 0.0
    %v387 = vsel %vm56, %v359, 0.0
    %v388 = vsel %vm57, %v360, 0.0
    %v389 = vsel %vm51, %v361, 0.0
    %v390 = vsel %vm52, %v362, 0.0
    %v391 = vsel %vm53, %v363, 0.0
    %v392 = vsel %vm54, %v364, 0.0
    %v393 = vsel %vm55, %v365, 0.0
    %v394 = vsel %vm56, %v366, 0.0
    %v395 = vsel %vm57, %v367, 0.0
    %v396 = vsel %vm51, %v368, 0.0
    %v397 = vsel %vm52, %v369, 0.0
    %v398 = vsel %vm53, %v370, 0.0
    %v399 = vsel %vm54, %v371, 0.0
    %v400 = vsel %vm55, %v372, 0.0
    %v401 = vsel %vm56, %v373, 0.0
    %v402 = vsel %vm57, %v374, 0.0
    %v403 = vpack.c.bf16 %v382, %v375
    %v404 = vpack.c.bf16 %v383, %v376
    %v405 = vpack.c.bf16 %v384, %v377
    %v406 = vpack.c.bf16 %v385, %v378
    %v407 = vpack.c.bf16 %v386, %v379
    %v408 = vpack.c.bf16 %v387, %v380
    %v409 = vpack.c.bf16 %v388, %v381
    %v410 = vpack.c.bf16 %v396, %v389
    %v411 = vpack.c.bf16 %v397, %v390
    %v412 = vpack.c.bf16 %v398, %v391
    %v413 = vpack.c.bf16 %v399, %v392
    %v414 = vpack.c.bf16 %v400, %v393
    %v415 = vpack.c.bf16 %v401, %v394
    %v416 = vpack.c.bf16 %v402, %v395
    %v417 = vld [vmem:[%s3] sm:$0xff]
    %v418 = vld [vmem:[%s3 + $0x8] sm:$0xff]
    %v419 = vld [vmem:[%s3 + $0x10] sm:$0xff]
    %v420 = vld [vmem:[%s3 + $0x18] sm:$0xf]
    %v421 = vld [vmem:[%s3 + $0x1c] sm:$0xff]
    %v422 = vld [vmem:[%s3 + $0x24] sm:$0xff]
    %v423 = vld [vmem:[%s3 + $0x2c] sm:$0xff]
    %v424 = vld [vmem:[%s3 + $0x34] sm:$0xf]
    %v425 = vld [vmem:[%s3 + $0x38] sm:$0xff]
    %v426 = vld [vmem:[%s3 + $0x40] sm:$0xff]
    %v427 = vld [vmem:[%s3 + $0x48] sm:$0xff]
    %v428 = vld [vmem:[%s3 + $0x50] sm:$0xf]
    %v429 = vld [vmem:[%s3 + $0x54] sm:$0xff]
    %v430 = vld [vmem:[%s3 + $0x5c] sm:$0xff]
    %v431 = vld [vmem:[%s3 + $0x64] sm:$0xff]
    %v432 = vld [vmem:[%s3 + $0x6c] sm:$0xf]
    %v433 = vunpack.c.l.bf16 %v403
    %v434 = vunpack.c.l.bf16 %v404
    %v435 = vunpack.c.l.bf16 %v405
    %v436 = vunpack.c.l.bf16 %v406
    %v437 = vunpack.c.l.bf16 %v407
    %v438 = vunpack.c.l.bf16 %v408
    %v439 = vunpack.c.l.bf16 %v409
    %v440 = vunpack.c.h.bf16 %v403
    %v441 = vunpack.c.h.bf16 %v404
    %v442 = vunpack.c.h.bf16 %v405
    %v443 = vunpack.c.h.bf16 %v406
    %v444 = vunpack.c.h.bf16 %v407
    %v445 = vunpack.c.h.bf16 %v408
    %v446 = vunpack.c.h.bf16 %v409
    %v447 = vunpack.c.l.bf16 %v410
    %v448 = vunpack.c.l.bf16 %v411
    %v449 = vunpack.c.l.bf16 %v412
    %v450 = vunpack.c.l.bf16 %v413
    %v451 = vunpack.c.l.bf16 %v414
    %v452 = vunpack.c.l.bf16 %v415
    %v453 = vunpack.c.l.bf16 %v416
    %v454 = vunpack.c.h.bf16 %v410
    %v455 = vunpack.c.h.bf16 %v411
    %v456 = vunpack.c.h.bf16 %v412
    %v457 = vunpack.c.h.bf16 %v413
    %v458 = vunpack.c.h.bf16 %v414
    %v459 = vunpack.c.h.bf16 %v415
    %v460 = vunpack.c.h.bf16 %v416
    %v461 = vunpack.c.l.bf16 %v417
    %v462 = vunpack.c.h.bf16 %v417
    %v463 = vunpack.c.l.bf16 %v418
    %v464 = vunpack.c.h.bf16 %v418
    %v465 = vunpack.c.l.bf16 %v419
    %v466 = vunpack.c.h.bf16 %v419
    %v467 = vunpack.c.l.bf16 %v420
    %v468 = vunpack.c.l.bf16 %v421
    %v469 = vunpack.c.h.bf16 %v421
    %v470 = vunpack.c.l.bf16 %v422
    %v471 = vunpack.c.h.bf16 %v422
    %v472 = vunpack.c.l.bf16 %v423
    %v473 = vunpack.c.h.bf16 %v423
    %v474 = vunpack.c.l.bf16 %v424
    %v475 = vunpack.c.l.bf16 %v425
    %v476 = vunpack.c.h.bf16 %v425
    %v477 = vunpack.c.l.bf16 %v426
    %v478 = vunpack.c.h.bf16 %v426
    %v479 = vunpack.c.l.bf16 %v427
    %v480 = vunpack.c.h.bf16 %v427
    %v481 = vunpack.c.l.bf16 %v428
    %v482 = vunpack.c.l.bf16 %v429
    %v483 = vunpack.c.h.bf16 %v429
    %v484 = vunpack.c.l.bf16 %v430
    %v485 = vunpack.c.h.bf16 %v430
    %v486 = vunpack.c.l.bf16 %v431
    %v487 = vunpack.c.h.bf16 %v431
    %v488 = vunpack.c.l.bf16 %v432
    %v489 = vmul.f32 %v433, %v461
    %v490 = vmul.f32 %v434, %v462
    %v491 = vmul.f32 %v435, %v463
    %v492 = vmul.f32 %v436, %v464
    %v493 = vmul.f32 %v437, %v465
    %v494 = vmul.f32 %v438, %v466
    %v495 = vmul.f32 %v439, %v467
    %v496 = vmul.f32 %v440, %v468
    %v497 = vmul.f32 %v441, %v469
    %v498 = vmul.f32 %v442, %v470
    %v499 = vmul.f32 %v443, %v471
    %v500 = vmul.f32 %v444, %v472
    %v501 = vmul.f32 %v445, %v473
    %v502 = vmul.f32 %v446, %v474
    %v503 = vmul.f32 %v447, %v475
    %v504 = vmul.f32 %v448, %v476
    %v505 = vmul.f32 %v449, %v477
    %v506 = vmul.f32 %v450, %v478
    %v507 = vmul.f32 %v451, %v479
    %v508 = vmul.f32 %v452, %v480
    %v509 = vmul.f32 %v453, %v481
    %v510 = vmul.f32 %v454, %v482
    %v511 = vmul.f32 %v455, %v483
    %v512 = vmul.f32 %v456, %v484
    %v513 = vmul.f32 %v457, %v485
    %v514 = vmul.f32 %v458, %v486
    %v515 = vmul.f32 %v459, %v487
    %v516 = vmul.f32 %v460, %v488
    %v517 = vadd.f32 %v489, %v490
    %v518 = vadd.f32 %v517, %v491
    %v519 = vadd.f32 %v518, %v492
    %v520 = vadd.f32 %v519, %v493
    %v521 = vadd.f32 %v520, %v494
    %v522 = vadd.f32 %v521, %v495
    %v523 = vadd.f32 %v522, %v496
    %v524 = vadd.f32 %v523, %v497
    %v525 = vadd.f32 %v524, %v498
    %v526 = vadd.f32 %v525, %v499
    %v527 = vadd.f32 %v526, %v500
    %v528 = vadd.f32 %v527, %v501
    %v529 = vadd.f32 %v528, %v502
    %v530 = vadd.f32 %v529, %v503
    %v531 = vadd.f32 %v530, %v504
    %v532 = vadd.f32 %v531, %v505
    %v533 = vadd.f32 %v532, %v506
    %v534 = vadd.f32 %v533, %v507
    %v535 = vadd.f32 %v534, %v508
    %v536 = vadd.f32 %v535, %v509
    %v537 = vadd.f32 %v536, %v510
    %v538 = vadd.f32 %v537, %v511
    %v539 = vadd.f32 %v538, %v512
    %v540 = vadd.f32 %v539, %v513
    %v541 = vadd.f32 %v540, %v514
    %v542 = vadd.f32 %v541, %v515
    %v543 = vadd.f32 %v542, %v516
    %544 = vadd.xlane.f32.xlu0 %v543
    %v545 = vpop.xlane.xlu0 %544
    %v546 = vrot.slane %v545, 4
    %v547 = vadd.f32 %v545, %v546
    %v548 = vrot.slane %v547, 2
    %v549 = vadd.f32 %v547, %v548
    %v550 = vrot.slane %v549, 1
    %v551 = vadd.f32 %v549, %v550
    %s552 = vtos %v551
    %s553 = sld [smem:[#allocation2]]
    %s554 = sadd.f32 %s552, %s553
    %s555 = scalar_lea.smem [#allocation5], 0
    %556 = sst [smem:[%s555]] %s554
    %s557 = scalar_lea.vmem %s3, 112
    %v558 = vld [vmem:[%s557] sm:$0xff]
    %v559 = vld [vmem:[%s557 + $0x8] sm:$0xff]
    %v560 = vld [vmem:[%s557 + $0x10] sm:$0xff]
    %v561 = vld [vmem:[%s557 + $0x18] sm:$0xf]
    %v562 = vld [vmem:[%s557 + $0x1c] sm:$0xff]
    %v563 = vld [vmem:[%s557 + $0x24] sm:$0xff]
    %v564 = vld [vmem:[%s557 + $0x2c] sm:$0xff]
    %v565 = vld [vmem:[%s557 + $0x34] sm:$0xf]
    %v566 = vld [vmem:[%s557 + $0x38] sm:$0xff]
    %v567 = vld [vmem:[%s557 + $0x40] sm:$0xff]
    %v568 = vld [vmem:[%s557 + $0x48] sm:$0xff]
    %v569 = vld [vmem:[%s557 + $0x50] sm:$0xf]
    %v570 = vld [vmem:[%s557 + $0x54] sm:$0xff]
    %v571 = vld [vmem:[%s557 + $0x5c] sm:$0xff]
    %v572 = vld [vmem:[%s557 + $0x64] sm:$0xff]
    %v573 = vld [vmem:[%s557 + $0x6c] sm:$0xf]
    %v574 = vunpack.c.l.bf16 %v558
    %v575 = vunpack.c.h.bf16 %v558
    %v576 = vunpack.c.l.bf16 %v559
    %v577 = vunpack.c.h.bf16 %v559
    %v578 = vunpack.c.l.bf16 %v560
    %v579 = vunpack.c.h.bf16 %v560
    %v580 = vunpack.c.l.bf16 %v561
    %v581 = vunpack.c.l.bf16 %v562
    %v582 = vunpack.c.h.bf16 %v562
    %v583 = vunpack.c.l.bf16 %v563
    %v584 = vunpack.c.h.bf16 %v563
    %v585 = vunpack.c.l.bf16 %v564
    %v586 = vunpack.c.h.bf16 %v564
    %v587 = vunpack.c.l.bf16 %v565
    %v588 = vunpack.c.l.bf16 %v566
    %v589 = vunpack.c.h.bf16 %v566
    %v590 = vunpack.c.l.bf16 %v567
    %v591 = vunpack.c.h.bf16 %v567
    %v592 = vunpack.c.l.bf16 %v568
    %v593 = vunpack.c.h.bf16 %v568
    %v594 = vunpack.c.l.bf16 %v569
    %v595 = vunpack.c.l.bf16 %v570
    %v596 = vunpack.c.h.bf16 %v570
    %v597 = vunpack.c.l.bf16 %v571
    %v598 = vunpack.c.h.bf16 %v571
    %v599 = vunpack.c.l.bf16 %v572
    %v600 = vunpack.c.h.bf16 %v572
    %v601 = vunpack.c.l.bf16 %v573
    %v602 = vmul.f32 %v433, %v574
    %v603 = vmul.f32 %v434, %v575
    %v604 = vmul.f32 %v435, %v576
    %v605 = vmul.f32 %v436, %v577
    %v606 = vmul.f32 %v437, %v578
    %v607 = vmul.f32 %v438, %v579
    %v608 = vmul.f32 %v439, %v580
    %v609 = vmul.f32 %v440, %v581
    %v610 = vmul.f32 %v441, %v582
    %v611 = vmul.f32 %v442, %v583
    %v612 = vmul.f32 %v443, %v584
    %v613 = vmul.f32 %v444, %v585
    %v614 = vmul.f32 %v445, %v586
    %v615 = vmul.f32 %v446, %v587
    %v616 = vmul.f32 %v447, %v588
    %v617 = vmul.f32 %v448, %v589
    %v618 = vmul.f32 %v449, %v590
    %v619 = vmul.f32 %v450, %v591
    %v620 = vmul.f32 %v451, %v592
    %v621 = vmul.f32 %v452, %v593
    %v622 = vmul.f32 %v453, %v594
    %v623 = vmul.f32 %v454, %v595
    %v624 = vmul.f32 %v455, %v596
    %v625 = vmul.f32 %v456, %v597
    %v626 = vmul.f32 %v457, %v598
    %v627 = vmul.f32 %v458, %v599
    %v628 = vmul.f32 %v459, %v600
    %v629 = vmul.f32 %v460, %v601
    %v630 = vadd.f32 %v602, %v603
    %v631 = vadd.f32 %v630, %v604
    %v632 = vadd.f32 %v631, %v605
    %v633 = vadd.f32 %v632, %v606
    %v634 = vadd.f32 %v633, %v607
    %v635 = vadd.f32 %v634, %v608
    %v636 = vadd.f32 %v635, %v609
    %v637 = vadd.f32 %v636, %v610
    %v638 = vadd.f32 %v637, %v611
    %v639 = vadd.f32 %v638, %v612
    %v640 = vadd.f32 %v639, %v613
    %v641 = vadd.f32 %v640, %v614
    %v642 = vadd.f32 %v641, %v615
    %v643 = vadd.f32 %v642, %v616
    %v644 = vadd.f32 %v643, %v617
    %v645 = vadd.f32 %v644, %v618
    %v646 = vadd.f32 %v645, %v619
    %v647 = vadd.f32 %v646, %v620
    %v648 = vadd.f32 %v647, %v621
    %v649 = vadd.f32 %v648, %v622
    %v650 = vadd.f32 %v649, %v623
    %v651 = vadd.f32 %v650, %v624
    %v652 = vadd.f32 %v651, %v625
    %v653 = vadd.f32 %v652, %v626
    %v654 = vadd.f32 %v653, %v627
    %v655 = vadd.f32 %v654, %v628
    %v656 = vadd.f32 %v655, %v629
    %657 = vadd.xlane.f32.xlu0 %v656
    %v658 = vpop.xlane.xlu0 %657
    %v659 = vrot.slane %v658, 4
    %v660 = vadd.f32 %v658, %v659
    %v661 = vrot.slane %v660, 2
    %v662 = vadd.f32 %v660, %v661
    %v663 = vrot.slane %v662, 1
    %v664 = vadd.f32 %v662, %v663
    %s665 = vtos %v664
    %s666 = sld [smem:[#allocation2 + $0x1]]
    %s667 = sadd.f32 %s665, %s666
    %s668 = scalar_lea.smem [#allocation5], 1
    %669 = sst [smem:[%s668]] %s667
    %s670 = scalar_lea.vmem %s3, 224
    %v671 = vld [vmem:[%s670] sm:$0xff]
    %v672 = vld [vmem:[%s670 + $0x8] sm:$0xff]
    %v673 = vld [vmem:[%s670 + $0x10] sm:$0xff]
    %v674 = vld [vmem:[%s670 + $0x18] sm:$0xf]
    %v675 = vld [vmem:[%s670 + $0x1c] sm:$0xff]
    %v676 = vld [vmem:[%s670 + $0x24] sm:$0xff]
    %v677 = vld [vmem:[%s670 + $0x2c] sm:$0xff]
    %v678 = vld [vmem:[%s670 + $0x34] sm:$0xf]
    %v679 = vld [vmem:[%s670 + $0x38] sm:$0xff]
    %v680 = vld [vmem:[%s670 + $0x40] sm:$0xff]
    %v681 = vld [vmem:[%s670 + $0x48] sm:$0xff]
    %v682 = vld [vmem:[%s670 + $0x50] sm:$0xf]
    %v683 = vld [vmem:[%s670 + $0x54] sm:$0xff]
    %v684 = vld [vmem:[%s670 + $0x5c] sm:$0xff]
    %v685 = vld [vmem:[%s670 + $0x64] sm:$0xff]
    %v686 = vld [vmem:[%s670 + $0x6c] sm:$0xf]
    %v687 = vunpack.c.l.bf16 %v671
    %v688 = vunpack.c.h.bf16 %v671
    %v689 = vunpack.c.l.bf16 %v672
    %v690 = vunpack.c.h.bf16 %v672
    %v691 = vunpack.c.l.bf16 %v673
    %v692 = vunpack.c.h.bf16 %v673
    %v693 = vunpack.c.l.bf16 %v674
    %v694 = vunpack.c.l.bf16 %v675
    %v695 = vunpack.c.h.bf16 %v675
    %v696 = vunpack.c.l.bf16 %v676
    %v697 = vunpack.c.h.bf16 %v676
    %v698 = vunpack.c.l.bf16 %v677
    %v699 = vunpack.c.h.bf16 %v677
    %v700 = vunpack.c.l.bf16 %v678
    %v701 = vunpack.c.l.bf16 %v679
    %v702 = vunpack.c.h.bf16 %v679
    %v703 = vunpack.c.l.bf16 %v680
    %v704 = vunpack.c.h.bf16 %v680
    %v705 = vunpack.c.l.bf16 %v681
    %v706 = vunpack.c.h.bf16 %v681
    %v707 = vunpack.c.l.bf16 %v682
    %v708 = vunpack.c.l.bf16 %v683
    %v709 = vunpack.c.h.bf16 %v683
    %v710 = vunpack.c.l.bf16 %v684
    %v711 = vunpack.c.h.bf16 %v684
    %v712 = vunpack.c.l.bf16 %v685
    %v713 = vunpack.c.h.bf16 %v685
    %v714 = vunpack.c.l.bf16 %v686
    %v715 = vmul.f32 %v433, %v687
    %v716 = vmul.f32 %v434, %v688
    %v717 = vmul.f32 %v435, %v689
    %v718 = vmul.f32 %v436, %v690
    %v719 = vmul.f32 %v437, %v691
    %v720 = vmul.f32 %v438, %v692
    %v721 = vmul.f32 %v439, %v693
    %v722 = vmul.f32 %v440, %v694
    %v723 = vmul.f32 %v441, %v695
    %v724 = vmul.f32 %v442, %v696
    %v725 = vmul.f32 %v443, %v697
    %v726 = vmul.f32 %v444, %v698
    %v727 = vmul.f32 %v445, %v699
    %v728 = vmul.f32 %v446, %v700
    %v729 = vmul.f32 %v447, %v701
    %v730 = vmul.f32 %v448, %v702
    %v731 = vmul.f32 %v449, %v703
    %v732 = vmul.f32 %v450, %v704
    %v733 = vmul.f32 %v451, %v705
    %v734 = vmul.f32 %v452, %v706
    %v735 = vmul.f32 %v453, %v707
    %v736 = vmul.f32 %v454, %v708
    %v737 = vmul.f32 %v455, %v709
    %v738 = vmul.f32 %v456, %v710
    %v739 = vmul.f32 %v457, %v711
    %v740 = vmul.f32 %v458, %v712
    %v741 = vmul.f32 %v459, %v713
    %v742 = vmul.f32 %v460, %v714
    %v743 = vadd.f32 %v715, %v716
    %v744 = vadd.f32 %v743, %v717
    %v745 = vadd.f32 %v744, %v718
    %v746 = vadd.f32 %v745, %v719
    %v747 = vadd.f32 %v746, %v720
    %v748 = vadd.f32 %v747, %v721
    %v749 = vadd.f32 %v748, %v722
    %v750 = vadd.f32 %v749, %v723
    %v751 = vadd.f32 %v750, %v724
    %v752 = vadd.f32 %v751, %v725
    %v753 = vadd.f32 %v752, %v726
    %v754 = vadd.f32 %v753, %v727
    %v755 = vadd.f32 %v754, %v728
    %v756 = vadd.f32 %v755, %v729
    %v757 = vadd.f32 %v756, %v730
    %v758 = vadd.f32 %v757, %v731
    %v759 = vadd.f32 %v758, %v732
    %v760 = vadd.f32 %v759, %v733
    %v761 = vadd.f32 %v760, %v734
    %v762 = vadd.f32 %v761, %v735
    %v763 = vadd.f32 %v762, %v736
    %v764 = vadd.f32 %v763, %v737
    %v765 = vadd.f32 %v764, %v738
    %v766 = vadd.f32 %v765, %v739
    %v767 = vadd.f32 %v766, %v740
    %v768 = vadd.f32 %v767, %v741
    %v769 = vadd.f32 %v768, %v742
    %770 = vadd.xlane.f32.xlu0 %v769
    %v771 = vpop.xlane.xlu0 %770
    %v772 = vrot.slane %v771, 4
    %v773 = vadd.f32 %v771, %v772
    %v774 = vrot.slane %v773, 2
    %v775 = vadd.f32 %v773, %v774
    %v776 = vrot.slane %v775, 1
    %v777 = vadd.f32 %v775, %v776
    %s778 = vtos %v777
    %s779 = sld [smem:[#allocation2 + $0x2]]
    %s780 = sadd.f32 %s778, %s779
    %s781 = scalar_lea.smem [#allocation5], 2
    %782 = sst [smem:[%s781]] %s780
    %s783 = scalar_lea.vmem %s3, 336
    %v784 = vld [vmem:[%s783] sm:$0xff]
    %v785 = vld [vmem:[%s783 + $0x8] sm:$0xff]
    %v786 = vld [vmem:[%s783 + $0x10] sm:$0xff]
    %v787 = vld [vmem:[%s783 + $0x18] sm:$0xf]
    %v788 = vld [vmem:[%s783 + $0x1c] sm:$0xff]
    %v789 = vld [vmem:[%s783 + $0x24] sm:$0xff]
    %v790 = vld [vmem:[%s783 + $0x2c] sm:$0xff]
    %v791 = vld [vmem:[%s783 + $0x34] sm:$0xf]
    %v792 = vld [vmem:[%s783 + $0x38] sm:$0xff]
    %v793 = vld [vmem:[%s783 + $0x40] sm:$0xff]
    %v794 = vld [vmem:[%s783 + $0x48] sm:$0xff]
    %v795 = vld [vmem:[%s783 + $0x50] sm:$0xf]
    %v796 = vld [vmem:[%s783 + $0x54] sm:$0xff]
    %v797 = vld [vmem:[%s783 + $0x5c] sm:$0xff]
    %v798 = vld [vmem:[%s783 + $0x64] sm:$0xff]
    %v799 = vld [vmem:[%s783 + $0x6c] sm:$0xf]
    %v800 = vunpack.c.l.bf16 %v784
    %v801 = vunpack.c.h.bf16 %v784
    %v802 = vunpack.c.l.bf16 %v785
    %v803 = vunpack.c.h.bf16 %v785
    %v804 = vunpack.c.l.bf16 %v786
    %v805 = vunpack.c.h.bf16 %v786
    %v806 = vunpack.c.l.bf16 %v787
    %v807 = vunpack.c.l.bf16 %v788
    %v808 = vunpack.c.h.bf16 %v788
    %v809 = vunpack.c.l.bf16 %v789
    %v810 = vunpack.c.h.bf16 %v789
    %v811 = vunpack.c.l.bf16 %v790
    %v812 = vunpack.c.h.bf16 %v790
    %v813 = vunpack.c.l.bf16 %v791
    %v814 = vunpack.c.l.bf16 %v792
    %v815 = vunpack.c.h.bf16 %v792
    %v816 = vunpack.c.l.bf16 %v793
    %v817 = vunpack.c.h.bf16 %v793
    %v818 = vunpack.c.l.bf16 %v794
    %v819 = vunpack.c.h.bf16 %v794
    %v820 = vunpack.c.l.bf16 %v795
    %v821 = vunpack.c.l.bf16 %v796
    %v822 = vunpack.c.h.bf16 %v796
    %v823 = vunpack.c.l.bf16 %v797
    %v824 = vunpack.c.h.bf16 %v797
    %v825 = vunpack.c.l.bf16 %v798
    %v826 = vunpack.c.h.bf16 %v798
    %v827 = vunpack.c.l.bf16 %v799
    %v828 = vmul.f32 %v433, %v800
    %v829 = vmul.f32 %v434, %v801
    %v830 = vmul.f32 %v435, %v802
    %v831 = vmul.f32 %v436, %v803
    %v832 = vmul.f32 %v437, %v804
    %v833 = vmul.f32 %v438, %v805
    %v834 = vmul.f32 %v439, %v806
    %v835 = vmul.f32 %v440, %v807
    %v836 = vmul.f32 %v441, %v808
    %v837 = vmul.f32 %v442, %v809
    %v838 = vmul.f32 %v443, %v810
    %v839 = vmul.f32 %v444, %v811
    %v840 = vmul.f32 %v445, %v812
    %v841 = vmul.f32 %v446, %v813
    %v842 = vmul.f32 %v447, %v814
    %v843 = vmul.f32 %v448, %v815
    %v844 = vmul.f32 %v449, %v816
    %v845 = vmul.f32 %v450, %v817
    %v846 = vmul.f32 %v451, %v818
    %v847 = vmul.f32 %v452, %v819
    %v848 = vmul.f32 %v453, %v820
    %v849 = vmul.f32 %v454, %v821
    %v850 = vmul.f32 %v455, %v822
    %v851 = vmul.f32 %v456, %v823
    %v852 = vmul.f32 %v457, %v824
    %v853 = vmul.f32 %v458, %v825
    %v854 = vmul.f32 %v459, %v826
    %v855 = vmul.f32 %v460, %v827
    %v856 = vadd.f32 %v828, %v829
    %v857 = vadd.f32 %v856, %v830
    %v858 = vadd.f32 %v857, %v831
    %v859 = vadd.f32 %v858, %v832
    %v860 = vadd.f32 %v859, %v833
    %v861 = vadd.f32 %v860, %v834
    %v862 = vadd.f32 %v861, %v835
    %v863 = vadd.f32 %v862, %v836
    %v864 = vadd.f32 %v863, %v837
    %v865 = vadd.f32 %v864, %v838
    %v866 = vadd.f32 %v865, %v839
    %v867 = vadd.f32 %v866, %v840
    %v868 = vadd.f32 %v867, %v841
    %v869 = vadd.f32 %v868, %v842
    %v870 = vadd.f32 %v869, %v843
    %v871 = vadd.f32 %v870, %v844
    %v872 = vadd.f32 %v871, %v845
    %v873 = vadd.f32 %v872, %v846
    %v874 = vadd.f32 %v873, %v847
    %v875 = vadd.f32 %v874, %v848
    %v876 = vadd.f32 %v875, %v849
    %v877 = vadd.f32 %v876, %v850
    %v878 = vadd.f32 %v877, %v851
    %v879 = vadd.f32 %v878, %v852
    %v880 = vadd.f32 %v879, %v853
    %v881 = vadd.f32 %v880, %v854
    %v882 = vadd.f32 %v881, %v855
    %883 = vadd.xlane.f32.xlu0 %v882
    %v884 = vpop.xlane.xlu0 %883
    %v885 = vrot.slane %v884, 4
    %v886 = vadd.f32 %v884, %v885
    %v887 = vrot.slane %v886, 2
    %v888 = vadd.f32 %v886, %v887
    %v889 = vrot.slane %v888, 1
    %v890 = vadd.f32 %v888, %v889
    %s891 = vtos %v890
    %s892 = sld [smem:[#allocation2 + $0x3]]
    %s893 = sadd.f32 %s891, %s892
    %s894 = scalar_lea.smem [#allocation5], 3
    %895 = sst [smem:[%s894]] %s893
    %s896 = scalar_lea.vmem %s3, 448
    %v897 = vld [vmem:[%s896] sm:$0xff]
    %v898 = vld [vmem:[%s896 + $0x8] sm:$0xff]
    %v899 = vld [vmem:[%s896 + $0x10] sm:$0xff]
    %v900 = vld [vmem:[%s896 + $0x18] sm:$0xf]
    %v901 = vld [vmem:[%s896 + $0x1c] sm:$0xff]
    %v902 = vld [vmem:[%s896 + $0x24] sm:$0xff]
    %v903 = vld [vmem:[%s896 + $0x2c] sm:$0xff]
    %v904 = vld [vmem:[%s896 + $0x34] sm:$0xf]
    %v905 = vld [vmem:[%s896 + $0x38] sm:$0xff]
    %v906 = vld [vmem:[%s896 + $0x40] sm:$0xff]
    %v907 = vld [vmem:[%s896 + $0x48] sm:$0xff]
    %v908 = vld [vmem:[%s896 + $0x50] sm:$0xf]
    %v909 = vld [vmem:[%s896 + $0x54] sm:$0xff]
    %v910 = vld [vmem:[%s896 + $0x5c] sm:$0xff]
    %v911 = vld [vmem:[%s896 + $0x64] sm:$0xff]
    %v912 = vld [vmem:[%s896 + $0x6c] sm:$0xf]
    %v913 = vunpack.c.l.bf16 %v897
    %v914 = vunpack.c.h.bf16 %v897
    %v915 = vunpack.c.l.bf16 %v898
    %v916 = vunpack.c.h.bf16 %v898
    %v917 = vunpack.c.l.bf16 %v899
    %v918 = vunpack.c.h.bf16 %v899
    %v919 = vunpack.c.l.bf16 %v900
    %v920 = vunpack.c.l.bf16 %v901
    %v921 = vunpack.c.h.bf16 %v901
    %v922 = vunpack.c.l.bf16 %v902
    %v923 = vunpack.c.h.bf16 %v902
    %v924 = vunpack.c.l.bf16 %v903
    %v925 = vunpack.c.h.bf16 %v903
    %v926 = vunpack.c.l.bf16 %v904
    %v927 = vunpack.c.l.bf16 %v905
    %v928 = vunpack.c.h.bf16 %v905
    %v929 = vunpack.c.l.bf16 %v906
    %v930 = vunpack.c.h.bf16 %v906
    %v931 = vunpack.c.l.bf16 %v907
    %v932 = vunpack.c.h.bf16 %v907
    %v933 = vunpack.c.l.bf16 %v908
    %v934 = vunpack.c.l.bf16 %v909
    %v935 = vunpack.c.h.bf16 %v909
    %v936 = vunpack.c.l.bf16 %v910
    %v937 = vunpack.c.h.bf16 %v910
    %v938 = vunpack.c.l.bf16 %v911
    %v939 = vunpack.c.h.bf16 %v911
    %v940 = vunpack.c.l.bf16 %v912
    %v941 = vmul.f32 %v433, %v913
    %v942 = vmul.f32 %v434, %v914
    %v943 = vmul.f32 %v435, %v915
    %v944 = vmul.f32 %v436, %v916
    %v945 = vmul.f32 %v437, %v917
    %v946 = vmul.f32 %v438, %v918
    %v947 = vmul.f32 %v439, %v919
    %v948 = vmul.f32 %v440, %v920
    %v949 = vmul.f32 %v441, %v921
    %v950 = vmul.f32 %v442, %v922
    %v951 = vmul.f32 %v443, %v923
    %v952 = vmul.f32 %v444, %v924
    %v953 = vmul.f32 %v445, %v925
    %v954 = vmul.f32 %v446, %v926
    %v955 = vmul.f32 %v447, %v927
    %v956 = vmul.f32 %v448, %v928
    %v957 = vmul.f32 %v449, %v929
    %v958 = vmul.f32 %v450, %v930
    %v959 = vmul.f32 %v451, %v931
    %v960 = vmul.f32 %v452, %v932
    %v961 = vmul.f32 %v453, %v933
    %v962 = vmul.f32 %v454, %v934
    %v963 = vmul.f32 %v455, %v935
    %v964 = vmul.f32 %v456, %v936
    %v965 = vmul.f32 %v457, %v937
    %v966 = vmul.f32 %v458, %v938
    %v967 = vmul.f32 %v459, %v939
    %v968 = vmul.f32 %v460, %v940
    %v969 = vadd.f32 %v941, %v942
    %v970 = vadd.f32 %v969, %v943
    %v971 = vadd.f32 %v970, %v944
    %v972 = vadd.f32 %v971, %v945
    %v973 = vadd.f32 %v972, %v946
    %v974 = vadd.f32 %v973, %v947
    %v975 = vadd.f32 %v974, %v948
    %v976 = vadd.f32 %v975, %v949
    %v977 = vadd.f32 %v976, %v950
    %v978 = vadd.f32 %v977, %v951
    %v979 = vadd.f32 %v978, %v952
    %v980 = vadd.f32 %v979, %v953
    %v981 = vadd.f32 %v980, %v954
    %v982 = vadd.f32 %v981, %v955
    %v983 = vadd.f32 %v982, %v956
    %v984 = vadd.f32 %v983, %v957
    %v985 = vadd.f32 %v984, %v958
    %v986 = vadd.f32 %v985, %v959
    %v987 = vadd.f32 %v986, %v960
    %v988 = vadd.f32 %v987, %v961
    %v989 = vadd.f32 %v988, %v962
    %v990 = vadd.f32 %v989, %v963
    %v991 = vadd.f32 %v990, %v964
    %v992 = vadd.f32 %v991, %v965
    %v993 = vadd.f32 %v992, %v966
    %v994 = vadd.f32 %v993, %v967
    %v995 = vadd.f32 %v994, %v968
    %996 = vadd.xlane.f32.xlu0 %v995
    %v997 = vpop.xlane.xlu0 %996
    %v998 = vrot.slane %v997, 4
    %v999 = vadd.f32 %v997, %v998
    %v1000 = vrot.slane %v999, 2
    %v1001 = vadd.f32 %v999, %v1000
    %v1002 = vrot.slane %v1001, 1
    %v1003 = vadd.f32 %v1001, %v1002
    %s1004 = vtos %v1003
    %s1005 = sld [smem:[#allocation2 + $0x4]]
    %s1006 = sadd.f32 %s1004, %s1005
    %s1007 = scalar_lea.smem [#allocation5], 4
    %1008 = sst [smem:[%s1007]] %s1006
    %s1009 = scalar_lea.vmem %s3, 560
    %v1010 = vld [vmem:[%s1009] sm:$0xff]
    %v1011 = vld [vmem:[%s1009 + $0x8] sm:$0xff]
    %v1012 = vld [vmem:[%s1009 + $0x10] sm:$0xff]
    %v1013 = vld [vmem:[%s1009 + $0x18] sm:$0xf]
    %v1014 = vld [vmem:[%s1009 + $0x1c] sm:$0xff]
    %v1015 = vld [vmem:[%s1009 + $0x24] sm:$0xff]
    %v1016 = vld [vmem:[%s1009 + $0x2c] sm:$0xff]
    %v1017 = vld [vmem:[%s1009 + $0x34] sm:$0xf]
    %v1018 = vld [vmem:[%s1009 + $0x38] sm:$0xff]
    %v1019 = vld [vmem:[%s1009 + $0x40] sm:$0xff]
    %v1020 = vld [vmem:[%s1009 + $0x48] sm:$0xff]
    %v1021 = vld [vmem:[%s1009 + $0x50] sm:$0xf]
    %v1022 = vld [vmem:[%s1009 + $0x54] sm:$0xff]
    %v1023 = vld [vmem:[%s1009 + $0x5c] sm:$0xff]
    %v1024 = vld [vmem:[%s1009 + $0x64] sm:$0xff]
    %v1025 = vld [vmem:[%s1009 + $0x6c] sm:$0xf]
    %v1026 = vunpack.c.l.bf16 %v1010
    %v1027 = vunpack.c.h.bf16 %v1010
    %v1028 = vunpack.c.l.bf16 %v1011
    %v1029 = vunpack.c.h.bf16 %v1011
    %v1030 = vunpack.c.l.bf16 %v1012
    %v1031 = vunpack.c.h.bf16 %v1012
    %v1032 = vunpack.c.l.bf16 %v1013
    %v1033 = vunpack.c.l.bf16 %v1014
    %v1034 = vunpack.c.h.bf16 %v1014
    %v1035 = vunpack.c.l.bf16 %v1015
    %v1036 = vunpack.c.h.bf16 %v1015
    %v1037 = vunpack.c.l.bf16 %v1016
    %v1038 = vunpack.c.h.bf16 %v1016
    %v1039 = vunpack.c.l.bf16 %v1017
    %v1040 = vunpack.c.l.bf16 %v1018
    %v1041 = vunpack.c.h.bf16 %v1018
    %v1042 = vunpack.c.l.bf16 %v1019
    %v1043 = vunpack.c.h.bf16 %v1019
    %v1044 = vunpack.c.l.bf16 %v1020
    %v1045 = vunpack.c.h.bf16 %v1020
    %v1046 = vunpack.c.l.bf16 %v1021
    %v1047 = vunpack.c.l.bf16 %v1022
    %v1048 = vunpack.c.h.bf16 %v1022
    %v1049 = vunpack.c.l.bf16 %v1023
    %v1050 = vunpack.c.h.bf16 %v1023
    %v1051 = vunpack.c.l.bf16 %v1024
    %v1052 = vunpack.c.h.bf16 %v1024
    %v1053 = vunpack.c.l.bf16 %v1025
    %v1054 = vmul.f32 %v433, %v1026
    %v1055 = vmul.f32 %v434, %v1027
    %v1056 = vmul.f32 %v435, %v1028
    %v1057 = vmul.f32 %v436, %v1029
    %v1058 = vmul.f32 %v437, %v1030
    %v1059 = vmul.f32 %v438, %v1031
    %v1060 = vmul.f32 %v439, %v1032
    %v1061 = vmul.f32 %v440, %v1033
    %v1062 = vmul.f32 %v441, %v1034
    %v1063 = vmul.f32 %v442, %v1035
    %v1064 = vmul.f32 %v443, %v1036
    %v1065 = vmul.f32 %v444, %v1037
    %v1066 = vmul.f32 %v445, %v1038
    %v1067 = vmul.f32 %v446, %v1039
    %v1068 = vmul.f32 %v447, %v1040
    %v1069 = vmul.f32 %v448, %v1041
    %v1070 = vmul.f32 %v449, %v1042
    %v1071 = vmul.f32 %v450, %v1043
    %v1072 = vmul.f32 %v451, %v1044
    %v1073 = vmul.f32 %v452, %v1045
    %v1074 = vmul.f32 %v453, %v1046
    %v1075 = vmul.f32 %v454, %v1047
    %v1076 = vmul.f32 %v455, %v1048
    %v1077 = vmul.f32 %v456, %v1049
    %v1078 = vmul.f32 %v457, %v1050
    %v1079 = vmul.f32 %v458, %v1051
    %v1080 = vmul.f32 %v459, %v1052
    %v1081 = vmul.f32 %v460, %v1053
    %v1082 = vadd.f32 %v1054, %v1055
    %v1083 = vadd.f32 %v1082, %v1056
    %v1084 = vadd.f32 %v1083, %v1057
    %v1085 = vadd.f32 %v1084, %v1058
    %v1086 = vadd.f32 %v1085, %v1059
    %v1087 = vadd.f32 %v1086, %v1060
    %v1088 = vadd.f32 %v1087, %v1061
    %v1089 = vadd.f32 %v1088, %v1062
    %v1090 = vadd.f32 %v1089, %v1063
    %v1091 = vadd.f32 %v1090, %v1064
    %v1092 = vadd.f32 %v1091, %v1065
    %v1093 = vadd.f32 %v1092, %v1066
    %v1094 = vadd.f32 %v1093, %v1067
    %v1095 = vadd.f32 %v1094, %v1068
    %v1096 = vadd.f32 %v1095, %v1069
    %v1097 = vadd.f32 %v1096, %v1070
    %v1098 = vadd.f32 %v1097, %v1071
    %v1099 = vadd.f32 %v1098, %v1072
    %v1100 = vadd.f32 %v1099, %v1073
    %v1101 = vadd.f32 %v1100, %v1074
    %v1102 = vadd.f32 %v1101, %v1075
    %v1103 = vadd.f32 %v1102, %v1076
    %v1104 = vadd.f32 %v1103, %v1077
    %v1105 = vadd.f32 %v1104, %v1078
    %v1106 = vadd.f32 %v1105, %v1079
    %v1107 = vadd.f32 %v1106, %v1080
    %v1108 = vadd.f32 %v1107, %v1081
    %1109 = vadd.xlane.f32.xlu0 %v1108
    %v1110 = vpop.xlane.xlu0 %1109
    %v1111 = vrot.slane %v1110, 4
    %v1112 = vadd.f32 %v1110, %v1111
    %v1113 = vrot.slane %v1112, 2
    %v1114 = vadd.f32 %v1112, %v1113
    %v1115 = vrot.slane %v1114, 1
    %v1116 = vadd.f32 %v1114, %v1115
    %s1117 = vtos %v1116
    %s1118 = sld [smem:[#allocation2 + $0x5]]
    %s1119 = sadd.f32 %s1117, %s1118
    %s1120 = scalar_lea.smem [#allocation5], 5
    %1121 = sst [smem:[%s1120]] %s1119
    %s1122 = scalar_lea.vmem %s3, 672
    %v1123 = vld [vmem:[%s1122] sm:$0xff]
    %v1124 = vld [vmem:[%s1122 + $0x8] sm:$0xff]
    %v1125 = vld [vmem:[%s1122 + $0x10] sm:$0xff]
    %v1126 = vld [vmem:[%s1122 + $0x18] sm:$0xf]
    %v1127 = vld [vmem:[%s1122 + $0x1c] sm:$0xff]
    %v1128 = vld [vmem:[%s1122 + $0x24] sm:$0xff]
    %v1129 = vld [vmem:[%s1122 + $0x2c] sm:$0xff]
    %v1130 = vld [vmem:[%s1122 + $0x34] sm:$0xf]
    %v1131 = vld [vmem:[%s1122 + $0x38] sm:$0xff]
    %v1132 = vld [vmem:[%s1122 + $0x40] sm:$0xff]
    %v1133 = vld [vmem:[%s1122 + $0x48] sm:$0xff]
    %v1134 = vld [vmem:[%s1122 + $0x50] sm:$0xf]
    %v1135 = vld [vmem:[%s1122 + $0x54] sm:$0xff]
    %v1136 = vld [vmem:[%s1122 + $0x5c] sm:$0xff]
    %v1137 = vld [vmem:[%s1122 + $0x64] sm:$0xff]
    %v1138 = vld [vmem:[%s1122 + $0x6c] sm:$0xf]
    %v1139 = vunpack.c.l.bf16 %v1123
    %v1140 = vunpack.c.h.bf16 %v1123
    %v1141 = vunpack.c.l.bf16 %v1124
    %v1142 = vunpack.c.h.bf16 %v1124
    %v1143 = vunpack.c.l.bf16 %v1125
    %v1144 = vunpack.c.h.bf16 %v1125
    %v1145 = vunpack.c.l.bf16 %v1126
    %v1146 = vunpack.c.l.bf16 %v1127
    %v1147 = vunpack.c.h.bf16 %v1127
    %v1148 = vunpack.c.l.bf16 %v1128
    %v1149 = vunpack.c.h.bf16 %v1128
    %v1150 = vunpack.c.l.bf16 %v1129
    %v1151 = vunpack.c.h.bf16 %v1129
    %v1152 = vunpack.c.l.bf16 %v1130
    %v1153 = vunpack.c.l.bf16 %v1131
    %v1154 = vunpack.c.h.bf16 %v1131
    %v1155 = vunpack.c.l.bf16 %v1132
    %v1156 = vunpack.c.h.bf16 %v1132
    %v1157 = vunpack.c.l.bf16 %v1133
    %v1158 = vunpack.c.h.bf16 %v1133
    %v1159 = vunpack.c.l.bf16 %v1134
    %v1160 = vunpack.c.l.bf16 %v1135
    %v1161 = vunpack.c.h.bf16 %v1135
    %v1162 = vunpack.c.l.bf16 %v1136
    %v1163 = vunpack.c.h.bf16 %v1136
    %v1164 = vunpack.c.l.bf16 %v1137
    %v1165 = vunpack.c.h.bf16 %v1137
    %v1166 = vunpack.c.l.bf16 %v1138
    %v1167 = vmul.f32 %v433, %v1139
    %v1168 = vmul.f32 %v434, %v1140
    %v1169 = vmul.f32 %v435, %v1141
    %v1170 = vmul.f32 %v436, %v1142
    %v1171 = vmul.f32 %v437, %v1143
    %v1172 = vmul.f32 %v438, %v1144
    %v1173 = vmul.f32 %v439, %v1145
    %v1174 = vmul.f32 %v440, %v1146
    %v1175 = vmul.f32 %v441, %v1147
    %v1176 = vmul.f32 %v442, %v1148
    %v1177 = vmul.f32 %v443, %v1149
    %v1178 = vmul.f32 %v444, %v1150
    %v1179 = vmul.f32 %v445, %v1151
    %v1180 = vmul.f32 %v446, %v1152
    %v1181 = vmul.f32 %v447, %v1153
    %v1182 = vmul.f32 %v448, %v1154
    %v1183 = vmul.f32 %v449, %v1155
    %v1184 = vmul.f32 %v450, %v1156
    %v1185 = vmul.f32 %v451, %v1157
    %v1186 = vmul.f32 %v452, %v1158
    %v1187 = vmul.f32 %v453, %v1159
    %v1188 = vmul.f32 %v454, %v1160
    %v1189 = vmul.f32 %v455, %v1161
    %v1190 = vmul.f32 %v456, %v1162
    %v1191 = vmul.f32 %v457, %v1163
    %v1192 = vmul.f32 %v458, %v1164
    %v1193 = vmul.f32 %v459, %v1165
    %v1194 = vmul.f32 %v460, %v1166
    %v1195 = vadd.f32 %v1167, %v1168
    %v1196 = vadd.f32 %v1195, %v1169
    %v1197 = vadd.f32 %v1196, %v1170
    %v1198 = vadd.f32 %v1197, %v1171
    %v1199 = vadd.f32 %v1198, %v1172
    %v1200 = vadd.f32 %v1199, %v1173
    %v1201 = vadd.f32 %v1200, %v1174
    %v1202 = vadd.f32 %v1201, %v1175
    %v1203 = vadd.f32 %v1202, %v1176
    %v1204 = vadd.f32 %v1203, %v1177
    %v1205 = vadd.f32 %v1204, %v1178
    %v1206 = vadd.f32 %v1205, %v1179
    %v1207 = vadd.f32 %v1206, %v1180
    %v1208 = vadd.f32 %v1207, %v1181
    %v1209 = vadd.f32 %v1208, %v1182
    %v1210 = vadd.f32 %v1209, %v1183
    %v1211 = vadd.f32 %v1210, %v1184
    %v1212 = vadd.f32 %v1211, %v1185
    %v1213 = vadd.f32 %v1212, %v1186
    %v1214 = vadd.f32 %v1213, %v1187
    %v1215 = vadd.f32 %v1214, %v1188
    %v1216 = vadd.f32 %v1215, %v1189
    %v1217 = vadd.f32 %v1216, %v1190
    %v1218 = vadd.f32 %v1217, %v1191
    %v1219 = vadd.f32 %v1218, %v1192
    %v1220 = vadd.f32 %v1219, %v1193
    %v1221 = vadd.f32 %v1220, %v1194
    %1222 = vadd.xlane.f32.xlu0 %v1221
    %v1223 = vpop.xlane.xlu0 %1222
    %v1224 = vrot.slane %v1223, 4
    %v1225 = vadd.f32 %v1223, %v1224
    %v1226 = vrot.slane %v1225, 2
    %v1227 = vadd.f32 %v1225, %v1226
    %v1228 = vrot.slane %v1227, 1
    %v1229 = vadd.f32 %v1227, %v1228
    %s1230 = vtos %v1229
    %s1231 = sld [smem:[#allocation2 + $0x6]]
    %s1232 = sadd.f32 %s1230, %s1231
    %s1233 = scalar_lea.smem [#allocation5], 6
    %1234 = sst [smem:[%s1233]] %s1232
    %s1235 = scalar_lea.vmem %s3, 784
    %v1236 = vld [vmem:[%s1235] sm:$0xff]
    %v1237 = vld [vmem:[%s1235 + $0x8] sm:$0xff]
    %v1238 = vld [vmem:[%s1235 + $0x10] sm:$0xff]
    %v1239 = vld [vmem:[%s1235 + $0x18] sm:$0xf]
    %v1240 = vld [vmem:[%s1235 + $0x1c] sm:$0xff]
    %v1241 = vld [vmem:[%s1235 + $0x24] sm:$0xff]
    %v1242 = vld [vmem:[%s1235 + $0x2c] sm:$0xff]
    %v1243 = vld [vmem:[%s1235 + $0x34] sm:$0xf]
    %v1244 = vld [vmem:[%s1235 + $0x38] sm:$0xff]
    %v1245 = vld [vmem:[%s1235 + $0x40] sm:$0xff]
    %v1246 = vld [vmem:[%s1235 + $0x48] sm:$0xff]
    %v1247 = vld [vmem:[%s1235 + $0x50] sm:$0xf]
    %v1248 = vld [vmem:[%s1235 + $0x54] sm:$0xff]
    %v1249 = vld [vmem:[%s1235 + $0x5c] sm:$0xff]
    %v1250 = vld [vmem:[%s1235 + $0x64] sm:$0xff]
    %v1251 = vld [vmem:[%s1235 + $0x6c] sm:$0xf]
    %v1252 = vunpack.c.l.bf16 %v1236
    %v1253 = vunpack.c.h.bf16 %v1236
    %v1254 = vunpack.c.l.bf16 %v1237
    %v1255 = vunpack.c.h.bf16 %v1237
    %v1256 = vunpack.c.l.bf16 %v1238
    %v1257 = vunpack.c.h.bf16 %v1238
    %v1258 = vunpack.c.l.bf16 %v1239
    %v1259 = vunpack.c.l.bf16 %v1240
    %v1260 = vunpack.c.h.bf16 %v1240
    %v1261 = vunpack.c.l.bf16 %v1241
    %v1262 = vunpack.c.h.bf16 %v1241
    %v1263 = vunpack.c.l.bf16 %v1242
    %v1264 = vunpack.c.h.bf16 %v1242
    %v1265 = vunpack.c.l.bf16 %v1243
    %v1266 = vunpack.c.l.bf16 %v1244
    %v1267 = vunpack.c.h.bf16 %v1244
    %v1268 = vunpack.c.l.bf16 %v1245
    %v1269 = vunpack.c.h.bf16 %v1245
    %v1270 = vunpack.c.l.bf16 %v1246
    %v1271 = vunpack.c.h.bf16 %v1246
    %v1272 = vunpack.c.l.bf16 %v1247
    %v1273 = vunpack.c.l.bf16 %v1248
    %v1274 = vunpack.c.h.bf16 %v1248
    %v1275 = vunpack.c.l.bf16 %v1249
    %v1276 = vunpack.c.h.bf16 %v1249
    %v1277 = vunpack.c.l.bf16 %v1250
    %v1278 = vunpack.c.h.bf16 %v1250
    %v1279 = vunpack.c.l.bf16 %v1251
    %v1280 = vmul.f32 %v433, %v1252
    %v1281 = vmul.f32 %v434, %v1253
    %v1282 = vmul.f32 %v435, %v1254
    %v1283 = vmul.f32 %v436, %v1255
    %v1284 = vmul.f32 %v437, %v1256
    %v1285 = vmul.f32 %v438, %v1257
    %v1286 = vmul.f32 %v439, %v1258
    %v1287 = vmul.f32 %v440, %v1259
    %v1288 = vmul.f32 %v441, %v1260
    %v1289 = vmul.f32 %v442, %v1261
    %v1290 = vmul.f32 %v443, %v1262
    %v1291 = vmul.f32 %v444, %v1263
    %v1292 = vmul.f32 %v445, %v1264
    %v1293 = vmul.f32 %v446, %v1265
    %v1294 = vmul.f32 %v447, %v1266
    %v1295 = vmul.f32 %v448, %v1267
    %v1296 = vmul.f32 %v449, %v1268
    %v1297 = vmul.f32 %v450, %v1269
    %v1298 = vmul.f32 %v451, %v1270
    %v1299 = vmul.f32 %v452, %v1271
    %v1300 = vmul.f32 %v453, %v1272
    %v1301 = vmul.f32 %v454, %v1273
    %v1302 = vmul.f32 %v455, %v1274
    %v1303 = vmul.f32 %v456, %v1275
    %v1304 = vmul.f32 %v457, %v1276
    %v1305 = vmul.f32 %v458, %v1277
    %v1306 = vmul.f32 %v459, %v1278
    %v1307 = vmul.f32 %v460, %v1279
    %v1308 = vadd.f32 %v1280, %v1281
    %v1309 = vadd.f32 %v1308, %v1282
    %v1310 = vadd.f32 %v1309, %v1283
    %v1311 = vadd.f32 %v1310, %v1284
    %v1312 = vadd.f32 %v1311, %v1285
    %v1313 = vadd.f32 %v1312, %v1286
    %v1314 = vadd.f32 %v1313, %v1287
    %v1315 = vadd.f32 %v1314, %v1288
    %v1316 = vadd.f32 %v1315, %v1289
    %v1317 = vadd.f32 %v1316, %v1290
    %v1318 = vadd.f32 %v1317, %v1291
    %v1319 = vadd.f32 %v1318, %v1292
    %v1320 = vadd.f32 %v1319, %v1293
    %v1321 = vadd.f32 %v1320, %v1294
    %v1322 = vadd.f32 %v1321, %v1295
    %v1323 = vadd.f32 %v1322, %v1296
    %v1324 = vadd.f32 %v1323, %v1297
    %v1325 = vadd.f32 %v1324, %v1298
    %v1326 = vadd.f32 %v1325, %v1299
    %v1327 = vadd.f32 %v1326, %v1300
    %v1328 = vadd.f32 %v1327, %v1301
    %v1329 = vadd.f32 %v1328, %v1302
    %v1330 = vadd.f32 %v1329, %v1303
    %v1331 = vadd.f32 %v1330, %v1304
    %v1332 = vadd.f32 %v1331, %v1305
    %v1333 = vadd.f32 %v1332, %v1306
    %v1334 = vadd.f32 %v1333, %v1307
    %1335 = vadd.xlane.f32.xlu0 %v1334
    %v1336 = vpop.xlane.xlu0 %1335
    %v1337 = vrot.slane %v1336, 4
    %v1338 = vadd.f32 %v1336, %v1337
    %v1339 = vrot.slane %v1338, 2
    %v1340 = vadd.f32 %v1338, %v1339
    %v1341 = vrot.slane %v1340, 1
    %v1342 = vadd.f32 %v1340, %v1341
    %s1343 = vtos %v1342
    %s1344 = sld [smem:[#allocation2 + $0x7]]
    %s1345 = sadd.f32 %s1343, %s1344
    %s1346 = scalar_lea.smem [#allocation5], 7
    %1347 = sst [smem:[%s1346]] %s1345
    %s1348 = scalar_lea.vmem %s3, 896
    %v1349 = vld [vmem:[%s1348] sm:$0xff]
    %v1350 = vld [vmem:[%s1348 + $0x8] sm:$0xff]
    %v1351 = vld [vmem:[%s1348 + $0x10] sm:$0xff]
    %v1352 = vld [vmem:[%s1348 + $0x18] sm:$0xf]
    %v1353 = vld [vmem:[%s1348 + $0x1c] sm:$0xff]
    %v1354 = vld [vmem:[%s1348 + $0x24] sm:$0xff]
    %v1355 = vld [vmem:[%s1348 + $0x2c] sm:$0xff]
    %v1356 = vld [vmem:[%s1348 + $0x34] sm:$0xf]
    %v1357 = vld [vmem:[%s1348 + $0x38] sm:$0xff]
    %v1358 = vld [vmem:[%s1348 + $0x40] sm:$0xff]
    %v1359 = vld [vmem:[%s1348 + $0x48] sm:$0xff]
    %v1360 = vld [vmem:[%s1348 + $0x50] sm:$0xf]
    %v1361 = vld [vmem:[%s1348 + $0x54] sm:$0xff]
    %v1362 = vld [vmem:[%s1348 + $0x5c] sm:$0xff]
    %v1363 = vld [vmem:[%s1348 + $0x64] sm:$0xff]
    %v1364 = vld [vmem:[%s1348 + $0x6c] sm:$0xf]
    %v1365 = vunpack.c.l.bf16 %v1349
    %v1366 = vunpack.c.h.bf16 %v1349
    %v1367 = vunpack.c.l.bf16 %v1350
    %v1368 = vunpack.c.h.bf16 %v1350
    %v1369 = vunpack.c.l.bf16 %v1351
    %v1370 = vunpack.c.h.bf16 %v1351
    %v1371 = vunpack.c.l.bf16 %v1352
    %v1372 = vunpack.c.l.bf16 %v1353
    %v1373 = vunpack.c.h.bf16 %v1353
    %v1374 = vunpack.c.l.bf16 %v1354
    %v1375 = vunpack.c.h.bf16 %v1354
    %v1376 = vunpack.c.l.bf16 %v1355
    %v1377 = vunpack.c.h.bf16 %v1355
    %v1378 = vunpack.c.l.bf16 %v1356
    %v1379 = vunpack.c.l.bf16 %v1357
    %v1380 = vunpack.c.h.bf16 %v1357
    %v1381 = vunpack.c.l.bf16 %v1358
    %v1382 = vunpack.c.h.bf16 %v1358
    %v1383 = vunpack.c.l.bf16 %v1359
    %v1384 = vunpack.c.h.bf16 %v1359
    %v1385 = vunpack.c.l.bf16 %v1360
    %v1386 = vunpack.c.l.bf16 %v1361
    %v1387 = vunpack.c.h.bf16 %v1361
    %v1388 = vunpack.c.l.bf16 %v1362
    %v1389 = vunpack.c.h.bf16 %v1362
    %v1390 = vunpack.c.l.bf16 %v1363
    %v1391 = vunpack.c.h.bf16 %v1363
    %v1392 = vunpack.c.l.bf16 %v1364
    %v1393 = vmul.f32 %v433, %v1365
    %v1394 = vmul.f32 %v434, %v1366
    %v1395 = vmul.f32 %v435, %v1367
    %v1396 = vmul.f32 %v436, %v1368
    %v1397 = vmul.f32 %v437, %v1369
    %v1398 = vmul.f32 %v438, %v1370
    %v1399 = vmul.f32 %v439, %v1371
    %v1400 = vmul.f32 %v440, %v1372
    %v1401 = vmul.f32 %v441, %v1373
    %v1402 = vmul.f32 %v442, %v1374
    %v1403 = vmul.f32 %v443, %v1375
    %v1404 = vmul.f32 %v444, %v1376
    %v1405 = vmul.f32 %v445, %v1377
    %v1406 = vmul.f32 %v446, %v1378
    %v1407 = vmul.f32 %v447, %v1379
    %v1408 = vmul.f32 %v448, %v1380
    %v1409 = vmul.f32 %v449, %v1381
    %v1410 = vmul.f32 %v450, %v1382
    %v1411 = vmul.f32 %v451, %v1383
    %v1412 = vmul.f32 %v452, %v1384
    %v1413 = vmul.f32 %v453, %v1385
    %v1414 = vmul.f32 %v454, %v1386
    %v1415 = vmul.f32 %v455, %v1387
    %v1416 = vmul.f32 %v456, %v1388
    %v1417 = vmul.f32 %v457, %v1389
    %v1418 = vmul.f32 %v458, %v1390
    %v1419 = vmul.f32 %v459, %v1391
    %v1420 = vmul.f32 %v460, %v1392
    %v1421 = vadd.f32 %v1393, %v1394
    %v1422 = vadd.f32 %v1421, %v1395
    %v1423 = vadd.f32 %v1422, %v1396
    %v1424 = vadd.f32 %v1423, %v1397
    %v1425 = vadd.f32 %v1424, %v1398
    %v1426 = vadd.f32 %v1425, %v1399
    %v1427 = vadd.f32 %v1426, %v1400
    %v1428 = vadd.f32 %v1427, %v1401
    %v1429 = vadd.f32 %v1428, %v1402
    %v1430 = vadd.f32 %v1429, %v1403
    %v1431 = vadd.f32 %v1430, %v1404
    %v1432 = vadd.f32 %v1431, %v1405
    %v1433 = vadd.f32 %v1432, %v1406
    %v1434 = vadd.f32 %v1433, %v1407
    %v1435 = vadd.f32 %v1434, %v1408
    %v1436 = vadd.f32 %v1435, %v1409
    %v1437 = vadd.f32 %v1436, %v1410
    %v1438 = vadd.f32 %v1437, %v1411
    %v1439 = vadd.f32 %v1438, %v1412
    %v1440 = vadd.f32 %v1439, %v1413
    %v1441 = vadd.f32 %v1440, %v1414
    %v1442 = vadd.f32 %v1441, %v1415
    %v1443 = vadd.f32 %v1442, %v1416
    %v1444 = vadd.f32 %v1443, %v1417
    %v1445 = vadd.f32 %v1444, %v1418
    %v1446 = vadd.f32 %v1445, %v1419
    %v1447 = vadd.f32 %v1446, %v1420
    %1448 = vadd.xlane.f32.xlu0 %v1447
    %v1449 = vpop.xlane.xlu0 %1448
    %v1450 = vrot.slane %v1449, 4
    %v1451 = vadd.f32 %v1449, %v1450
    %v1452 = vrot.slane %v1451, 2
    %v1453 = vadd.f32 %v1451, %v1452
    %v1454 = vrot.slane %v1453, 1
    %v1455 = vadd.f32 %v1453, %v1454
    %s1456 = vtos %v1455
    %s1457 = sld [smem:[#allocation2 + $0x8]]
    %s1458 = sadd.f32 %s1456, %s1457
    %s1459 = scalar_lea.smem [#allocation5], 8
    %1460 = sst [smem:[%s1459]] %s1458
    %s1461 = scalar_lea.vmem %s3, 1008
    %v1462 = vld [vmem:[%s1461] sm:$0xff]
    %v1463 = vld [vmem:[%s1461 + $0x8] sm:$0xff]
    %v1464 = vld [vmem:[%s1461 + $0x10] sm:$0xff]
    %v1465 = vld [vmem:[%s1461 + $0x18] sm:$0xf]
    %v1466 = vld [vmem:[%s1461 + $0x1c] sm:$0xff]
    %v1467 = vld [vmem:[%s1461 + $0x24] sm:$0xff]
    %v1468 = vld [vmem:[%s1461 + $0x2c] sm:$0xff]
    %v1469 = vld [vmem:[%s1461 + $0x34] sm:$0xf]
    %v1470 = vld [vmem:[%s1461 + $0x38] sm:$0xff]
    %v1471 = vld [vmem:[%s1461 + $0x40] sm:$0xff]
    %v1472 = vld [vmem:[%s1461 + $0x48] sm:$0xff]
    %v1473 = vld [vmem:[%s1461 + $0x50] sm:$0xf]
    %v1474 = vld [vmem:[%s1461 + $0x54] sm:$0xff]
    %v1475 = vld [vmem:[%s1461 + $0x5c] sm:$0xff]
    %v1476 = vld [vmem:[%s1461 + $0x64] sm:$0xff]
    %v1477 = vld [vmem:[%s1461 + $0x6c] sm:$0xf]
    %v1478 = vunpack.c.l.bf16 %v1462
    %v1479 = vunpack.c.h.bf16 %v1462
    %v1480 = vunpack.c.l.bf16 %v1463
    %v1481 = vunpack.c.h.bf16 %v1463
    %v1482 = vunpack.c.l.bf16 %v1464
    %v1483 = vunpack.c.h.bf16 %v1464
    %v1484 = vunpack.c.l.bf16 %v1465
    %v1485 = vunpack.c.l.bf16 %v1466
    %v1486 = vunpack.c.h.bf16 %v1466
    %v1487 = vunpack.c.l.bf16 %v1467
    %v1488 = vunpack.c.h.bf16 %v1467
    %v1489 = vunpack.c.l.bf16 %v1468
    %v1490 = vunpack.c.h.bf16 %v1468
    %v1491 = vunpack.c.l.bf16 %v1469
    %v1492 = vunpack.c.l.bf16 %v1470
    %v1493 = vunpack.c.h.bf16 %v1470
    %v1494 = vunpack.c.l.bf16 %v1471
    %v1495 = vunpack.c.h.bf16 %v1471
    %v1496 = vunpack.c.l.bf16 %v1472
    %v1497 = vunpack.c.h.bf16 %v1472
    %v1498 = vunpack.c.l.bf16 %v1473
    %v1499 = vunpack.c.l.bf16 %v1474
    %v1500 = vunpack.c.h.bf16 %v1474
    %v1501 = vunpack.c.l.bf16 %v1475
    %v1502 = vunpack.c.h.bf16 %v1475
    %v1503 = vunpack.c.l.bf16 %v1476
    %v1504 = vunpack.c.h.bf16 %v1476
    %v1505 = vunpack.c.l.bf16 %v1477
    %v1506 = vmul.f32 %v433, %v1478
    %v1507 = vmul.f32 %v434, %v1479
    %v1508 = vmul.f32 %v435, %v1480
    %v1509 = vmul.f32 %v436, %v1481
    %v1510 = vmul.f32 %v437, %v1482
    %v1511 = vmul.f32 %v438, %v1483
    %v1512 = vmul.f32 %v439, %v1484
    %v1513 = vmul.f32 %v440, %v1485
    %v1514 = vmul.f32 %v441, %v1486
    %v1515 = vmul.f32 %v442, %v1487
    %v1516 = vmul.f32 %v443, %v1488
    %v1517 = vmul.f32 %v444, %v1489
    %v1518 = vmul.f32 %v445, %v1490
    %v1519 = vmul.f32 %v446, %v1491
    %v1520 = vmul.f32 %v447, %v1492
    %v1521 = vmul.f32 %v448, %v1493
    %v1522 = vmul.f32 %v449, %v1494
    %v1523 = vmul.f32 %v450, %v1495
    %v1524 = vmul.f32 %v451, %v1496
    %v1525 = vmul.f32 %v452, %v1497
    %v1526 = vmul.f32 %v453, %v1498
    %v1527 = vmul.f32 %v454, %v1499
    %v1528 = vmul.f32 %v455, %v1500
    %v1529 = vmul.f32 %v456, %v1501
    %v1530 = vmul.f32 %v457, %v1502
    %v1531 = vmul.f32 %v458, %v1503
    %v1532 = vmul.f32 %v459, %v1504
    %v1533 = vmul.f32 %v460, %v1505
    %v1534 = vadd.f32 %v1506, %v1507
    %v1535 = vadd.f32 %v1534, %v1508
    %v1536 = vadd.f32 %v1535, %v1509
    %v1537 = vadd.f32 %v1536, %v1510
    %v1538 = vadd.f32 %v1537, %v1511
    %v1539 = vadd.f32 %v1538, %v1512
    %v1540 = vadd.f32 %v1539, %v1513
    %v1541 = vadd.f32 %v1540, %v1514
    %v1542 = vadd.f32 %v1541, %v1515
    %v1543 = vadd.f32 %v1542, %v1516
    %v1544 = vadd.f32 %v1543, %v1517
    %v1545 = vadd.f32 %v1544, %v1518
    %v1546 = vadd.f32 %v1545, %v1519
    %v1547 = vadd.f32 %v1546, %v1520
    %v1548 = vadd.f32 %v1547, %v1521
    %v1549 = vadd.f32 %v1548, %v1522
    %v1550 = vadd.f32 %v1549, %v1523
    %v1551 = vadd.f32 %v1550, %v1524
    %v1552 = vadd.f32 %v1551, %v1525
    %v1553 = vadd.f32 %v1552, %v1526
    %v1554 = vadd.f32 %v1553, %v1527
    %v1555 = vadd.f32 %v1554, %v1528
    %v1556 = vadd.f32 %v1555, %v1529
    %v1557 = vadd.f32 %v1556, %v1530
    %v1558 = vadd.f32 %v1557, %v1531
    %v1559 = vadd.f32 %v1558, %v1532
    %v1560 = vadd.f32 %v1559, %v1533
    %1561 = vadd.xlane.f32.xlu0 %v1560
    %v1562 = vpop.xlane.xlu0 %1561
    %v1563 = vrot.slane %v1562, 4
    %v1564 = vadd.f32 %v1562, %v1563
    %v1565 = vrot.slane %v1564, 2
    %v1566 = vadd.f32 %v1564, %v1565
    %v1567 = vrot.slane %v1566, 1
    %v1568 = vadd.f32 %v1566, %v1567
    %s1569 = vtos %v1568
    %s1570 = sld [smem:[#allocation2 + $0x9]]
    %s1571 = sadd.f32 %s1569, %s1570
    %s1572 = scalar_lea.smem [#allocation5], 9
    %1573 = sst [smem:[%s1572]] %s1571
    %s1574 = scalar_lea.vmem %s0, 56
    %v1575 = vld [vmem:[%s1574] sm:$0xff]
    %v1576 = vld [vmem:[%s1574 + $0x8] sm:$0xff]
    %v1577 = vld [vmem:[%s1574 + $0x10] sm:$0xff]
    %v1578 = vld [vmem:[%s1574 + $0x18] sm:$0xf]
    %v1579 = vld [vmem:[%s1574 + $0x1c] sm:$0xff]
    %v1580 = vld [vmem:[%s1574 + $0x24] sm:$0xff]
    %v1581 = vld [vmem:[%s1574 + $0x2c] sm:$0xff]
    %v1582 = vld [vmem:[%s1574 + $0x34] sm:$0xf]
    %v1591 = vunpack.c.l.b16 %v1575
    %v1592 = vunpack.c.h.b16 %v1575
    %v1593 = vunpack.c.l.b16 %v1576
    %v1594 = vunpack.c.h.b16 %v1576
    %v1595 = vunpack.c.l.b16 %v1577
    %v1596 = vunpack.c.h.b16 %v1577
    %v1597 = vunpack.c.l.b16 %v1578
    %v1598 = vunpack.c.l.b16 %v1579
    %v1599 = vunpack.c.h.b16 %v1579
    %v1600 = vunpack.c.l.b16 %v1580
    %v1601 = vunpack.c.h.b16 %v1580
    %v1602 = vunpack.c.l.b16 %v1581
    %v1603 = vunpack.c.h.b16 %v1581
    %v1604 = vunpack.c.l.b16 %v1582
    %v1605 = vpack.c.b16 %v1598, %v1591
    %v1606 = vpack.c.b16 %v1599, %v1592
    %v1607 = vpack.c.b16 %v1600, %v1593
    %v1608 = vpack.c.b16 %v1601, %v1594
    %v1609 = vpack.c.b16 %v1602, %v1595
    %v1610 = vpack.c.b16 %v1603, %v1596
    %v1611 = vpack.c.b16 %v1604, %v1597
    %1619 = vmatprep.subr.bf16.mxu0 %v1606
    %1620 = vmatpush1.bf16.msra.mxu0 %v1605
    %1621 = vmatprep.subr.bf16.mxu0 0
    %1622 = vmatpush1.bf16.msra.mxu0 0
    %1623 = vmatprep.subr.bf16.mxu0 0
    %1624 = vmatpush1.bf16.msra.mxu0 0
    %1625 = vmatprep.subr.bf16.mxu0 0
    %1626 = vmatpush1.bf16.msra.mxu0 0
    %1627 = vmatprep.subr.bf16.mxu0 0
    %1628 = vmatpush1.bf16.msra.mxu0 0
    %1629 = vmatprep.subr.bf16.mxu0 0
    %1630 = vmatpush1.bf16.msra.mxu0 0
    %1631 = vmatprep.subr.bf16.mxu0 0
    %1632 = vmatpush1.bf16.msra.mxu0 0
    %1633 = vmatprep.subr.bf16.mxu0 0
    %1634 = vmatpush1.bf16.msra.mxu0 0
    %1635 = vmatprep.subr.bf16.mxu0 0
    %1636 = vmatpush1.bf16.msra.mxu0 0
    %1637 = vmatprep.subr.bf16.mxu0 0
    %1638 = vmatpush1.bf16.msra.mxu0 0
    %1639 = vmatprep.subr.bf16.mxu0 0
    %1640 = vmatpush1.bf16.msra.mxu0 0
    %1641 = vmatprep.subr.bf16.mxu0 0
    %1642 = vmatpush1.bf16.msra.mxu0 0
    %1643 = vmatprep.subr.bf16.mxu0 0
    %1644 = vmatpush1.bf16.msra.mxu0 0
    %1645 = vmatprep.subr.bf16.mxu0 0
    %1646 = vmatpush1.bf16.msra.mxu0 0
    %1647 = vmatprep.subr.bf16.mxu0 0
    %1648 = vmatpush1.bf16.msra.mxu0 0
    %1649 = vmatprep.subr.bf16.mxu0 0
    %1650 = vmatpush1.bf16.msra.mxu0 0
    %1651 = vmatprep.mubr.bf16.mxu0 0
    %1652 = vmatmul.mubr.bf16.gmra.mrb[0].mxu0 %v134
    %v1653 = vpop.f32.mrb[0].mxu0
    %v1654 = vadd.f32 %v69, %v1653
    %v1655 = vpop.f32.mrb[0].mxu0
    %v1656 = vadd.f32 %v69, %v1655
    %v1657 = vpop.f32.mrb[0].mxu0
    %v1658 = vadd.f32 %v74, %v1657
    %v1659 = vpop.f32.mrb[0].mxu0
    %v1660 = vadd.f32 %v74, %v1659
    %1661 = vmatprep.mubr.bf16.mxu0 0
    %1662 = vmatmul.mubr.bf16.gmra.mrb[0].mxu0 %v137
    %v1663 = vpop.f32.mrb[0].mxu0
    %v1664 = vadd.f32 %v79, %v1663
    %v1665 = vpop.f32.mrb[0].mxu0
    %v1666 = vadd.f32 %v79, %v1665
    %v1667 = vpop.f32.mrb[0].mxu0
    %v1668 = vadd.f32 %v84, %v1667
    %v1669 = vpop.f32.mrb[0].mxu0
    %v1670 = vadd.f32 %v84, %v1669
    %1671 = vdwg.mxu0
    %1672 = vmatprep.subr.bf16.mxu0 %v1608
    %1673 = vmatpush1.bf16.msra.mxu0 %v1607
    %1674 = vmatprep.subr.bf16.mxu0 0
    %1675 = vmatpush1.bf16.msra.mxu0 0
    %1676 = vmatprep.subr.bf16.mxu0 0
    %1677 = vmatpush1.bf16.msra.mxu0 0
    %1678 = vmatprep.subr.bf16.mxu0 0
    %1679 = vmatpush1.bf16.msra.mxu0 0
    %1680 = vmatprep.subr.bf16.mxu0 0
    %1681 = vmatpush1.bf16.msra.mxu0 0
    %1682 = vmatprep.subr.bf16.mxu0 0
    %1683 = vmatpush1.bf16.msra.mxu0 0
    %1684 = vmatprep.subr.bf16.mxu0 0
    %1685 = vmatpush1.bf16.msra.mxu0 0
    %1686 = vmatprep.subr.bf16.mxu0 0
    %1687 = vmatpush1.bf16.msra.mxu0 0
    %1688 = vmatprep.subr.bf16.mxu0 0
    %1689 = vmatpush1.bf16.msra.mxu0 0
    %1690 = vmatprep.subr.bf16.mxu0 0
    %1691 = vmatpush1.bf16.msra.mxu0 0
    %1692 = vmatprep.subr.bf16.mxu0 0
    %1693 = vmatpush1.bf16.msra.mxu0 0
    %1694 = vmatprep.subr.bf16.mxu0 0
    %1695 = vmatpush1.bf16.msra.mxu0 0
    %1696 = vmatprep.subr.bf16.mxu0 0
    %1697 = vmatpush1.bf16.msra.mxu0 0
    %1698 = vmatprep.subr.bf16.mxu0 0
    %1699 = vmatpush1.bf16.msra.mxu0 0
    %1700 = vmatprep.subr.bf16.mxu0 0
    %1701 = vmatpush1.bf16.msra.mxu0 0
    %1702 = vmatprep.subr.bf16.mxu0 0
    %1703 = vmatpush1.bf16.msra.mxu0 0
    %1704 = vmatprep.mubr.bf16.mxu0 0
    %1705 = vmatmul.mubr.bf16.gmra.mrb[0].mxu0 %v134
    %v1706 = vpop.f32.mrb[0].mxu0
    %v1707 = vadd.f32 %v69, %v1706
    %v1708 = vpop.f32.mrb[0].mxu0
    %v1709 = vadd.f32 %v69, %v1708
    %v1710 = vpop.f32.mrb[0].mxu0
    %v1711 = vadd.f32 %v74, %v1710
    %v1712 = vpop.f32.mrb[0].mxu0
    %v1713 = vadd.f32 %v74, %v1712
    %1714 = vmatprep.mubr.bf16.mxu0 0
    %1715 = vmatmul.mubr.bf16.gmra.mrb[0].mxu0 %v137
    %v1716 = vpop.f32.mrb[0].mxu0
    %v1717 = vadd.f32 %v79, %v1716
    %v1718 = vpop.f32.mrb[0].mxu0
    %v1719 = vadd.f32 %v79, %v1718
    %v1720 = vpop.f32.mrb[0].mxu0
    %v1721 = vadd.f32 %v84, %v1720
    %v1722 = vpop.f32.mrb[0].mxu0
    %v1723 = vadd.f32 %v84, %v1722
    %1724 = vdwg.mxu0
    %1725 = vmatprep.subr.bf16.mxu0 %v1610
    %1726 = vmatpush1.bf16.msra.mxu0 %v1609
    %1727 = vmatprep.subr.bf16.mxu0 0
    %1728 = vmatpush1.bf16.msra.mxu0 0
    %1729 = vmatprep.subr.bf16.mxu0 0
    %1730 = vmatpush1.bf16.msra.mxu0 0
    %1731 = vmatprep.subr.bf16.mxu0 0
    %1732 = vmatpush1.bf16.msra.mxu0 0
    %1733 = vmatprep.subr.bf16.mxu0 0
    %1734 = vmatpush1.bf16.msra.mxu0 0
    %1735 = vmatprep.subr.bf16.mxu0 0
    %1736 = vmatpush1.bf16.msra.mxu0 0
    %1737 = vmatprep.subr.bf16.mxu0 0
    %1738 = vmatpush1.bf16.msra.mxu0 0
    %1739 = vmatprep.subr.bf16.mxu0 0
    %1740 = vmatpush1.bf16.msra.mxu0 0
    %1741 = vmatprep.subr.bf16.mxu0 0
    %1742 = vmatpush1.bf16.msra.mxu0 0
    %1743 = vmatprep.subr.bf16.mxu0 0
    %1744 = vmatpush1.bf16.msra.mxu0 0
    %1745 = vmatprep.subr.bf16.mxu0 0
    %1746 = vmatpush1.bf16.msra.mxu0 0
    %1747 = vmatprep.subr.bf16.mxu0 0
    %1748 = vmatpush1.bf16.msra.mxu0 0
    %1749 = vmatprep.subr.bf16.mxu0 0
    %1750 = vmatpush1.bf16.msra.mxu0 0
    %1751 = vmatprep.subr.bf16.mxu0 0
    %1752 = vmatpush1.bf16.msra.mxu0 0
    %1753 = vmatprep.subr.bf16.mxu0 0
    %1754 = vmatpush1.bf16.msra.mxu0 0
    %1755 = vmatprep.subr.bf16.mxu0 0
    %1756 = vmatpush1.bf16.msra.mxu0 0
    %1757 = vmatprep.mubr.bf16.mxu0 0
    %1758 = vmatmul.mubr.bf16.gmra.mrb[0].mxu0 %v134
    %v1759 = vpop.f32.mrb[0].mxu0
    %v1760 = vadd.f32 %v69, %v1759
    %v1761 = vpop.f32.mrb[0].mxu0
    %v1762 = vadd.f32 %v69, %v1761
    %v1763 = vpop.f32.mrb[0].mxu0
    %v1764 = vadd.f32 %v74, %v1763
    %v1765 = vpop.f32.mrb[0].mxu0
    %v1766 = vadd.f32 %v74, %v1765
    %1767 = vmatprep.mubr.bf16.mxu0 0
    %1768 = vmatmul.mubr.bf16.gmra.mrb[0].mxu0 %v137
    %v1769 = vpop.f32.mrb[0].mxu0
    %v1770 = vadd.f32 %v79, %v1769
    %v1771 = vpop.f32.mrb[0].mxu0
    %v1772 = vadd.f32 %v79, %v1771
    %v1773 = vpop.f32.mrb[0].mxu0
    %v1774 = vadd.f32 %v84, %v1773
    %v1775 = vpop.f32.mrb[0].mxu0
    %v1776 = vadd.f32 %v84, %v1775
    %1777 = vdwg.mxu0
    %1778 = vmatprep.subr.bf16.mxu0 0
    %1779 = vmatpush1.bf16.msra.mxu0 %v1611
    %1780 = vmatprep.subr.bf16.mxu0 0
    %1781 = vmatpush1.bf16.msra.mxu0 0
    %1782 = vmatprep.subr.bf16.mxu0 0
    %1783 = vmatpush1.bf16.msra.mxu0 0
    %1784 = vmatprep.subr.bf16.mxu0 0
    %1785 = vmatpush1.bf16.msra.mxu0 0
    %1786 = vmatprep.subr.bf16.mxu0 0
    %1787 = vmatpush1.bf16.msra.mxu0 0
    %1788 = vmatprep.subr.bf16.mxu0 0
    %1789 = vmatpush1.bf16.msra.mxu0 0
    %1790 = vmatprep.subr.bf16.mxu0 0
    %1791 = vmatpush1.bf16.msra.mxu0 0
    %1792 = vmatprep.subr.bf16.mxu0 0
    %1793 = vmatpush1.bf16.msra.mxu0 0
    %1794 = vmatprep.subr.bf16.mxu0 0
    %1795 = vmatpush1.bf16.msra.mxu0 0
    %1796 = vmatprep.subr.bf16.mxu0 0
    %1797 = vmatpush1.bf16.msra.mxu0 0
    %1798 = vmatprep.subr.bf16.mxu0 0
    %1799 = vmatpush1.bf16.msra.mxu0 0
    %1800 = vmatprep.subr.bf16.mxu0 0
    %1801 = vmatpush1.bf16.msra.mxu0 0
    %1802 = vmatprep.subr.bf16.mxu0 0
    %1803 = vmatpush1.bf16.msra.mxu0 0
    %1804 = vmatprep.subr.bf16.mxu0 0
    %1805 = vmatpush1.bf16.msra.mxu0 0
    %1806 = vmatprep.subr.bf16.mxu0 0
    %1807 = vmatpush1.bf16.msra.mxu0 0
    %1808 = vmatprep.subr.bf16.mxu0 0
    %1809 = vmatpush1.bf16.msra.mxu0 0
    %1810 = vmatprep.mubr.bf16.mxu0 0
    %1811 = vmatmul.mubr.bf16.gmra.mrb[0].mxu0 %v134
    %v1812 = vpop.f32.mrb[0].mxu0
    %v1813 = vadd.f32 %v69, %v1812
    %v1814 = vpop.f32.mrb[0].mxu0
    %v1815 = vpop.f32.mrb[0].mxu0
    %v1816 = vadd.f32 %v74, %v1815
    %v1817 = vpop.f32.mrb[0].mxu0
    %1818 = vmatprep.mubr.bf16.mxu0 0
    %1819 = vmatmul.mubr.bf16.gmra.mrb[0].mxu0 %v137
    %v1820 = vpop.f32.mrb[0].mxu0
    %v1821 = vadd.f32 %v79, %v1820
    %v1822 = vpop.f32.mrb[0].mxu0
    %v1823 = vpop.f32.mrb[0].mxu0
    %v1824 = vadd.f32 %v84, %v1823
    %v1825 = vpop.f32.mrb[0].mxu0
    %1826 = vdwg.mxu0
    %v1827 = vmax.f32 %v1654, 0.0
    %v1828 = vmax.f32 %v1656, 0.0
    %v1829 = vmax.f32 %v1707, 0.0
    %v1830 = vmax.f32 %v1709, 0.0
    %v1831 = vmax.f32 %v1760, 0.0
    %v1832 = vmax.f32 %v1762, 0.0
    %v1833 = vmax.f32 %v1813, 0.0
    %v1834 = vmax.f32 %v1658, 0.0
    %v1835 = vmax.f32 %v1660, 0.0
    %v1836 = vmax.f32 %v1711, 0.0
    %v1837 = vmax.f32 %v1713, 0.0
    %v1838 = vmax.f32 %v1764, 0.0
    %v1839 = vmax.f32 %v1766, 0.0
    %v1840 = vmax.f32 %v1816, 0.0
    %v1841 = vmax.f32 %v1664, 0.0
    %v1842 = vmax.f32 %v1666, 0.0
    %v1843 = vmax.f32 %v1717, 0.0
    %v1844 = vmax.f32 %v1719, 0.0
    %v1845 = vmax.f32 %v1770, 0.0
    %v1846 = vmax.f32 %v1772, 0.0
    %v1847 = vmax.f32 %v1821, 0.0
    %v1848 = vmax.f32 %v1668, 0.0
    %v1849 = vmax.f32 %v1670, 0.0
    %v1850 = vmax.f32 %v1721, 0.0
    %v1851 = vmax.f32 %v1723, 0.0
    %v1852 = vmax.f32 %v1774, 0.0
    %v1853 = vmax.f32 %v1776, 0.0
    %v1854 = vmax.f32 %v1824, 0.0
    %v1855 = vsel %vm51, %v1827, 0.0
    %v1856 = vsel %vm52, %v1828, 0.0
    %v1857 = vsel %vm53, %v1829, 0.0
    %v1858 = vsel %vm54, %v1830, 0.0
    %v1859 = vsel %vm55, %v1831, 0.0
    %v1860 = vsel %vm56, %v1832, 0.0
    %v1861 = vsel %vm57, %v1833, 0.0
    %v1862 = vsel %vm51, %v1834, 0.0
    %v1863 = vsel %vm52, %v1835, 0.0
    %v1864 = vsel %vm53, %v1836, 0.0
    %v1865 = vsel %vm54, %v1837, 0.0
    %v1866 = vsel %vm55, %v1838, 0.0
    %v1867 = vsel %vm56, %v1839, 0.0
    %v1868 = vsel %vm57, %v1840, 0.0
    %v1869 = vsel %vm51, %v1841, 0.0
    %v1870 = vsel %vm52, %v1842, 0.0
    %v1871 = vsel %vm53, %v1843, 0.0
    %v1872 = vsel %vm54, %v1844, 0.0
    %v1873 = vsel %vm55, %v1845, 0.0
    %v1874 = vsel %vm56, %v1846, 0.0
    %v1875 = vsel %vm57, %v1847, 0.0
    %v1876 = vsel %vm51, %v1848, 0.0
    %v1877 = vsel %vm52, %v1849, 0.0
    %v1878 = vsel %vm53, %v1850, 0.0
    %v1879 = vsel %vm54, %v1851, 0.0
    %v1880 = vsel %vm55, %v1852, 0.0
    %v1881 = vsel %vm56, %v1853, 0.0
    %v1882 = vsel %vm57, %v1854, 0.0
    %v1883 = vpack.c.bf16 %v1862, %v1855
    %v1884 = vpack.c.bf16 %v1863, %v1856
    %v1885 = vpack.c.bf16 %v1864, %v1857
    %v1886 = vpack.c.bf16 %v1865, %v1858
    %v1887 = vpack.c.bf16 %v1866, %v1859
    %v1888 = vpack.c.bf16 %v1867, %v1860
    %v1889 = vpack.c.bf16 %v1868, %v1861
    %v1890 = vpack.c.bf16 %v1876, %v1869
    %v1891 = vpack.c.bf16 %v1877, %v1870
    %v1892 = vpack.c.bf16 %v1878, %v1871
    %v1893 = vpack.c.bf16 %v1879, %v1872
    %v1894 = vpack.c.bf16 %v1880, %v1873
    %v1895 = vpack.c.bf16 %v1881, %v1874
    %v1896 = vpack.c.bf16 %v1882, %v1875
    %v1897 = vld [vmem:[%s3] sm:$0xff]
    %v1898 = vld [vmem:[%s3 + $0x8] sm:$0xff]
    %v1899 = vld [vmem:[%s3 + $0x10] sm:$0xff]
    %v1900 = vld [vmem:[%s3 + $0x18] sm:$0xf]
    %v1901 = vld [vmem:[%s3 + $0x1c] sm:$0xff]
    %v1902 = vld [vmem:[%s3 + $0x24] sm:$0xff]
    %v1903 = vld [vmem:[%s3 + $0x2c] sm:$0xff]
    %v1904 = vld [vmem:[%s3 + $0x34] sm:$0xf]
    %v1905 = vld [vmem:[%s3 + $0x38] sm:$0xff]
    %v1906 = vld [vmem:[%s3 + $0x40] sm:$0xff]
    %v1907 = vld [vmem:[%s3 + $0x48] sm:$0xff]
    %v1908 = vld [vmem:[%s3 + $0x50] sm:$0xf]
    %v1909 = vld [vmem:[%s3 + $0x54] sm:$0xff]
    %v1910 = vld [vmem:[%s3 + $0x5c] sm:$0xff]
    %v1911 = vld [vmem:[%s3 + $0x64] sm:$0xff]
    %v1912 = vld [vmem:[%s3 + $0x6c] sm:$0xf]
    %v1913 = vunpack.c.l.bf16 %v1883
    %v1914 = vunpack.c.l.bf16 %v1884
    %v1915 = vunpack.c.l.bf16 %v1885
    %v1916 = vunpack.c.l.bf16 %v1886
    %v1917 = vunpack.c.l.bf16 %v1887
    %v1918 = vunpack.c.l.bf16 %v1888
    %v1919 = vunpack.c.l.bf16 %v1889
    %v1920 = vunpack.c.h.bf16 %v1883
    %v1921 = vunpack.c.h.bf16 %v1884
    %v1922 = vunpack.c.h.bf16 %v1885
    %v1923 = vunpack.c.h.bf16 %v1886
    %v1924 = vunpack.c.h.bf16 %v1887
    %v1925 = vunpack.c.h.bf16 %v1888
    %v1926 = vunpack.c.h.bf16 %v1889
    %v1927 = vunpack.c.l.bf16 %v1890
    %v1928 = vunpack.c.l.bf16 %v1891
    %v1929 = vunpack.c.l.bf16 %v1892
    %v1930 = vunpack.c.l.bf16 %v1893
    %v1931 = vunpack.c.l.bf16 %v1894
    %v1932 = vunpack.c.l.bf16 %v1895
    %v1933 = vunpack.c.l.bf16 %v1896
    %v1934 = vunpack.c.h.bf16 %v1890
    %v1935 = vunpack.c.h.bf16 %v1891
    %v1936 = vunpack.c.h.bf16 %v1892
    %v1937 = vunpack.c.h.bf16 %v1893
    %v1938 = vunpack.c.h.bf16 %v1894
    %v1939 = vunpack.c.h.bf16 %v1895
    %v1940 = vunpack.c.h.bf16 %v1896
    %v1941 = vunpack.c.l.bf16 %v1897
    %v1942 = vunpack.c.h.bf16 %v1897
    %v1943 = vunpack.c.l.bf16 %v1898
    %v1944 = vunpack.c.h.bf16 %v1898
    %v1945 = vunpack.c.l.bf16 %v1899
    %v1946 = vunpack.c.h.bf16 %v1899
    %v1947 = vunpack.c.l.bf16 %v1900
    %v1948 = vunpack.c.l.bf16 %v1901
    %v1949 = vunpack.c.h.bf16 %v1901
    %v1950 = vunpack.c.l.bf16 %v1902
    %v1951 = vunpack.c.h.bf16 %v1902
    %v1952 = vunpack.c.l.bf16 %v1903
    %v1953 = vunpack.c.h.bf16 %v1903
    %v1954 = vunpack.c.l.bf16 %v1904
    %v1955 = vunpack.c.l.bf16 %v1905
    %v1956 = vunpack.c.h.bf16 %v1905
    %v1957 = vunpack.c.l.bf16 %v1906
    %v1958 = vunpack.c.h.bf16 %v1906
    %v1959 = vunpack.c.l.bf16 %v1907
    %v1960 = vunpack.c.h.bf16 %v1907
    %v1961 = vunpack.c.l.bf16 %v1908
    %v1962 = vunpack.c.l.bf16 %v1909
    %v1963 = vunpack.c.h.bf16 %v1909
    %v1964 = vunpack.c.l.bf16 %v1910
    %v1965 = vunpack.c.h.bf16 %v1910
    %v1966 = vunpack.c.l.bf16 %v1911
    %v1967 = vunpack.c.h.bf16 %v1911
    %v1968 = vunpack.c.l.bf16 %v1912
    %v1969 = vmul.f32 %v1913, %v1941
    %v1970 = vmul.f32 %v1914, %v1942
    %v1971 = vmul.f32 %v1915, %v1943
    %v1972 = vmul.f32 %v1916, %v1944
    %v1973 = vmul.f32 %v1917, %v1945
    %v1974 = vmul.f32 %v1918, %v1946
    %v1975 = vmul.f32 %v1919, %v1947
    %v1976 = vmul.f32 %v1920, %v1948
    %v1977 = vmul.f32 %v1921, %v1949
    %v1978 = vmul.f32 %v1922, %v1950
    %v1979 = vmul.f32 %v1923, %v1951
    %v1980 = vmul.f32 %v1924, %v1952
    %v1981 = vmul.f32 %v1925, %v1953
    %v1982 = vmul.f32 %v1926, %v1954
    %v1983 = vmul.f32 %v1927, %v1955
    %v1984 = vmul.f32 %v1928, %v1956
    %v1985 = vmul.f32 %v1929, %v1957
    %v1986 = vmul.f32 %v1930, %v1958
    %v1987 = vmul.f32 %v1931, %v1959
    %v1988 = vmul.f32 %v1932, %v1960
    %v1989 = vmul.f32 %v1933, %v1961
    %v1990 = vmul.f32 %v1934, %v1962
    %v1991 = vmul.f32 %v1935, %v1963
    %v1992 = vmul.f32 %v1936, %v1964
    %v1993 = vmul.f32 %v1937, %v1965
    %v1994 = vmul.f32 %v1938, %v1966
    %v1995 = vmul.f32 %v1939, %v1967
    %v1996 = vmul.f32 %v1940, %v1968
    %v1997 = vadd.f32 %v1969, %v1970
    %v1998 = vadd.f32 %v1997, %v1971
    %v1999 = vadd.f32 %v1998, %v1972
    %v2000 = vadd.f32 %v1999, %v1973
    %v2001 = vadd.f32 %v2000, %v1974
    %v2002 = vadd.f32 %v2001, %v1975
    %v2003 = vadd.f32 %v2002, %v1976
    %v2004 = vadd.f32 %v2003, %v1977
    %v2005 = vadd.f32 %v2004, %v1978
    %v2006 = vadd.f32 %v2005, %v1979
    %v2007 = vadd.f32 %v2006, %v1980
    %v2008 = vadd.f32 %v2007, %v1981
    %v2009 = vadd.f32 %v2008, %v1982
    %v2010 = vadd.f32 %v2009, %v1983
    %v2011 = vadd.f32 %v2010, %v1984
    %v2012 = vadd.f32 %v2011, %v1985
    %v2013 = vadd.f32 %v2012, %v1986
    %v2014 = vadd.f32 %v2013, %v1987
    %v2015 = vadd.f32 %v2014, %v1988
    %v2016 = vadd.f32 %v2015, %v1989
    %v2017 = vadd.f32 %v2016, %v1990
    %v2018 = vadd.f32 %v2017, %v1991
    %v2019 = vadd.f32 %v2018, %v1992
    %v2020 = vadd.f32 %v2019, %v1993
    %v2021 = vadd.f32 %v2020, %v1994
    %v2022 = vadd.f32 %v2021, %v1995
    %v2023 = vadd.f32 %v2022, %v1996
    %2024 = vadd.xlane.f32.xlu0 %v2023
    %v2025 = vpop.xlane.xlu0 %2024
    %v2026 = vrot.slane %v2025, 4
    %v2027 = vadd.f32 %v2025, %v2026
    %v2028 = vrot.slane %v2027, 2
    %v2029 = vadd.f32 %v2027, %v2028
    %v2030 = vrot.slane %v2029, 1
    %v2031 = vadd.f32 %v2029, %v2030
    %s2032 = vtos %v2031
    %s2033 = sld [smem:[#allocation2]]
    %s2034 = sadd.f32 %s2032, %s2033
    %s2035 = scalar_lea.smem [#allocation5], 128
    %2036 = sst [smem:[%s2035]] %s2034
    %v2037 = vld [vmem:[%s557] sm:$0xff]
    %v2038 = vld [vmem:[%s557 + $0x8] sm:$0xff]
    %v2039 = vld [vmem:[%s557 + $0x10] sm:$0xff]
    %v2040 = vld [vmem:[%s557 + $0x18] sm:$0xf]
    %v2041 = vld [vmem:[%s557 + $0x1c] sm:$0xff]
    %v2042 = vld [vmem:[%s557 + $0x24] sm:$0xff]
    %v2043 = vld [vmem:[%s557 + $0x2c] sm:$0xff]
    %v2044 = vld [vmem:[%s557 + $0x34] sm:$0xf]
    %v2045 = vld [vmem:[%s557 + $0x38] sm:$0xff]
    %v2046 = vld [vmem:[%s557 + $0x40] sm:$0xff]
    %v2047 = vld [vmem:[%s557 + $0x48] sm:$0xff]
    %v2048 = vld [vmem:[%s557 + $0x50] sm:$0xf]
    %v2049 = vld [vmem:[%s557 + $0x54] sm:$0xff]
    %v2050 = vld [vmem:[%s557 + $0x5c] sm:$0xff]
    %v2051 = vld [vmem:[%s557 + $0x64] sm:$0xff]
    %v2052 = vld [vmem:[%s557 + $0x6c] sm:$0xf]
    %v2053 = vunpack.c.l.bf16 %v2037
    %v2054 = vunpack.c.h.bf16 %v2037
    %v2055 = vunpack.c.l.bf16 %v2038
    %v2056 = vunpack.c.h.bf16 %v2038
    %v2057 = vunpack.c.l.bf16 %v2039
    %v2058 = vunpack.c.h.bf16 %v2039
    %v2059 = vunpack.c.l.bf16 %v2040
    %v2060 = vunpack.c.l.bf16 %v2041
    %v2061 = vunpack.c.h.bf16 %v2041
    %v2062 = vunpack.c.l.bf16 %v2042
    %v2063 = vunpack.c.h.bf16 %v2042
    %v2064 = vunpack.c.l.bf16 %v2043
    %v2065 = vunpack.c.h.bf16 %v2043
    %v2066 = vunpack.c.l.bf16 %v2044
    %v2067 = vunpack.c.l.bf16 %v2045
    %v2068 = vunpack.c.h.bf16 %v2045
    %v2069 = vunpack.c.l.bf16 %v2046
    %v2070 = vunpack.c.h.bf16 %v2046
    %v2071 = vunpack.c.l.bf16 %v2047
    %v2072 = vunpack.c.h.bf16 %v2047
    %v2073 = vunpack.c.l.bf16 %v2048
    %v2074 = vunpack.c.l.bf16 %v2049
    %v2075 = vunpack.c.h.bf16 %v2049
    %v2076 = vunpack.c.l.bf16 %v2050
    %v2077 = vunpack.c.h.bf16 %v2050
    %v2078 = vunpack.c.l.bf16 %v2051
    %v2079 = vunpack.c.h.bf16 %v2051
    %v2080 = vunpack.c.l.bf16 %v2052
    %v2081 = vmul.f32 %v1913, %v2053
    %v2082 = vmul.f32 %v1914, %v2054
    %v2083 = vmul.f32 %v1915, %v2055
    %v2084 = vmul.f32 %v1916, %v2056
    %v2085 = vmul.f32 %v1917, %v2057
    %v2086 = vmul.f32 %v1918, %v2058
    %v2087 = vmul.f32 %v1919, %v2059
    %v2088 = vmul.f32 %v1920, %v2060
    %v2089 = vmul.f32 %v1921, %v2061
    %v2090 = vmul.f32 %v1922, %v2062
    %v2091 = vmul.f32 %v1923, %v2063
    %v2092 = vmul.f32 %v1924, %v2064
    %v2093 = vmul.f32 %v1925, %v2065
    %v2094 = vmul.f32 %v1926, %v2066
    %v2095 = vmul.f32 %v1927, %v2067
    %v2096 = vmul.f32 %v1928, %v2068
    %v2097 = vmul.f32 %v1929, %v2069
    %v2098 = vmul.f32 %v1930, %v2070
    %v2099 = vmul.f32 %v1931, %v2071
    %v2100 = vmul.f32 %v1932, %v2072
    %v2101 = vmul.f32 %v1933, %v2073
    %v2102 = vmul.f32 %v1934, %v2074
    %v2103 = vmul.f32 %v1935, %v2075
    %v2104 = vmul.f32 %v1936, %v2076
    %v2105 = vmul.f32 %v1937, %v2077
    %v2106 = vmul.f32 %v1938, %v2078
    %v2107 = vmul.f32 %v1939, %v2079
    %v2108 = vmul.f32 %v1940, %v2080
    %v2109 = vadd.f32 %v2081, %v2082
    %v2110 = vadd.f32 %v2109, %v2083
    %v2111 = vadd.f32 %v2110, %v2084
    %v2112 = vadd.f32 %v2111, %v2085
    %v2113 = vadd.f32 %v2112, %v2086
    %v2114 = vadd.f32 %v2113, %v2087
    %v2115 = vadd.f32 %v2114, %v2088
    %v2116 = vadd.f32 %v2115, %v2089
    %v2117 = vadd.f32 %v2116, %v2090
    %v2118 = vadd.f32 %v2117, %v2091
    %v2119 = vadd.f32 %v2118, %v2092
    %v2120 = vadd.f32 %v2119, %v2093
    %v2121 = vadd.f32 %v2120, %v2094
    %v2122 = vadd.f32 %v2121, %v2095
    %v2123 = vadd.f32 %v2122, %v2096
    %v2124 = vadd.f32 %v2123, %v2097
    %v2125 = vadd.f32 %v2124, %v2098
    %v2126 = vadd.f32 %v2125, %v2099
    %v2127 = vadd.f32 %v2126, %v2100
    %v2128 = vadd.f32 %v2127, %v2101
    %v2129 = vadd.f32 %v2128, %v2102
    %v2130 = vadd.f32 %v2129, %v2103
    %v2131 = vadd.f32 %v2130, %v2104
    %v2132 = vadd.f32 %v2131, %v2105
    %v2133 = vadd.f32 %v2132, %v2106
    %v2134 = vadd.f32 %v2133, %v2107
    %v2135 = vadd.f32 %v2134, %v2108
    %2136 = vadd.xlane.f32.xlu0 %v2135
    %v2137 = vpop.xlane.xlu0 %2136
    %v2138 = vrot.slane %v2137, 4
    %v2139 = vadd.f32 %v2137, %v2138
    %v2140 = vrot.slane %v2139, 2
    %v2141 = vadd.f32 %v2139, %v2140
    %v2142 = vrot.slane %v2141, 1
    %v2143 = vadd.f32 %v2141, %v2142
    %s2144 = vtos %v2143
    %s2145 = sld [smem:[#allocation2 + $0x1]]
    %s2146 = sadd.f32 %s2144, %s2145
    %s2147 = scalar_lea.smem [#allocation5], 129
    %2148 = sst [smem:[%s2147]] %s2146
    %v2149 = vld [vmem:[%s670] sm:$0xff]
    %v2150 = vld [vmem:[%s670 + $0x8] sm:$0xff]
    %v2151 = vld [vmem:[%s670 + $0x10] sm:$0xff]
    %v2152 = vld [vmem:[%s670 + $0x18] sm:$0xf]
    %v2153 = vld [vmem:[%s670 + $0x1c] sm:$0xff]
    %v2154 = vld [vmem:[%s670 + $0x24] sm:$0xff]
    %v2155 = vld [vmem:[%s670 + $0x2c] sm:$0xff]
    %v2156 = vld [vmem:[%s670 + $0x34] sm:$0xf]
    %v2157 = vld [vmem:[%s670 + $0x38] sm:$0xff]
    %v2158 = vld [vmem:[%s670 + $0x40] sm:$0xff]
    %v2159 = vld [vmem:[%s670 + $0x48] sm:$0xff]
    %v2160 = vld [vmem:[%s670 + $0x50] sm:$0xf]
    %v2161 = vld [vmem:[%s670 + $0x54] sm:$0xff]
    %v2162 = vld [vmem:[%s670 + $0x5c] sm:$0xff]
    %v2163 = vld [vmem:[%s670 + $0x64] sm:$0xff]
    %v2164 = vld [vmem:[%s670 + $0x6c] sm:$0xf]
    %v2165 = vunpack.c.l.bf16 %v2149
    %v2166 = vunpack.c.h.bf16 %v2149
    %v2167 = vunpack.c.l.bf16 %v2150
    %v2168 = vunpack.c.h.bf16 %v2150
    %v2169 = vunpack.c.l.bf16 %v2151
    %v2170 = vunpack.c.h.bf16 %v2151
    %v2171 = vunpack.c.l.bf16 %v2152
    %v2172 = vunpack.c.l.bf16 %v2153
    %v2173 = vunpack.c.h.bf16 %v2153
    %v2174 = vunpack.c.l.bf16 %v2154
    %v2175 = vunpack.c.h.bf16 %v2154
    %v2176 = vunpack.c.l.bf16 %v2155
    %v2177 = vunpack.c.h.bf16 %v2155
    %v2178 = vunpack.c.l.bf16 %v2156
    %v2179 = vunpack.c.l.bf16 %v2157
    %v2180 = vunpack.c.h.bf16 %v2157
    %v2181 = vunpack.c.l.bf16 %v2158
    %v2182 = vunpack.c.h.bf16 %v2158
    %v2183 = vunpack.c.l.bf16 %v2159
    %v2184 = vunpack.c.h.bf16 %v2159
    %v2185 = vunpack.c.l.bf16 %v2160
    %v2186 = vunpack.c.l.bf16 %v2161
    %v2187 = vunpack.c.h.bf16 %v2161
    %v2188 = vunpack.c.l.bf16 %v2162
    %v2189 = vunpack.c.h.bf16 %v2162
    %v2190 = vunpack.c.l.bf16 %v2163
    %v2191 = vunpack.c.h.bf16 %v2163
    %v2192 = vunpack.c.l.bf16 %v2164
    %v2193 = vmul.f32 %v1913, %v2165
    %v2194 = vmul.f32 %v1914, %v2166
    %v2195 = vmul.f32 %v1915, %v2167
    %v2196 = vmul.f32 %v1916, %v2168
    %v2197 = vmul.f32 %v1917, %v2169
    %v2198 = vmul.f32 %v1918, %v2170
    %v2199 = vmul.f32 %v1919, %v2171
    %v2200 = vmul.f32 %v1920, %v2172
    %v2201 = vmul.f32 %v1921, %v2173
    %v2202 = vmul.f32 %v1922, %v2174
    %v2203 = vmul.f32 %v1923, %v2175
    %v2204 = vmul.f32 %v1924, %v2176
    %v2205 = vmul.f32 %v1925, %v2177
    %v2206 = vmul.f32 %v1926, %v2178
    %v2207 = vmul.f32 %v1927, %v2179
    %v2208 = vmul.f32 %v1928, %v2180
    %v2209 = vmul.f32 %v1929, %v2181
    %v2210 = vmul.f32 %v1930, %v2182
    %v2211 = vmul.f32 %v1931, %v2183
    %v2212 = vmul.f32 %v1932, %v2184
    %v2213 = vmul.f32 %v1933, %v2185
    %v2214 = vmul.f32 %v1934, %v2186
    %v2215 = vmul.f32 %v1935, %v2187
    %v2216 = vmul.f32 %v1936, %v2188
    %v2217 = vmul.f32 %v1937, %v2189
    %v2218 = vmul.f32 %v1938, %v2190
    %v2219 = vmul.f32 %v1939, %v2191
    %v2220 = vmul.f32 %v1940, %v2192
    %v2221 = vadd.f32 %v2193, %v2194
    %v2222 = vadd.f32 %v2221, %v2195
    %v2223 = vadd.f32 %v2222, %v2196
    %v2224 = vadd.f32 %v2223, %v2197
    %v2225 = vadd.f32 %v2224, %v2198
    %v2226 = vadd.f32 %v2225, %v2199
    %v2227 = vadd.f32 %v2226, %v2200
    %v2228 = vadd.f32 %v2227, %v2201
    %v2229 = vadd.f32 %v2228, %v2202
    %v2230 = vadd.f32 %v2229, %v2203
    %v2231 = vadd.f32 %v2230, %v2204
    %v2232 = vadd.f32 %v2231, %v2205
    %v2233 = vadd.f32 %v2232, %v2206
    %v2234 = vadd.f32 %v2233, %v2207
    %v2235 = vadd.f32 %v2234, %v2208
    %v2236 = vadd.f32 %v2235, %v2209
    %v2237 = vadd.f32 %v2236, %v2210
    %v2238 = vadd.f32 %v2237, %v2211
    %v2239 = vadd.f32 %v2238, %v2212
    %v2240 = vadd.f32 %v2239, %v2213
    %v2241 = vadd.f32 %v2240, %v2214
    %v2242 = vadd.f32 %v2241, %v2215
    %v2243 = vadd.f32 %v2242, %v2216
    %v2244 = vadd.f32 %v2243, %v2217
    %v2245 = vadd.f32 %v2244, %v2218
    %v2246 = vadd.f32 %v2245, %v2219
    %v2247 = vadd.f32 %v2246, %v2220
    %2248 = vadd.xlane.f32.xlu0 %v2247
    %v2249 = vpop.xlane.xlu0 %2248
    %v2250 = vrot.slane %v2249, 4
    %v2251 = vadd.f32 %v2249, %v2250
    %v2252 = vrot.slane %v2251, 2
    %v2253 = vadd.f32 %v2251, %v2252
    %v2254 = vrot.slane %v2253, 1
    %v2255 = vadd.f32 %v2253, %v2254
    %s2256 = vtos %v2255
    %s2257 = sld [smem:[#allocation2 + $0x2]]
    %s2258 = sadd.f32 %s2256, %s2257
    %s2259 = scalar_lea.smem [#allocation5], 130
    %2260 = sst [smem:[%s2259]] %s2258
    %v2261 = vld [vmem:[%s783] sm:$0xff]
    %v2262 = vld [vmem:[%s783 + $0x8] sm:$0xff]
    %v2263 = vld [vmem:[%s783 + $0x10] sm:$0xff]
    %v2264 = vld [vmem:[%s783 + $0x18] sm:$0xf]
    %v2265 = vld [vmem:[%s783 + $0x1c] sm:$0xff]
    %v2266 = vld [vmem:[%s783 + $0x24] sm:$0xff]
    %v2267 = vld [vmem:[%s783 + $0x2c] sm:$0xff]
    %v2268 = vld [vmem:[%s783 + $0x34] sm:$0xf]
    %v2269 = vld [vmem:[%s783 + $0x38] sm:$0xff]
    %v2270 = vld [vmem:[%s783 + $0x40] sm:$0xff]
    %v2271 = vld [vmem:[%s783 + $0x48] sm:$0xff]
    %v2272 = vld [vmem:[%s783 + $0x50] sm:$0xf]
    %v2273 = vld [vmem:[%s783 + $0x54] sm:$0xff]
    %v2274 = vld [vmem:[%s783 + $0x5c] sm:$0xff]
    %v2275 = vld [vmem:[%s783 + $0x64] sm:$0xff]
    %v2276 = vld [vmem:[%s783 + $0x6c] sm:$0xf]
    %v2277 = vunpack.c.l.bf16 %v2261
    %v2278 = vunpack.c.h.bf16 %v2261
    %v2279 = vunpack.c.l.bf16 %v2262
    %v2280 = vunpack.c.h.bf16 %v2262
    %v2281 = vunpack.c.l.bf16 %v2263
    %v2282 = vunpack.c.h.bf16 %v2263
    %v2283 = vunpack.c.l.bf16 %v2264
    %v2284 = vunpack.c.l.bf16 %v2265
    %v2285 = vunpack.c.h.bf16 %v2265
    %v2286 = vunpack.c.l.bf16 %v2266
    %v2287 = vunpack.c.h.bf16 %v2266
    %v2288 = vunpack.c.l.bf16 %v2267
    %v2289 = vunpack.c.h.bf16 %v2267
    %v2290 = vunpack.c.l.bf16 %v2268
    %v2291 = vunpack.c.l.bf16 %v2269
    %v2292 = vunpack.c.h.bf16 %v2269
    %v2293 = vunpack.c.l.bf16 %v2270
    %v2294 = vunpack.c.h.bf16 %v2270
    %v2295 = vunpack.c.l.bf16 %v2271
    %v2296 = vunpack.c.h.bf16 %v2271
    %v2297 = vunpack.c.l.bf16 %v2272
    %v2298 = vunpack.c.l.bf16 %v2273
    %v2299 = vunpack.c.h.bf16 %v2273
    %v2300 = vunpack.c.l.bf16 %v2274
    %v2301 = vunpack.c.h.bf16 %v2274
    %v2302 = vunpack.c.l.bf16 %v2275
    %v2303 = vunpack.c.h.bf16 %v2275
    %v2304 = vunpack.c.l.bf16 %v2276
    %v2305 = vmul.f32 %v1913, %v2277
    %v2306 = vmul.f32 %v1914, %v2278
    %v2307 = vmul.f32 %v1915, %v2279
    %v2308 = vmul.f32 %v1916, %v2280
    %v2309 = vmul.f32 %v1917, %v2281
    %v2310 = vmul.f32 %v1918, %v2282
    %v2311 = vmul.f32 %v1919, %v2283
    %v2312 = vmul.f32 %v1920, %v2284
    %v2313 = vmul.f32 %v1921, %v2285
    %v2314 = vmul.f32 %v1922, %v2286
    %v2315 = vmul.f32 %v1923, %v2287
    %v2316 = vmul.f32 %v1924, %v2288
    %v2317 = vmul.f32 %v1925, %v2289
    %v2318 = vmul.f32 %v1926, %v2290
    %v2319 = vmul.f32 %v1927, %v2291
    %v2320 = vmul.f32 %v1928, %v2292
    %v2321 = vmul.f32 %v1929, %v2293
    %v2322 = vmul.f32 %v1930, %v2294
    %v2323 = vmul.f32 %v1931, %v2295
    %v2324 = vmul.f32 %v1932, %v2296
    %v2325 = vmul.f32 %v1933, %v2297
    %v2326 = vmul.f32 %v1934, %v2298
    %v2327 = vmul.f32 %v1935, %v2299
    %v2328 = vmul.f32 %v1936, %v2300
    %v2329 = vmul.f32 %v1937, %v2301
    %v2330 = vmul.f32 %v1938, %v2302
    %v2331 = vmul.f32 %v1939, %v2303
    %v2332 = vmul.f32 %v1940, %v2304
    %v2333 = vadd.f32 %v2305, %v2306
    %v2334 = vadd.f32 %v2333, %v2307
    %v2335 = vadd.f32 %v2334, %v2308
    %v2336 = vadd.f32 %v2335, %v2309
    %v2337 = vadd.f32 %v2336, %v2310
    %v2338 = vadd.f32 %v2337, %v2311
    %v2339 = vadd.f32 %v2338, %v2312
    %v2340 = vadd.f32 %v2339, %v2313
    %v2341 = vadd.f32 %v2340, %v2314
    %v2342 = vadd.f32 %v2341, %v2315
    %v2343 = vadd.f32 %v2342, %v2316
    %v2344 = vadd.f32 %v2343, %v2317
    %v2345 = vadd.f32 %v2344, %v2318
    %v2346 = vadd.f32 %v2345, %v2319
    %v2347 = vadd.f32 %v2346, %v2320
    %v2348 = vadd.f32 %v2347, %v2321
    %v2349 = vadd.f32 %v2348, %v2322
    %v2350 = vadd.f32 %v2349, %v2323
    %v2351 = vadd.f32 %v2350, %v2324
    %v2352 = vadd.f32 %v2351, %v2325
    %v2353 = vadd.f32 %v2352, %v2326
    %v2354 = vadd.f32 %v2353, %v2327
    %v2355 = vadd.f32 %v2354, %v2328
    %v2356 = vadd.f32 %v2355, %v2329
    %v2357 = vadd.f32 %v2356, %v2330
    %v2358 = vadd.f32 %v2357, %v2331
    %v2359 = vadd.f32 %v2358, %v2332
    %2360 = vadd.xlane.f32.xlu0 %v2359
    %v2361 = vpop.xlane.xlu0 %2360
    %v2362 = vrot.slane %v2361, 4
    %v2363 = vadd.f32 %v2361, %v2362
    %v2364 = vrot.slane %v2363, 2
    %v2365 = vadd.f32 %v2363, %v2364
    %v2366 = vrot.slane %v2365, 1
    %v2367 = vadd.f32 %v2365, %v2366
    %s2368 = vtos %v2367
    %s2369 = sld [smem:[#allocation2 + $0x3]]
    %s2370 = sadd.f32 %s2368, %s2369
    %s2371 = scalar_lea.smem [#allocation5], 131
    %2372 = sst [smem:[%s2371]] %s2370
    %v2373 = vld [vmem:[%s896] sm:$0xff]
    %v2374 = vld [vmem:[%s896 + $0x8] sm:$0xff]
    %v2375 = vld [vmem:[%s896 + $0x10] sm:$0xff]
    %v2376 = vld [vmem:[%s896 + $0x18] sm:$0xf]
    %v2377 = vld [vmem:[%s896 + $0x1c] sm:$0xff]
    %v2378 = vld [vmem:[%s896 + $0x24] sm:$0xff]
    %v2379 = vld [vmem:[%s896 + $0x2c] sm:$0xff]
    %v2380 = vld [vmem:[%s896 + $0x34] sm:$0xf]
    %v2381 = vld [vmem:[%s896 + $0x38] sm:$0xff]
    %v2382 = vld [vmem:[%s896 + $0x40] sm:$0xff]
    %v2383 = vld [vmem:[%s896 + $0x48] sm:$0xff]
    %v2384 = vld [vmem:[%s896 + $0x50] sm:$0xf]
    %v2385 = vld [vmem:[%s896 + $0x54] sm:$0xff]
    %v2386 = vld [vmem:[%s896 + $0x5c] sm:$0xff]
    %v2387 = vld [vmem:[%s896 + $0x64] sm:$0xff]
    %v2388 = vld [vmem:[%s896 + $0x6c] sm:$0xf]
    %v2389 = vunpack.c.l.bf16 %v2373
    %v2390 = vunpack.c.h.bf16 %v2373
    %v2391 = vunpack.c.l.bf16 %v2374
    %v2392 = vunpack.c.h.bf16 %v2374
    %v2393 = vunpack.c.l.bf16 %v2375
    %v2394 = vunpack.c.h.bf16 %v2375
    %v2395 = vunpack.c.l.bf16 %v2376
    %v2396 = vunpack.c.l.bf16 %v2377
    %v2397 = vunpack.c.h.bf16 %v2377
    %v2398 = vunpack.c.l.bf16 %v2378
    %v2399 = vunpack.c.h.bf16 %v2378
    %v2400 = vunpack.c.l.bf16 %v2379
    %v2401 = vunpack.c.h.bf16 %v2379
    %v2402 = vunpack.c.l.bf16 %v2380
    %v2403 = vunpack.c.l.bf16 %v2381
    %v2404 = vunpack.c.h.bf16 %v2381
    %v2405 = vunpack.c.l.bf16 %v2382
    %v2406 = vunpack.c.h.bf16 %v2382
    %v2407 = vunpack.c.l.bf16 %v2383
    %v2408 = vunpack.c.h.bf16 %v2383
    %v2409 = vunpack.c.l.bf16 %v2384
    %v2410 = vunpack.c.l.bf16 %v2385
    %v2411 = vunpack.c.h.bf16 %v2385
    %v2412 = vunpack.c.l.bf16 %v2386
    %v2413 = vunpack.c.h.bf16 %v2386
    %v2414 = vunpack.c.l.bf16 %v2387
    %v2415 = vunpack.c.h.bf16 %v2387
    %v2416 = vunpack.c.l.bf16 %v2388
    %v2417 = vmul.f32 %v1913, %v2389
    %v2418 = vmul.f32 %v1914, %v2390
    %v2419 = vmul.f32 %v1915, %v2391
    %v2420 = vmul.f32 %v1916, %v2392
    %v2421 = vmul.f32 %v1917, %v2393
    %v2422 = vmul.f32 %v1918, %v2394
    %v2423 = vmul.f32 %v1919, %v2395
    %v2424 = vmul.f32 %v1920, %v2396
    %v2425 = vmul.f32 %v1921, %v2397
    %v2426 = vmul.f32 %v1922, %v2398
    %v2427 = vmul.f32 %v1923, %v2399
    %v2428 = vmul.f32 %v1924, %v2400
    %v2429 = vmul.f32 %v1925, %v2401
    %v2430 = vmul.f32 %v1926, %v2402
    %v2431 = vmul.f32 %v1927, %v2403
    %v2432 = vmul.f32 %v1928, %v2404
    %v2433 = vmul.f32 %v1929, %v2405
    %v2434 = vmul.f32 %v1930, %v2406
    %v2435 = vmul.f32 %v1931, %v2407
    %v2436 = vmul.f32 %v1932, %v2408
    %v2437 = vmul.f32 %v1933, %v2409
    %v2438 = vmul.f32 %v1934, %v2410
    %v2439 = vmul.f32 %v1935, %v2411
    %v2440 = vmul.f32 %v1936, %v2412
    %v2441 = vmul.f32 %v1937, %v2413
    %v2442 = vmul.f32 %v1938, %v2414
    %v2443 = vmul.f32 %v1939, %v2415
    %v2444 = vmul.f32 %v1940, %v2416
    %v2445 = vadd.f32 %v2417, %v2418
    %v2446 = vadd.f32 %v2445, %v2419
    %v2447 = vadd.f32 %v2446, %v2420
    %v2448 = vadd.f32 %v2447, %v2421
    %v2449 = vadd.f32 %v2448, %v2422
    %v2450 = vadd.f32 %v2449, %v2423
    %v2451 = vadd.f32 %v2450, %v2424
    %v2452 = vadd.f32 %v2451, %v2425
    %v2453 = vadd.f32 %v2452, %v2426
    %v2454 = vadd.f32 %v2453, %v2427
    %v2455 = vadd.f32 %v2454, %v2428
    %v2456 = vadd.f32 %v2455, %v2429
    %v2457 = vadd.f32 %v2456, %v2430
    %v2458 = vadd.f32 %v2457, %v2431
    %v2459 = vadd.f32 %v2458, %v2432
    %v2460 = vadd.f32 %v2459, %v2433
    %v2461 = vadd.f32 %v2460, %v2434
    %v2462 = vadd.f32 %v2461, %v2435
    %v2463 = vadd.f32 %v2462, %v2436
    %v2464 = vadd.f32 %v2463, %v2437
    %v2465 = vadd.f32 %v2464, %v2438
    %v2466 = vadd.f32 %v2465, %v2439
    %v2467 = vadd.f32 %v2466, %v2440
    %v2468 = vadd.f32 %v2467, %v2441
    %v2469 = vadd.f32 %v2468, %v2442
    %v2470 = vadd.f32 %v2469, %v2443
    %v2471 = vadd.f32 %v2470, %v2444
    %2472 = vadd.xlane.f32.xlu0 %v2471
    %v2473 = vpop.xlane.xlu0 %2472
    %v2474 = vrot.slane %v2473, 4
    %v2475 = vadd.f32 %v2473, %v2474
    %v2476 = vrot.slane %v2475, 2
    %v2477 = vadd.f32 %v2475, %v2476
    %v2478 = vrot.slane %v2477, 1
    %v2479 = vadd.f32 %v2477, %v2478
    %s2480 = vtos %v2479
    %s2481 = sld [smem:[#allocation2 + $0x4]]
    %s2482 = sadd.f32 %s2480, %s2481
    %s2483 = scalar_lea.smem [#allocation5], 132
    %2484 = sst [smem:[%s2483]] %s2482
    %v2485 = vld [vmem:[%s1009] sm:$0xff]
    %v2486 = vld [vmem:[%s1009 + $0x8] sm:$0xff]
    %v2487 = vld [vmem:[%s1009 + $0x10] sm:$0xff]
    %v2488 = vld [vmem:[%s1009 + $0x18] sm:$0xf]
    %v2489 = vld [vmem:[%s1009 + $0x1c] sm:$0xff]
    %v2490 = vld [vmem:[%s1009 + $0x24] sm:$0xff]
    %v2491 = vld [vmem:[%s1009 + $0x2c] sm:$0xff]
    %v2492 = vld [vmem:[%s1009 + $0x34] sm:$0xf]
    %v2493 = vld [vmem:[%s1009 + $0x38] sm:$0xff]
    %v2494 = vld [vmem:[%s1009 + $0x40] sm:$0xff]
    %v2495 = vld [vmem:[%s1009 + $0x48] sm:$0xff]
    %v2496 = vld [vmem:[%s1009 + $0x50] sm:$0xf]
    %v2497 = vld [vmem:[%s1009 + $0x54] sm:$0xff]
    %v2498 = vld [vmem:[%s1009 + $0x5c] sm:$0xff]
    %v2499 = vld [vmem:[%s1009 + $0x64] sm:$0xff]
    %v2500 = vld [vmem:[%s1009 + $0x6c] sm:$0xf]
    %v2501 = vunpack.c.l.bf16 %v2485
    %v2502 = vunpack.c.h.bf16 %v2485
    %v2503 = vunpack.c.l.bf16 %v2486
    %v2504 = vunpack.c.h.bf16 %v2486
    %v2505 = vunpack.c.l.bf16 %v2487
    %v2506 = vunpack.c.h.bf16 %v2487
    %v2507 = vunpack.c.l.bf16 %v2488
    %v2508 = vunpack.c.l.bf16 %v2489
    %v2509 = vunpack.c.h.bf16 %v2489
    %v2510 = vunpack.c.l.bf16 %v2490
    %v2511 = vunpack.c.h.bf16 %v2490
    %v2512 = vunpack.c.l.bf16 %v2491
    %v2513 = vunpack.c.h.bf16 %v2491
    %v2514 = vunpack.c.l.bf16 %v2492
    %v2515 = vunpack.c.l.bf16 %v2493
    %v2516 = vunpack.c.h.bf16 %v2493
    %v2517 = vunpack.c.l.bf16 %v2494
    %v2518 = vunpack.c.h.bf16 %v2494
    %v2519 = vunpack.c.l.bf16 %v2495
    %v2520 = vunpack.c.h.bf16 %v2495
    %v2521 = vunpack.c.l.bf16 %v2496
    %v2522 = vunpack.c.l.bf16 %v2497
    %v2523 = vunpack.c.h.bf16 %v2497
    %v2524 = vunpack.c.l.bf16 %v2498
    %v2525 = vunpack.c.h.bf16 %v2498
    %v2526 = vunpack.c.l.bf16 %v2499
    %v2527 = vunpack.c.h.bf16 %v2499
    %v2528 = vunpack.c.l.bf16 %v2500
    %v2529 = vmul.f32 %v1913, %v2501
    %v2530 = vmul.f32 %v1914, %v2502
    %v2531 = vmul.f32 %v1915, %v2503
    %v2532 = vmul.f32 %v1916, %v2504
    %v2533 = vmul.f32 %v1917, %v2505
    %v2534 = vmul.f32 %v1918, %v2506
    %v2535 = vmul.f32 %v1919, %v2507
    %v2536 = vmul.f32 %v1920, %v2508
    %v2537 = vmul.f32 %v1921, %v2509
    %v2538 = vmul.f32 %v1922, %v2510
    %v2539 = vmul.f32 %v1923, %v2511
    %v2540 = vmul.f32 %v1924, %v2512
    %v2541 = vmul.f32 %v1925, %v2513
    %v2542 = vmul.f32 %v1926, %v2514
    %v2543 = vmul.f32 %v1927, %v2515
    %v2544 = vmul.f32 %v1928, %v2516
    %v2545 = vmul.f32 %v1929, %v2517
    %v2546 = vmul.f32 %v1930, %v2518
    %v2547 = vmul.f32 %v1931, %v2519
    %v2548 = vmul.f32 %v1932, %v2520
    %v2549 = vmul.f32 %v1933, %v2521
    %v2550 = vmul.f32 %v1934, %v2522
    %v2551 = vmul.f32 %v1935, %v2523
    %v2552 = vmul.f32 %v1936, %v2524
    %v2553 = vmul.f32 %v1937, %v2525
    %v2554 = vmul.f32 %v1938, %v2526
    %v2555 = vmul.f32 %v1939, %v2527
    %v2556 = vmul.f32 %v1940, %v2528
    %v2557 = vadd.f32 %v2529, %v2530
    %v2558 = vadd.f32 %v2557, %v2531
    %v2559 = vadd.f32 %v2558, %v2532
    %v2560 = vadd.f32 %v2559, %v2533
    %v2561 = vadd.f32 %v2560, %v2534
    %v2562 = vadd.f32 %v2561, %v2535
    %v2563 = vadd.f32 %v2562, %v2536
    %v2564 = vadd.f32 %v2563, %v2537
    %v2565 = vadd.f32 %v2564, %v2538
    %v2566 = vadd.f32 %v2565, %v2539
    %v2567 = vadd.f32 %v2566, %v2540
    %v2568 = vadd.f32 %v2567, %v2541
    %v2569 = vadd.f32 %v2568, %v2542
    %v2570 = vadd.f32 %v2569, %v2543
    %v2571 = vadd.f32 %v2570, %v2544
    %v2572 = vadd.f32 %v2571, %v2545
    %v2573 = vadd.f32 %v2572, %v2546
    %v2574 = vadd.f32 %v2573, %v2547
    %v2575 = vadd.f32 %v2574, %v2548
    %v2576 = vadd.f32 %v2575, %v2549
    %v2577 = vadd.f32 %v2576, %v2550
    %v2578 = vadd.f32 %v2577, %v2551
    %v2579 = vadd.f32 %v2578, %v2552
    %v2580 = vadd.f32 %v2579, %v2553
    %v2581 = vadd.f32 %v2580, %v2554
    %v2582 = vadd.f32 %v2581, %v2555
    %v2583 = vadd.f32 %v2582, %v2556
    %2584 = vadd.xlane.f32.xlu0 %v2583
    %v2585 = vpop.xlane.xlu0 %2584
    %v2586 = vrot.slane %v2585, 4
    %v2587 = vadd.f32 %v2585, %v2586
    %v2588 = vrot.slane %v2587, 2
    %v2589 = vadd.f32 %v2587, %v2588
    %v2590 = vrot.slane %v2589, 1
    %v2591 = vadd.f32 %v2589, %v2590
    %s2592 = vtos %v2591
    %s2593 = sld [smem:[#allocation2 + $0x5]]
    %s2594 = sadd.f32 %s2592, %s2593
    %s2595 = scalar_lea.smem [#allocation5], 133
    %2596 = sst [smem:[%s2595]] %s2594
    %v2597 = vld [vmem:[%s1122] sm:$0xff]
    %v2598 = vld [vmem:[%s1122 + $0x8] sm:$0xff]
    %v2599 = vld [vmem:[%s1122 + $0x10] sm:$0xff]
    %v2600 = vld [vmem:[%s1122 + $0x18] sm:$0xf]
    %v2601 = vld [vmem:[%s1122 + $0x1c] sm:$0xff]
    %v2602 = vld [vmem:[%s1122 + $0x24] sm:$0xff]
    %v2603 = vld [vmem:[%s1122 + $0x2c] sm:$0xff]
    %v2604 = vld [vmem:[%s1122 + $0x34] sm:$0xf]
    %v2605 = vld [vmem:[%s1122 + $0x38] sm:$0xff]
    %v2606 = vld [vmem:[%s1122 + $0x40] sm:$0xff]
    %v2607 = vld [vmem:[%s1122 + $0x48] sm:$0xff]
    %v2608 = vld [vmem:[%s1122 + $0x50] sm:$0xf]
    %v2609 = vld [vmem:[%s1122 + $0x54] sm:$0xff]
    %v2610 = vld [vmem:[%s1122 + $0x5c] sm:$0xff]
    %v2611 = vld [vmem:[%s1122 + $0x64] sm:$0xff]
    %v2612 = vld [vmem:[%s1122 + $0x6c] sm:$0xf]
    %v2613 = vunpack.c.l.bf16 %v2597
    %v2614 = vunpack.c.h.bf16 %v2597
    %v2615 = vunpack.c.l.bf16 %v2598
    %v2616 = vunpack.c.h.bf16 %v2598
    %v2617 = vunpack.c.l.bf16 %v2599
    %v2618 = vunpack.c.h.bf16 %v2599
    %v2619 = vunpack.c.l.bf16 %v2600
    %v2620 = vunpack.c.l.bf16 %v2601
    %v2621 = vunpack.c.h.bf16 %v2601
    %v2622 = vunpack.c.l.bf16 %v2602
    %v2623 = vunpack.c.h.bf16 %v2602
    %v2624 = vunpack.c.l.bf16 %v2603
    %v2625 = vunpack.c.h.bf16 %v2603
    %v2626 = vunpack.c.l.bf16 %v2604
    %v2627 = vunpack.c.l.bf16 %v2605
    %v2628 = vunpack.c.h.bf16 %v2605
    %v2629 = vunpack.c.l.bf16 %v2606
    %v2630 = vunpack.c.h.bf16 %v2606
    %v2631 = vunpack.c.l.bf16 %v2607
    %v2632 = vunpack.c.h.bf16 %v2607
    %v2633 = vunpack.c.l.bf16 %v2608
    %v2634 = vunpack.c.l.bf16 %v2609
    %v2635 = vunpack.c.h.bf16 %v2609
    %v2636 = vunpack.c.l.bf16 %v2610
    %v2637 = vunpack.c.h.bf16 %v2610
    %v2638 = vunpack.c.l.bf16 %v2611
    %v2639 = vunpack.c.h.bf16 %v2611
    %v2640 = vunpack.c.l.bf16 %v2612
    %v2641 = vmul.f32 %v1913, %v2613
    %v2642 = vmul.f32 %v1914, %v2614
    %v2643 = vmul.f32 %v1915, %v2615
    %v2644 = vmul.f32 %v1916, %v2616
    %v2645 = vmul.f32 %v1917, %v2617
    %v2646 = vmul.f32 %v1918, %v2618
    %v2647 = vmul.f32 %v1919, %v2619
    %v2648 = vmul.f32 %v1920, %v2620
    %v2649 = vmul.f32 %v1921, %v2621
    %v2650 = vmul.f32 %v1922, %v2622
    %v2651 = vmul.f32 %v1923, %v2623
    %v2652 = vmul.f32 %v1924, %v2624
    %v2653 = vmul.f32 %v1925, %v2625
    %v2654 = vmul.f32 %v1926, %v2626
    %v2655 = vmul.f32 %v1927, %v2627
    %v2656 = vmul.f32 %v1928, %v2628
    %v2657 = vmul.f32 %v1929, %v2629
    %v2658 = vmul.f32 %v1930, %v2630
    %v2659 = vmul.f32 %v1931, %v2631
    %v2660 = vmul.f32 %v1932, %v2632
    %v2661 = vmul.f32 %v1933, %v2633
    %v2662 = vmul.f32 %v1934, %v2634
    %v2663 = vmul.f32 %v1935, %v2635
    %v2664 = vmul.f32 %v1936, %v2636
    %v2665 = vmul.f32 %v1937, %v2637
    %v2666 = vmul.f32 %v1938, %v2638
    %v2667 = vmul.f32 %v1939, %v2639
    %v2668 = vmul.f32 %v1940, %v2640
    %v2669 = vadd.f32 %v2641, %v2642
    %v2670 = vadd.f32 %v2669, %v2643
    %v2671 = vadd.f32 %v2670, %v2644
    %v2672 = vadd.f32 %v2671, %v2645
    %v2673 = vadd.f32 %v2672, %v2646
    %v2674 = vadd.f32 %v2673, %v2647
    %v2675 = vadd.f32 %v2674, %v2648
    %v2676 = vadd.f32 %v2675, %v2649
    %v2677 = vadd.f32 %v2676, %v2650
    %v2678 = vadd.f32 %v2677, %v2651
    %v2679 = vadd.f32 %v2678, %v2652
    %v2680 = vadd.f32 %v2679, %v2653
    %v2681 = vadd.f32 %v2680, %v2654
    %v2682 = vadd.f32 %v2681, %v2655
    %v2683 = vadd.f32 %v2682, %v2656
    %v2684 = vadd.f32 %v2683, %v2657
    %v2685 = vadd.f32 %v2684, %v2658
    %v2686 = vadd.f32 %v2685, %v2659
    %v2687 = vadd.f32 %v2686, %v2660
    %v2688 = vadd.f32 %v2687, %v2661
    %v2689 = vadd.f32 %v2688, %v2662
    %v2690 = vadd.f32 %v2689, %v2663
    %v2691 = vadd.f32 %v2690, %v2664
    %v2692 = vadd.f32 %v2691, %v2665
    %v2693 = vadd.f32 %v2692, %v2666
    %v2694 = vadd.f32 %v2693, %v2667
    %v2695 = vadd.f32 %v2694, %v2668
    %2696 = vadd.xlane.f32.xlu0 %v2695
    %v2697 = vpop.xlane.xlu0 %2696
    %v2698 = vrot.slane %v2697, 4
    %v2699 = vadd.f32 %v2697, %v2698
    %v2700 = vrot.slane %v2699, 2
    %v2701 = vadd.f32 %v2699, %v2700
    %v2702 = vrot.slane %v2701, 1
    %v2703 = vadd.f32 %v2701, %v2702
    %s2704 = vtos %v2703
    %s2705 = sld [smem:[#allocation2 + $0x6]]
    %s2706 = sadd.f32 %s2704, %s2705
    %s2707 = scalar_lea.smem [#allocation5], 134
    %2708 = sst [smem:[%s2707]] %s2706
    %v2709 = vld [vmem:[%s1235] sm:$0xff]
    %v2710 = vld [vmem:[%s1235 + $0x8] sm:$0xff]
    %v2711 = vld [vmem:[%s1235 + $0x10] sm:$0xff]
    %v2712 = vld [vmem:[%s1235 + $0x18] sm:$0xf]
    %v2713 = vld [vmem:[%s1235 + $0x1c] sm:$0xff]
    %v2714 = vld [vmem:[%s1235 + $0x24] sm:$0xff]
    %v2715 = vld [vmem:[%s1235 + $0x2c] sm:$0xff]
    %v2716 = vld [vmem:[%s1235 + $0x34] sm:$0xf]
    %v2717 = vld [vmem:[%s1235 + $0x38] sm:$0xff]
    %v2718 = vld [vmem:[%s1235 + $0x40] sm:$0xff]
    %v2719 = vld [vmem:[%s1235 + $0x48] sm:$0xff]
    %v2720 = vld [vmem:[%s1235 + $0x50] sm:$0xf]
    %v2721 = vld [vmem:[%s1235 + $0x54] sm:$0xff]
    %v2722 = vld [vmem:[%s1235 + $0x5c] sm:$0xff]
    %v2723 = vld [vmem:[%s1235 + $0x64] sm:$0xff]
    %v2724 = vld [vmem:[%s1235 + $0x6c] sm:$0xf]
    %v2725 = vunpack.c.l.bf16 %v2709
    %v2726 = vunpack.c.h.bf16 %v2709
    %v2727 = vunpack.c.l.bf16 %v2710
    %v2728 = vunpack.c.h.bf16 %v2710
    %v2729 = vunpack.c.l.bf16 %v2711
    %v2730 = vunpack.c.h.bf16 %v2711
    %v2731 = vunpack.c.l.bf16 %v2712
    %v2732 = vunpack.c.l.bf16 %v2713
    %v2733 = vunpack.c.h.bf16 %v2713
    %v2734 = vunpack.c.l.bf16 %v2714
    %v2735 = vunpack.c.h.bf16 %v2714
    %v2736 = vunpack.c.l.bf16 %v2715
    %v2737 = vunpack.c.h.bf16 %v2715
    %v2738 = vunpack.c.l.bf16 %v2716
    %v2739 = vunpack.c.l.bf16 %v2717
    %v2740 = vunpack.c.h.bf16 %v2717
    %v2741 = vunpack.c.l.bf16 %v2718
    %v2742 = vunpack.c.h.bf16 %v2718
    %v2743 = vunpack.c.l.bf16 %v2719
    %v2744 = vunpack.c.h.bf16 %v2719
    %v2745 = vunpack.c.l.bf16 %v2720
    %v2746 = vunpack.c.l.bf16 %v2721
    %v2747 = vunpack.c.h.bf16 %v2721
    %v2748 = vunpack.c.l.bf16 %v2722
    %v2749 = vunpack.c.h.bf16 %v2722
    %v2750 = vunpack.c.l.bf16 %v2723
    %v2751 = vunpack.c.h.bf16 %v2723
    %v2752 = vunpack.c.l.bf16 %v2724
    %v2753 = vmul.f32 %v1913, %v2725
    %v2754 = vmul.f32 %v1914, %v2726
    %v2755 = vmul.f32 %v1915, %v2727
    %v2756 = vmul.f32 %v1916, %v2728
    %v2757 = vmul.f32 %v1917, %v2729
    %v2758 = vmul.f32 %v1918, %v2730
    %v2759 = vmul.f32 %v1919, %v2731
    %v2760 = vmul.f32 %v1920, %v2732
    %v2761 = vmul.f32 %v1921, %v2733
    %v2762 = vmul.f32 %v1922, %v2734
    %v2763 = vmul.f32 %v1923, %v2735
    %v2764 = vmul.f32 %v1924, %v2736
    %v2765 = vmul.f32 %v1925, %v2737
    %v2766 = vmul.f32 %v1926, %v2738
    %v2767 = vmul.f32 %v1927, %v2739
    %v2768 = vmul.f32 %v1928, %v2740
    %v2769 = vmul.f32 %v1929, %v2741
    %v2770 = vmul.f32 %v1930, %v2742
    %v2771 = vmul.f32 %v1931, %v2743
    %v2772 = vmul.f32 %v1932, %v2744
    %v2773 = vmul.f32 %v1933, %v2745
    %v2774 = vmul.f32 %v1934, %v2746
    %v2775 = vmul.f32 %v1935, %v2747
    %v2776 = vmul.f32 %v1936, %v2748
    %v2777 = vmul.f32 %v1937, %v2749
    %v2778 = vmul.f32 %v1938, %v2750
    %v2779 = vmul.f32 %v1939, %v2751
    %v2780 = vmul.f32 %v1940, %v2752
    %v2781 = vadd.f32 %v2753, %v2754
    %v2782 = vadd.f32 %v2781, %v2755
    %v2783 = vadd.f32 %v2782, %v2756
    %v2784 = vadd.f32 %v2783, %v2757
    %v2785 = vadd.f32 %v2784, %v2758
    %v2786 = vadd.f32 %v2785, %v2759
    %v2787 = vadd.f32 %v2786, %v2760
    %v2788 = vadd.f32 %v2787, %v2761
    %v2789 = vadd.f32 %v2788, %v2762
    %v2790 = vadd.f32 %v2789, %v2763
    %v2791 = vadd.f32 %v2790, %v2764
    %v2792 = vadd.f32 %v2791, %v2765
    %v2793 = vadd.f32 %v2792, %v2766
    %v2794 = vadd.f32 %v2793, %v2767
    %v2795 = vadd.f32 %v2794, %v2768
    %v2796 = vadd.f32 %v2795, %v2769
    %v2797 = vadd.f32 %v2796, %v2770
    %v2798 = vadd.f32 %v2797, %v2771
    %v2799 = vadd.f32 %v2798, %v2772
    %v2800 = vadd.f32 %v2799, %v2773
    %v2801 = vadd.f32 %v2800, %v2774
    %v2802 = vadd.f32 %v2801, %v2775
    %v2803 = vadd.f32 %v2802, %v2776
    %v2804 = vadd.f32 %v2803, %v2777
    %v2805 = vadd.f32 %v2804, %v2778
    %v2806 = vadd.f32 %v2805, %v2779
    %v2807 = vadd.f32 %v2806, %v2780
    %2808 = vadd.xlane.f32.xlu0 %v2807
    %v2809 = vpop.xlane.xlu0 %2808
    %v2810 = vrot.slane %v2809, 4
    %v2811 = vadd.f32 %v2809, %v2810
    %v2812 = vrot.slane %v2811, 2
    %v2813 = vadd.f32 %v2811, %v2812
    %v2814 = vrot.slane %v2813, 1
    %v2815 = vadd.f32 %v2813, %v2814
    %s2816 = vtos %v2815
    %s2817 = sld [smem:[#allocation2 + $0x7]]
    %s2818 = sadd.f32 %s2816, %s2817
    %s2819 = scalar_lea.smem [#allocation5], 135
    %2820 = sst [smem:[%s2819]] %s2818
    %v2821 = vld [vmem:[%s1348] sm:$0xff]
    %v2822 = vld [vmem:[%s1348 + $0x8] sm:$0xff]
    %v2823 = vld [vmem:[%s1348 + $0x10] sm:$0xff]
    %v2824 = vld [vmem:[%s1348 + $0x18] sm:$0xf]
    %v2825 = vld [vmem:[%s1348 + $0x1c] sm:$0xff]
    %v2826 = vld [vmem:[%s1348 + $0x24] sm:$0xff]
    %v2827 = vld [vmem:[%s1348 + $0x2c] sm:$0xff]
    %v2828 = vld [vmem:[%s1348 + $0x34] sm:$0xf]
    %v2829 = vld [vmem:[%s1348 + $0x38] sm:$0xff]
    %v2830 = vld [vmem:[%s1348 + $0x40] sm:$0xff]
    %v2831 = vld [vmem:[%s1348 + $0x48] sm:$0xff]
    %v2832 = vld [vmem:[%s1348 + $0x50] sm:$0xf]
    %v2833 = vld [vmem:[%s1348 + $0x54] sm:$0xff]
    %v2834 = vld [vmem:[%s1348 + $0x5c] sm:$0xff]
    %v2835 = vld [vmem:[%s1348 + $0x64] sm:$0xff]
    %v2836 = vld [vmem:[%s1348 + $0x6c] sm:$0xf]
    %v2837 = vunpack.c.l.bf16 %v2821
    %v2838 = vunpack.c.h.bf16 %v2821
    %v2839 = vunpack.c.l.bf16 %v2822
    %v2840 = vunpack.c.h.bf16 %v2822
    %v2841 = vunpack.c.l.bf16 %v2823
    %v2842 = vunpack.c.h.bf16 %v2823
    %v2843 = vunpack.c.l.bf16 %v2824
    %v2844 = vunpack.c.l.bf16 %v2825
    %v2845 = vunpack.c.h.bf16 %v2825
    %v2846 = vunpack.c.l.bf16 %v2826
    %v2847 = vunpack.c.h.bf16 %v2826
    %v2848 = vunpack.c.l.bf16 %v2827
    %v2849 = vunpack.c.h.bf16 %v2827
    %v2850 = vunpack.c.l.bf16 %v2828
    %v2851 = vunpack.c.l.bf16 %v2829
    %v2852 = vunpack.c.h.bf16 %v2829
    %v2853 = vunpack.c.l.bf16 %v2830
    %v2854 = vunpack.c.h.bf16 %v2830
    %v2855 = vunpack.c.l.bf16 %v2831
    %v2856 = vunpack.c.h.bf16 %v2831
    %v2857 = vunpack.c.l.bf16 %v2832
    %v2858 = vunpack.c.l.bf16 %v2833
    %v2859 = vunpack.c.h.bf16 %v2833
    %v2860 = vunpack.c.l.bf16 %v2834
    %v2861 = vunpack.c.h.bf16 %v2834
    %v2862 = vunpack.c.l.bf16 %v2835
    %v2863 = vunpack.c.h.bf16 %v2835
    %v2864 = vunpack.c.l.bf16 %v2836
    %v2865 = vmul.f32 %v1913, %v2837
    %v2866 = vmul.f32 %v1914, %v2838
    %v2867 = vmul.f32 %v1915, %v2839
    %v2868 = vmul.f32 %v1916, %v2840
    %v2869 = vmul.f32 %v1917, %v2841
    %v2870 = vmul.f32 %v1918, %v2842
    %v2871 = vmul.f32 %v1919, %v2843
    %v2872 = vmul.f32 %v1920, %v2844
    %v2873 = vmul.f32 %v1921, %v2845
    %v2874 = vmul.f32 %v1922, %v2846
    %v2875 = vmul.f32 %v1923, %v2847
    %v2876 = vmul.f32 %v1924, %v2848
    %v2877 = vmul.f32 %v1925, %v2849
    %v2878 = vmul.f32 %v1926, %v2850
    %v2879 = vmul.f32 %v1927, %v2851
    %v2880 = vmul.f32 %v1928, %v2852
    %v2881 = vmul.f32 %v1929, %v2853
    %v2882 = vmul.f32 %v1930, %v2854
    %v2883 = vmul.f32 %v1931, %v2855
    %v2884 = vmul.f32 %v1932, %v2856
    %v2885 = vmul.f32 %v1933, %v2857
    %v2886 = vmul.f32 %v1934, %v2858
    %v2887 = vmul.f32 %v1935, %v2859
    %v2888 = vmul.f32 %v1936, %v2860
    %v2889 = vmul.f32 %v1937, %v2861
    %v2890 = vmul.f32 %v1938, %v2862
    %v2891 = vmul.f32 %v1939, %v2863
    %v2892 = vmul.f32 %v1940, %v2864
    %v2893 = vadd.f32 %v2865, %v2866
    %v2894 = vadd.f32 %v2893, %v2867
    %v2895 = vadd.f32 %v2894, %v2868
    %v2896 = vadd.f32 %v2895, %v2869
    %v2897 = vadd.f32 %v2896, %v2870
    %v2898 = vadd.f32 %v2897, %v2871
    %v2899 = vadd.f32 %v2898, %v2872
    %v2900 = vadd.f32 %v2899, %v2873
    %v2901 = vadd.f32 %v2900, %v2874
    %v2902 = vadd.f32 %v2901, %v2875
    %v2903 = vadd.f32 %v2902, %v2876
    %v2904 = vadd.f32 %v2903, %v2877
    %v2905 = vadd.f32 %v2904, %v2878
    %v2906 = vadd.f32 %v2905, %v2879
    %v2907 = vadd.f32 %v2906, %v2880
    %v2908 = vadd.f32 %v2907, %v2881
    %v2909 = vadd.f32 %v2908, %v2882
    %v2910 = vadd.f32 %v2909, %v2883
    %v2911 = vadd.f32 %v2910, %v2884
    %v2912 = vadd.f32 %v2911, %v2885
    %v2913 = vadd.f32 %v2912, %v2886
    %v2914 = vadd.f32 %v2913, %v2887
    %v2915 = vadd.f32 %v2914, %v2888
    %v2916 = vadd.f32 %v2915, %v2889
    %v2917 = vadd.f32 %v2916, %v2890
    %v2918 = vadd.f32 %v2917, %v2891
    %v2919 = vadd.f32 %v2918, %v2892
    %2920 = vadd.xlane.f32.xlu0 %v2919
    %v2921 = vpop.xlane.xlu0 %2920
    %v2922 = vrot.slane %v2921, 4
    %v2923 = vadd.f32 %v2921, %v2922
    %v2924 = vrot.slane %v2923, 2
    %v2925 = vadd.f32 %v2923, %v2924
    %v2926 = vrot.slane %v2925, 1
    %v2927 = vadd.f32 %v2925, %v2926
    %s2928 = vtos %v2927
    %s2929 = sld [smem:[#allocation2 + $0x8]]
    %s2930 = sadd.f32 %s2928, %s2929
    %s2931 = scalar_lea.smem [#allocation5], 136
    %2932 = sst [smem:[%s2931]] %s2930
    %v2933 = vld [vmem:[%s1461] sm:$0xff]
    %v2934 = vld [vmem:[%s1461 + $0x8] sm:$0xff]
    %v2935 = vld [vmem:[%s1461 + $0x10] sm:$0xff]
    %v2936 = vld [vmem:[%s1461 + $0x18] sm:$0xf]
    %v2937 = vld [vmem:[%s1461 + $0x1c] sm:$0xff]
    %v2938 = vld [vmem:[%s1461 + $0x24] sm:$0xff]
    %v2939 = vld [vmem:[%s1461 + $0x2c] sm:$0xff]
    %v2940 = vld [vmem:[%s1461 + $0x34] sm:$0xf]
    %v2941 = vld [vmem:[%s1461 + $0x38] sm:$0xff]
    %v2942 = vld [vmem:[%s1461 + $0x40] sm:$0xff]
    %v2943 = vld [vmem:[%s1461 + $0x48] sm:$0xff]
    %v2944 = vld [vmem:[%s1461 + $0x50] sm:$0xf]
    %v2945 = vld [vmem:[%s1461 + $0x54] sm:$0xff]
    %v2946 = vld [vmem:[%s1461 + $0x5c] sm:$0xff]
    %v2947 = vld [vmem:[%s1461 + $0x64] sm:$0xff]
    %v2948 = vld [vmem:[%s1461 + $0x6c] sm:$0xf]
    %v2949 = vunpack.c.l.bf16 %v2933
    %v2950 = vunpack.c.h.bf16 %v2933
    %v2951 = vunpack.c.l.bf16 %v2934
    %v2952 = vunpack.c.h.bf16 %v2934
    %v2953 = vunpack.c.l.bf16 %v2935
    %v2954 = vunpack.c.h.bf16 %v2935
    %v2955 = vunpack.c.l.bf16 %v2936
    %v2956 = vunpack.c.l.bf16 %v2937
    %v2957 = vunpack.c.h.bf16 %v2937
    %v2958 = vunpack.c.l.bf16 %v2938
    %v2959 = vunpack.c.h.bf16 %v2938
    %v2960 = vunpack.c.l.bf16 %v2939
    %v2961 = vunpack.c.h.bf16 %v2939
    %v2962 = vunpack.c.l.bf16 %v2940
    %v2963 = vunpack.c.l.bf16 %v2941
    %v2964 = vunpack.c.h.bf16 %v2941
    %v2965 = vunpack.c.l.bf16 %v2942
    %v2966 = vunpack.c.h.bf16 %v2942
    %v2967 = vunpack.c.l.bf16 %v2943
    %v2968 = vunpack.c.h.bf16 %v2943
    %v2969 = vunpack.c.l.bf16 %v2944
    %v2970 = vunpack.c.l.bf16 %v2945
    %v2971 = vunpack.c.h.bf16 %v2945
    %v2972 = vunpack.c.l.bf16 %v2946
    %v2973 = vunpack.c.h.bf16 %v2946
    %v2974 = vunpack.c.l.bf16 %v2947
    %v2975 = vunpack.c.h.bf16 %v2947
    %v2976 = vunpack.c.l.bf16 %v2948
    %v2977 = vmul.f32 %v1913, %v2949
    %v2978 = vmul.f32 %v1914, %v2950
    %v2979 = vmul.f32 %v1915, %v2951
    %v2980 = vmul.f32 %v1916, %v2952
    %v2981 = vmul.f32 %v1917, %v2953
    %v2982 = vmul.f32 %v1918, %v2954
    %v2983 = vmul.f32 %v1919, %v2955
    %v2984 = vmul.f32 %v1920, %v2956
    %v2985 = vmul.f32 %v1921, %v2957
    %v2986 = vmul.f32 %v1922, %v2958
    %v2987 = vmul.f32 %v1923, %v2959
    %v2988 = vmul.f32 %v1924, %v2960
    %v2989 = vmul.f32 %v1925, %v2961
    %v2990 = vmul.f32 %v1926, %v2962
    %v2991 = vmul.f32 %v1927, %v2963
    %v2992 = vmul.f32 %v1928, %v2964
    %v2993 = vmul.f32 %v1929, %v2965
    %v2994 = vmul.f32 %v1930, %v2966
    %v2995 = vmul.f32 %v1931, %v2967
    %v2996 = vmul.f32 %v1932, %v2968
    %v2997 = vmul.f32 %v1933, %v2969
    %v2998 = vmul.f32 %v1934, %v2970
    %v2999 = vmul.f32 %v1935, %v2971
    %v3000 = vmul.f32 %v1936, %v2972
    %v3001 = vmul.f32 %v1937, %v2973
    %v3002 = vmul.f32 %v1938, %v2974
    %v3003 = vmul.f32 %v1939, %v2975
    %v3004 = vmul.f32 %v1940, %v2976
    %v3005 = vadd.f32 %v2977, %v2978
    %v3006 = vadd.f32 %v3005, %v2979
    %v3007 = vadd.f32 %v3006, %v2980
    %v3008 = vadd.f32 %v3007, %v2981
    %v3009 = vadd.f32 %v3008, %v2982
    %v3010 = vadd.f32 %v3009, %v2983
    %v3011 = vadd.f32 %v3010, %v2984
    %v3012 = vadd.f32 %v3011, %v2985
    %v3013 = vadd.f32 %v3012, %v2986
    %v3014 = vadd.f32 %v3013, %v2987
    %v3015 = vadd.f32 %v3014, %v2988
    %v3016 = vadd.f32 %v3015, %v2989
    %v3017 = vadd.f32 %v3016, %v2990
    %v3018 = vadd.f32 %v3017, %v2991
    %v3019 = vadd.f32 %v3018, %v2992
    %v3020 = vadd.f32 %v3019, %v2993
    %v3021 = vadd.f32 %v3020, %v2994
    %v3022 = vadd.f32 %v3021, %v2995
    %v3023 = vadd.f32 %v3022, %v2996
    %v3024 = vadd.f32 %v3023, %v2997
    %v3025 = vadd.f32 %v3024, %v2998
    %v3026 = vadd.f32 %v3025, %v2999
    %v3027 = vadd.f32 %v3026, %v3000
    %v3028 = vadd.f32 %v3027, %v3001
    %v3029 = vadd.f32 %v3028, %v3002
    %v3030 = vadd.f32 %v3029, %v3003
    %v3031 = vadd.f32 %v3030, %v3004
    %3032 = vadd.xlane.f32.xlu0 %v3031
    %v3033 = vpop.xlane.xlu0 %3032
    %v3034 = vrot.slane %v3033, 4
    %v3035 = vadd.f32 %v3033, %v3034
    %v3036 = vrot.slane %v3035, 2
    %v3037 = vadd.f32 %v3035, %v3036
    %v3038 = vrot.slane %v3037, 1
    %v3039 = vadd.f32 %v3037, %v3038
    %s3040 = vtos %v3039
    %s3041 = sld [smem:[#allocation2 + $0x9]]
    %s3042 = sadd.f32 %s3040, %s3041
    %s3043 = scalar_lea.smem [#allocation5], 137
    %3044 = sst [smem:[%s3043]] %s3042
    // Predicated region
    $region26: #{cnn_forward.1} parent=1 // pred_check
      _
    $region27: #{cnn_forward.1} parent=1 // pred_check_branch
      %3046 = sbr.rel (0) target = $region29
    $region28: #{cnn_forward.1} parent=1 // pred_region
      %s3048 = ssub.s32 32, 32
      %3049 = vsyncadd [#allocation3], %s3048
      %3052 = dma.smem_to_hbm [#allocation5], 32, %s5, [#allocation3]
    $region29: #{cnn_forward.1} parent=1 // pred_fallthru
      _
    // Predicated region
    $region30: #{cnn_forward.1} parent=1 // pred_check
      _
    $region31: #{cnn_forward.1} parent=1 // pred_check_branch
      %3054 = sbr.rel (0) target = $region33
    $region32: #{cnn_forward.1} parent=1 // pred_region
      %3055 = dma.done [#allocation3], 32
    $region33: #{cnn_forward.1} parent=1 // pred_fallthru
      _
    %3056 = sfence
    %3057 = vsyncpa [#allocation3], 1
    %3058 = vsyncpa [#allocation4], 1

</llo_original>
